<compile_context>
chip_gen: v7x
topology: tpu7x:2x2x1
jax: 0.10.0
libtpu: 0.0.40
codegen_flags: <defaults>
</compile_context>

<pallas_src>
import functools

import jax
import jax.numpy as jnp
import numpy as np
from jax import lax
from jax.experimental import pallas as pl
from jax.experimental.pallas import tpu as pltpu

EPS = 1e-5
MXU_DTYPE = jnp.float32          # switch to jnp.bfloat16 on v6e/v7x (verify tolerance)
VMEM_LIMIT = 32 * 1024 * 1024    # fits v5e/v6e/v7x scoped-VMEM budgets


# --------------------------------------------------------------------------- kernels
def _channel_stats(z):
    """Per-row (= per-channel) mean and *centered* sum of squares along lanes."""
    n = z.shape[-1]
    m = jnp.sum(z, axis=-1, keepdims=True) * (1.0 / n)           # (C, 1)
    ss = jnp.sum((z - m) ** 2, axis=-1, keepdims=True)           # (C, 1)
    return m, ss


def _conv1x1_stats_kernel(x_ref, w_ref, z_ref, bm_ref, bss_ref):
    # x_ref: (1, Cin, L)  w_ref: (Cout, Cin)  ->  z_ref: (1, Cout, L) + block stats
    x = x_ref[0]
    z = jnp.dot(w_ref[...].astype(MXU_DTYPE), x.astype(MXU_DTYPE),
                preferred_element_type=jnp.float32)
    z_ref[...] = z.reshape(z_ref.shape)
    m, ss = _channel_stats(z)
    bm_ref[...] = m.reshape(bm_ref.shape)
    bss_ref[...] = ss.reshape(bss_ref.shape)


def _bn_relu_conv1x1_stats_kernel(x_ref, scale_ref, shift_ref, w_ref,
                                  z_ref, bm_ref, bss_ref):
    # Fused: previous BN affine + ReLU, then 1x1 conv, then per-block stats.
    x = x_ref[0]                                                  # (Cin, L)
    a = jnp.maximum(x * scale_ref[...] + shift_ref[...], 0.0)
    z = jnp.dot(w_ref[...].astype(MXU_DTYPE), a.astype(MXU_DTYPE),
                preferred_element_type=jnp.float32)
    z_ref[...] = z.reshape(z_ref.shape)
    m, ss = _channel_stats(z)
    bm_ref[...] = m.reshape(bm_ref.shape)
    bss_ref[...] = ss.reshape(bss_ref.shape)


def _bn_relu_deconv_stats_kernel(zp_ref, scale_ref, shift_ref, wbig_ref,
                                 z_ref, bm_ref, bss_ref, *, H, W):
    # zp_ref: (1, Cm, H+1, W+1) pre-BN conv1 output, zero-padded by 1 at bottom/right.
    # wbig_ref: (4*Cm, 4*Cm): all four output parities of the stride-2 transposed conv
    #           folded into a single matmul (rows = out_channel*4 + parity).
    cm = zp_ref.shape[1]
    zp = zp_ref[0]                                                # (Cm, H+1, W+1)
    a = jnp.maximum(zp * scale_ref[...] + shift_ref[...], 0.0)
    # the halo must be zero *after* BN + ReLU -> re-zero it explicitly
    row = lax.broadcasted_iota(jnp.int32, a.shape, 1)
    col = lax.broadcasted_iota(jnp.int32, a.shape, 2)
    a = jnp.where((row < H) & (col < W), a, 0.0)
    # stack of the 4 shifted copies: (no shift, +1 col, +1 row, +1 row & col)
    parts = (a[:, 0:H, 0:W], a[:, 0:H, 1:W + 1],
             a[:, 1:H + 1, 0:W], a[:, 1:H + 1, 1:W + 1])
    acol = jnp.concatenate([p.reshape(cm, H * W) for p in parts], axis=0)  # (4Cm, HW)
    z = jnp.dot(wbig_ref[...].astype(MXU_DTYPE), acol.astype(MXU_DTYPE),
                preferred_element_type=jnp.float32)               # (4*Cm, H*W)
    z_ref[...] = z.reshape(z_ref.shape)
    m, ss = _channel_stats(z)
    bm_ref[...] = m.reshape(bm_ref.shape)
    bss_ref[...] = ss.reshape(bss_ref.shape)


def _bn_relu_kernel(x_ref, scale_ref, shift_ref, o_ref):
    o_ref[...] = jnp.maximum(x_ref[0] * scale_ref[...] + shift_ref[...],
                             0.0).reshape(o_ref.shape)


# --------------------------------------------------------------------------- wrapper helpers
def _bn_scale_shift(block_mean, block_ss, count_per_block, gamma, beta):
    """Combine per-block (mean, centered SS) into a training-mode BN affine
    (biased variance) via the numerically-stable parallel-variance formula."""
    c = gamma.shape[0]
    bm = block_mean.reshape(-1, c)
    bss = block_ss.reshape(-1, c)
    nblk = bm.shape[0]
    mean = jnp.mean(bm, axis=0)
    var = (jnp.sum(bss, axis=0) / (nblk * count_per_block)
           + jnp.mean((bm - mean) ** 2, axis=0))
    scale = gamma * lax.rsqrt(var + EPS)
    shift = beta - mean * scale
    return scale, shift


def _deconv_parity_matrix(wt):
    """Fold a stride-2 / pad-1 / output_padding-1 ConvTranspose2d weight (Ci, Co, 3, 3)
    into a (4*Co, 4*Ci) matrix acting on the [a, a>>col, a>>row, a>>row+col] stack.
    Output row = co*4 + p, with parity p = 2*row_parity + col_parity."""
    ci, co = wt.shape[0], wt.shape[1]
    # parity p -> ((shift q, kh, kw), ...)   q: 0=a, 1=+col, 2=+row, 3=+row+col
    taps = {0: ((0, 1, 1),),
            1: ((1, 1, 0), (0, 1, 2)),
            2: ((2, 0, 1), (0, 2, 1)),
            3: ((3, 0, 0), (2, 0, 2), (1, 2, 0), (0, 2, 2))}
    wb = jnp.zeros((4 * co, 4 * ci), jnp.float32)
    for p, lst in taps.items():
        for q, kh, kw in lst:
            wb = wb.at[p::4, q * ci:(q + 1) * ci].set(jnp.transpose(wt[:, :, kh, kw]))
    return wb


# --------------------------------------------------------------------------- forward
@jax.jit
def decoder_block(x, params):
    """x: (N, Cin, H, W) f32 -> (N, n_filters, 2H, 2W) f32, matching the PyTorch
    DecoderBlock forward with BatchNorm in training mode (batch statistics).
    TODO(synk): BatchNorm's running_mean/running_var buffer updates (a training-time
    side effect, not part of the returned tensor) are not reproduced."""
    (w1, b1, g1, bb1, wt2, b2, g2, bb2, w3, b3, g3, bb3) = params
    del b1, b2, b3   # conv/deconv biases cancel exactly against the BN mean subtraction
    N, Cin, H, W = x.shape
    assert Cin % 4 == 0
    Cm = Cin // 4
    Cout = w3.shape[0]
    HW = H * W
    fp32 = jnp.float32

    cp2 = pltpu.CompilerParams(dimension_semantics=("parallel", "parallel"),
                               vmem_limit_bytes=VMEM_LIMIT)
    cp1 = pltpu.CompilerParams(dimension_semantics=("parallel",),
                               vmem_limit_bytes=VMEM_LIMIT)

    # ---- stage 1: 1x1 conv (Cin -> Cm) + per-block BN1 stats --------------------
    l1 = 128 if HW % 128 == 0 else HW
    sb1 = HW // l1
    x_r = x.reshape(N, Cin, HW)
    w1_2d = w1.reshape(Cm, Cin)
    z1, bm1, bss1 = pl.pallas_call(
        _conv1x1_stats_kernel,
        grid=(N, sb1),
        in_specs=[
            pl.BlockSpec((1, Cin, l1), lambda n, s: (n, 0, s)),
            pl.BlockSpec((Cm, Cin), lambda n, s: (0, 0)),
        ],
        out_specs=(
            pl.BlockSpec((1, Cm, l1), lambda n, s: (n, 0, s)),
            pl.BlockSpec((1, 1, Cm, 1), lambda n, s: (n, s, 0, 0)),
            pl.BlockSpec((1, 1, Cm, 1), lambda n, s: (n, s, 0, 0)),
        ),
        out_shape=(
            jax.ShapeDtypeStruct((N, Cm, HW), fp32),
            jax.ShapeDtypeStruct((N, sb1, Cm, 1), fp32),
            jax.ShapeDtypeStruct((N, sb1, Cm, 1), fp32),
        ),
        compiler_params=cp2,
        cost_estimate=pl.CostEstimate(
            flops=2 * N * HW * Cin * Cm, transcendentals=0,
            bytes_accessed=4 * (N * Cin * HW + N * Cm * HW + Cin * Cm)),
    )(x_r, w1_2d)
    scale1, shift1 = _bn_scale_shift(bm1, bss1, l1, g1, bb1)

    # ---- stage 2: BN1 + ReLU fused into the stride-2 transposed conv + BN2 stats -
    z1p = jnp.pad(z1.reshape(N, Cm, H, W), ((0, 0), (0, 0), (0, 1), (0, 1)))
    wbig = _deconv_parity_matrix(wt2)
    z2, bm2, bss2 = pl.pallas_call(
        functools.partial(_bn_relu_deconv_stats_kernel, H=H, W=W),
        grid=(N,),
        in_specs=[
            pl.BlockSpec((1, Cm, H + 1, W + 1), lambda n: (n, 0, 0, 0)),
            pl.BlockSpec((Cm, 1, 1), lambda n: (0, 0, 0)),
            pl.BlockSpec((Cm, 1, 1), lambda n: (0, 0, 0)),
            pl.BlockSpec((4 * Cm, 4 * Cm), lambda n: (0, 0)),
        ],
        out_specs=(
            pl.BlockSpec((1, 4 * Cm, HW), lambda n: (n, 0, 0)),
            pl.BlockSpec((1, 1, 4 * Cm, 1), lambda n: (n, 0, 0, 0)),
            pl.BlockSpec((1, 1, 4 * Cm, 1), lambda n: (n, 0, 0, 0)),
        ),
        out_shape=(
            jax.ShapeDtypeStruct((N, 4 * Cm, HW), fp32),
            jax.ShapeDtypeStruct((N, 1, 4 * Cm, 1), fp32),
            jax.ShapeDtypeStruct((N, 1, 4 * Cm, 1), fp32),
        ),
        compiler_params=cp1,
        cost_estimate=pl.CostEstimate(
            flops=2 * N * HW * (4 * Cm) * (4 * Cm), transcendentals=0,
            bytes_accessed=4 * (N * Cm * (H + 1) * (W + 1)
                                + N * 4 * Cm * HW + 16 * Cm * Cm)),
    )(z1p, scale1.reshape(Cm, 1, 1), shift1.reshape(Cm, 1, 1), wbig)
    # rows of z2 are (channel, parity) -> regroup stats so channels sit last
    bm2 = bm2.reshape(N, Cm, 4).transpose(0, 2, 1)
    bss2 = bss2.reshape(N, Cm, 4).transpose(0, 2, 1)
    scale2, shift2 = _bn_scale_shift(bm2, bss2, HW, g2, bb2)

    # ---- stage 3: BN2 + ReLU fused into 1x1 conv (Cm -> Cout) + BN3 stats --------
    m2 = 4 * HW                                   # upsampled spatial size (2H * 2W)
    l3 = 256 if m2 % 256 == 0 else m2
    sb3 = m2 // l3
    z2_r = z2.reshape(N, Cm, m2)                  # free reshape (rows were (c, parity))
    w3_2d = w3.reshape(Cout, Cm)
    z3, bm3, bss3 = pl.pallas_call(
        _bn_relu_conv1x1_stats_kernel,
        grid=(N, sb3),
        in_specs=[
            pl.BlockSpec((1, Cm, l3), lambda n, s: (n, 0, s)),
            pl.BlockSpec((Cm, 1), lambda n, s: (0, 0)),
            pl.BlockSpec((Cm, 1), lambda n, s: (0, 0)),
            pl.BlockSpec((Cout, Cm), lambda n, s: (0, 0)),
        ],
        out_specs=(
            pl.BlockSpec((1, Cout, l3), lambda n, s: (n, 0, s)),
            pl.BlockSpec((1, 1, Cout, 1), lambda n, s: (n, s, 0, 0)),
            pl.BlockSpec((1, 1, Cout, 1), lambda n, s: (n, s, 0, 0)),
        ),
        out_shape=(
            jax.ShapeDtypeStruct((N, Cout, m2), fp32),
            jax.ShapeDtypeStruct((N, sb3, Cout, 1), fp32),
            jax.ShapeDtypeStruct((N, sb3, Cout, 1), fp32),
        ),
        compiler_params=cp2,
        cost_estimate=pl.CostEstimate(
            flops=2 * N * m2 * Cm * Cout, transcendentals=0,
            bytes_accessed=4 * (N * Cm * m2 + N * Cout * m2 + Cm * Cout)),
    )(z2_r, scale2.reshape(Cm, 1), shift2.reshape(Cm, 1), w3_2d)
    scale3, shift3 = _bn_scale_shift(bm3, bss3, l3, g3, bb3)

    # ---- stage 4: final BN3 + ReLU -----------------------------------------------
    l4 = 256 if m2 % 256 == 0 else m2
    sb4 = m2 // l4
    y_flat = pl.pallas_call(
        _bn_relu_kernel,
        grid=(N, sb4),
        in_specs=[
            pl.BlockSpec((1, Cout, l4), lambda n, s: (n, 0, s)),
            pl.BlockSpec((Cout, 1), lambda n, s: (0, 0)),
            pl.BlockSpec((Cout, 1), lambda n, s: (0, 0)),
        ],
        out_specs=pl.BlockSpec((1, Cout, l4), lambda n, s: (n, 0, s)),
        out_shape=jax.ShapeDtypeStruct((N, Cout, m2), fp32),
        compiler_params=cp2,
        cost_estimate=pl.CostEstimate(
            flops=3 * N * Cout * m2, transcendentals=0,
            bytes_accessed=4 * 2 * N * Cout * m2),
    )(z3, scale3.reshape(Cout, 1), shift3.reshape(Cout, 1))

    # un-interleave the deconv parities: (.., p, h, w) -> spatial (2h+pr, 2w+pc)
    y = y_flat.reshape(N, Cout, 2, 2, H, W)
    y = jnp.transpose(y, (0, 1, 4, 2, 5, 3)).reshape(N, Cout, 2 * H, 2 * W)
    return y


# --------------------------------------------------------------------------- reference
def _reference(x, params):
    """Pure-JAX replica of the PyTorch DecoderBlock forward (training-mode BN)."""
    (w1, b1, g1, bb1, wt2, b2, g2, bb2, w3, b3, g3, bb3) = params

    def bn_relu(t, g, b):
        m = jnp.mean(t, axis=(0, 2, 3), keepdims=True)
        v = jnp.mean((t - m) ** 2, axis=(0, 2, 3), keepdims=True)
        return jax.nn.relu((t - m) * lax.rsqrt(v + EPS)
                           * g[None, :, None, None] + b[None, :, None, None])

    dn = ("NCHW", "OIHW", "NCHW")
    y = lax.conv_general_dilated(x, w1, (1, 1), ((0, 0), (0, 0)),
                                 dimension_numbers=dn) + b1[None, :, None, None]
    y = bn_relu(y, g1, bb1)
    # ConvTranspose2d(3, stride=2, padding=1, output_padding=1) == conv over the
    # 2x-dilated input with the spatially-flipped, (in,out)-swapped kernel.
    wd = jnp.transpose(wt2[:, :, ::-1, ::-1], (1, 0, 2, 3))
    y = lax.conv_general_dilated(y, wd, (1, 1), ((1, 2), (1, 2)),
                                 lhs_dilation=(2, 2),
                                 dimension_numbers=dn) + b2[None, :, None, None]
    y = bn_relu(y, g2, bb2)
    y = lax.conv_general_dilated(y, w3, (1, 1), ((0, 0), (0, 0)),
                                 dimension_numbers=dn) + b3[None, :, None, None]
    y = bn_relu(y, g3, bb3)
    return y


def init_params(key, in_channels, n_filters):
    cm = in_channels // 4
    ks = jax.random.split(key, 12)

    def u(k, shape, fan_in):
        b = 1.0 / np.sqrt(fan_in)
        return jax.random.uniform(k, shape, jnp.float32, -b, b)

    w1 = u(ks[0], (cm, in_channels, 1, 1), in_channels)
    b1 = u(ks[1], (cm,), in_channels)
    wt2 = u(ks[2], (cm, cm, 3, 3), cm * 9)          # ConvTranspose2d: (in, out, kh, kw)
    b2 = u(ks[3], (cm,), cm * 9)
    w3 = u(ks[4], (n_filters, cm, 1, 1), cm)
    b3 = u(ks[5], (n_filters,), cm)
    # BatchNorm2d affine params (defaults are 1/0; randomized to exercise the folding —
    # the reference uses the same values, so semantics are preserved).
    g1 = jax.random.uniform(ks[6], (cm,), jnp.float32, 0.5, 1.5)
    bb1 = jax.random.uniform(ks[7], (cm,), jnp.float32, -0.5, 0.5)
    g2 = jax.random.uniform(ks[8], (cm,), jnp.float32, 0.5, 1.5)
    bb2 = jax.random.uniform(ks[9], (cm,), jnp.float32, -0.5, 0.5)
    g3 = jax.random.uniform(ks[10], (n_filters,), jnp.float32, 0.5, 1.5)
    bb3 = jax.random.uniform(ks[11], (n_filters,), jnp.float32, -0.5, 0.5)
    return (w1, b1, g1, bb1, wt2, b2, g2, bb2, w3, b3, g3, bb3)


if __name__ == "__main__":
    key = jax.random.PRNGKey(0)
    kx, kp = jax.random.split(key)

    N, Cin, H, W, n_filters = 2, 16, 16, 16, 8
    x = jax.random.normal(kx, (N, Cin, H, W), jnp.float32)
    params = init_params(kp, Cin, n_filters)

    out = jax.block_until_ready(decoder_block(x, params))
    ref = jax.block_until_ready(_reference(x, params))

    assert out.shape == (N, n_filters, 2 * H, 2 * W), out.shape
    np.testing.assert_allclose(np.asarray(out), np.asarray(ref),
                               rtol=1e-4, atol=1e-4)
    print("KERNEL_OK")
</pallas_src>

<mosaic_0001>
module attributes {stable_mosaic.version = 11 : i64} {
  func.func @_conv1x1_stats_kernel(%arg0: i32, %arg1: i32, %arg2: memref<1x16x128xf32, #tpu.memory_space<vmem>>, %arg3: memref<4x16xf32, #tpu.memory_space<vmem>>, %arg4: memref<1x4x128xf32, #tpu.memory_space<vmem>>, %arg5: memref<1x1x4x1xf32, #tpu.memory_space<vmem>>, %arg6: memref<1x1x4x1xf32, #tpu.memory_space<vmem>>) attributes {dimension_semantics = [#tpu.dimension_semantics<parallel>, #tpu.dimension_semantics<parallel>], iteration_bounds = array<i64: 2, 2>, scalar_prefetch = 0 : i64, scratch_operands = 0 : i64, tpu.core_type = #tpu.core_type<tc>, window_params = [{transform_indices = @transform_0, window_bounds = array<i64: 1, 16, 128>}, {pipeline_mode = #tpu.pipeline_mode<synchronous>, transform_indices = @transform_1, window_bounds = array<i64: 4, 16>}, {transform_indices = @transform_2, window_bounds = array<i64: 1, 4, 128>}, {transform_indices = @transform_3, window_bounds = array<i64: 1, 1, 4, 1>}, {transform_indices = @transform_4, window_bounds = array<i64: 1, 1, 4, 1>}]} {
    %c0 = arith.constant 0 : index
    %c0_0 = arith.constant 0 : index
    %c0_1 = arith.constant 0 : index
    %0 = vector.load %arg2[%c0, %c0_0, %c0_1] : memref<1x16x128xf32, #tpu.memory_space<vmem>>, vector<1x16x128xf32>
    %1 = vector.shape_cast %0 : vector<1x16x128xf32> to vector<16x128xf32>
    %c0_2 = arith.constant 0 : index
    %c0_3 = arith.constant 0 : index
    %2 = vector.load %arg3[%c0_2, %c0_3] : memref<4x16xf32, #tpu.memory_space<vmem>>, vector<4x16xf32>
    %cst = arith.constant dense<0.000000e+00> : vector<4x128xf32>
    %3 = tpu.matmul %2, %1, %cst {dimension_numbers = #tpu.dot_dimension_numbers<[1], [0], [0], [1], [0, 0, 1, 1], [], []>} : vector<4x16xf32>, vector<16x128xf32>, vector<4x128xf32> -> vector<4x128xf32>
    %4 = vector.shape_cast %3 : vector<4x128xf32> to vector<1x4x128xf32>
    %c0_4 = arith.constant 0 : index
    %c0_5 = arith.constant 0 : index
    %c0_6 = arith.constant 0 : index
    %5 = vector.load %arg4[%c0_4, %c0_5, %c0_6] : memref<1x4x128xf32, #tpu.memory_space<vmem>>, vector<1x4x128xf32>
    tpu.vector_store %arg4[%c0_4, %c0_5, %c0_6], %4 {strides = array<i32>} : memref<1x4x128xf32, #tpu.memory_space<vmem>>, vector<1x4x128xf32>,
    %cst_7 = arith.constant dense<0.000000e+00> : vector<4xf32>
    %6 = vector.multi_reduction <add>, %3, %cst_7 [1] : vector<4x128xf32> to vector<4xf32>
    %7 = vector.shape_cast %6 : vector<4xf32> to vector<4x1xf32>
    %cst_8 = arith.constant 7.812500e-03 : f32
    %8 = vector.broadcast %cst_8 : f32 to vector<4x1xf32>
    %9 = arith.mulf %7, %8 : vector<4x1xf32>
    %10 = vector.broadcast %9 : vector<4x1xf32> to vector<4x128xf32>
    %11 = arith.subf %3, %10 : vector<4x128xf32>
    %12 = arith.mulf %11, %11 : vector<4x128xf32>
    %cst_9 = arith.constant dense<0.000000e+00> : vector<4xf32>
    %13 = vector.multi_reduction <add>, %12, %cst_9 [1] : vector<4x128xf32> to vector<4xf32>
    %14 = vector.shape_cast %13 : vector<4xf32> to vector<4x1xf32>
    %15 = vector.shape_cast %9 : vector<4x1xf32> to vector<1x1x4x1xf32>
    %c0_10 = arith.constant 0 : index
    %c0_11 = arith.constant 0 : index
    %c0_12 = arith.constant 0 : index
    %c0_13 = arith.constant 0 : index
    %16 = vector.load %arg5[%c0_10, %c0_11, %c0_12, %c0_13] : memref<1x1x4x1xf32, #tpu.memory_space<vmem>>, vector<1x1x4x1xf32>
    tpu.vector_store %arg5[%c0_10, %c0_11, %c0_12, %c0_13], %15 {strides = array<i32>} : memref<1x1x4x1xf32, #tpu.memory_space<vmem>>, vector<1x1x4x1xf32>,
    %17 = vector.shape_cast %14 : vector<4x1xf32> to vector<1x1x4x1xf32>
    %c0_14 = arith.constant 0 : index
    %c0_15 = arith.constant 0 : index
    %c0_16 = arith.constant 0 : index
    %c0_17 = arith.constant 0 : index
    %18 = vector.load %arg6[%c0_14, %c0_15, %c0_16, %c0_17] : memref<1x1x4x1xf32, #tpu.memory_space<vmem>>, vector<1x1x4x1xf32>
    tpu.vector_store %arg6[%c0_14, %c0_15, %c0_16, %c0_17], %17 {strides = array<i32>} : memref<1x1x4x1xf32, #tpu.memory_space<vmem>>, vector<1x1x4x1xf32>,
    return
  }
  func.func @transform_0(%arg0: i32, %arg1: i32) -> (i32, i32, i32) {
    %c0_i32 = arith.constant 0 : i32
    %c0_i32_0 = arith.constant 0 : i32
    return %arg0, %c0_i32, %arg1 : i32, i32, i32
  }
  func.func @transform_1(%arg0: i32, %arg1: i32) -> (i32, i32) {
    %c0_i32 = arith.constant 0 : i32
    %c0_i32_0 = arith.constant 0 : i32
    %c0_i32_1 = arith.constant 0 : i32
    return %c0_i32, %c0_i32_0 : i32, i32
  }
  func.func @transform_2(%arg0: i32, %arg1: i32) -> (i32, i32, i32) {
    %c0_i32 = arith.constant 0 : i32
    %c0_i32_0 = arith.constant 0 : i32
    return %arg0, %c0_i32, %arg1 : i32, i32, i32
  }
  func.func @transform_3(%arg0: i32, %arg1: i32) -> (i32, i32, i32, i32) {
    %c0_i32 = arith.constant 0 : i32
    %c0_i32_0 = arith.constant 0 : i32
    %c0_i32_1 = arith.constant 0 : i32
    return %arg0, %arg1, %c0_i32, %c0_i32_0 : i32, i32, i32, i32
  }
  func.func @transform_4(%arg0: i32, %arg1: i32) -> (i32, i32, i32, i32) {
    %c0_i32 = arith.constant 0 : i32
    %c0_i32_0 = arith.constant 0 : i32
    %c0_i32_1 = arith.constant 0 : i32
    return %arg0, %arg1, %c0_i32, %c0_i32_0 : i32, i32, i32, i32
  }
}

module attributes {stable_mosaic.version = 11 : i64} {
  func.func @_bn_relu_deconv_stats_kernel(%arg0: i32, %arg1: memref<1x4x17x17xf32, #tpu.memory_space<vmem>>, %arg2: memref<4x1x1xf32, #tpu.memory_space<vmem>>, %arg3: memref<4x1x1xf32, #tpu.memory_space<vmem>>, %arg4: memref<16x16xf32, #tpu.memory_space<vmem>>, %arg5: memref<1x16x256xf32, #tpu.memory_space<vmem>>, %arg6: memref<1x1x16x1xf32, #tpu.memory_space<vmem>>, %arg7: memref<1x1x16x1xf32, #tpu.memory_space<vmem>>) attributes {dimension_semantics = [#tpu.dimension_semantics<parallel>], iteration_bounds = array<i64: 2>, scalar_prefetch = 0 : i64, scratch_operands = 0 : i64, tpu.core_type = #tpu.core_type<tc>, window_params = [{transform_indices = @transform_0, window_bounds = array<i64: 1, 4, 17, 17>}, {pipeline_mode = #tpu.pipeline_mode<synchronous>, transform_indices = @transform_1, window_bounds = array<i64: 4, 1, 1>}, {pipeline_mode = #tpu.pipeline_mode<synchronous>, transform_indices = @transform_2, window_bounds = array<i64: 4, 1, 1>}, {pipeline_mode = #tpu.pipeline_mode<synchronous>, transform_indices = @transform_3, window_bounds = array<i64: 16, 16>}, {transform_indices = @transform_4, window_bounds = array<i64: 1, 16, 256>}, {transform_indices = @transform_5, window_bounds = array<i64: 1, 1, 16, 1>}, {transform_indices = @transform_6, window_bounds = array<i64: 1, 1, 16, 1>}]} {
    %c0 = arith.constant 0 : index
    %c0_0 = arith.constant 0 : index
    %c0_1 = arith.constant 0 : index
    %c0_2 = arith.constant 0 : index
    %0 = vector.load %arg1[%c0, %c0_0, %c0_1, %c0_2] : memref<1x4x17x17xf32, #tpu.memory_space<vmem>>, vector<1x4x17x17xf32>
    %1 = vector.shape_cast %0 : vector<1x4x17x17xf32> to vector<4x17x17xf32>
    %c0_3 = arith.constant 0 : index
    %c0_4 = arith.constant 0 : index
    %c0_5 = arith.constant 0 : index
    %2 = vector.load %arg2[%c0_3, %c0_4, %c0_5] : memref<4x1x1xf32, #tpu.memory_space<vmem>>, vector<4x1x1xf32>
    %3 = vector.broadcast %2 : vector<4x1x1xf32> to vector<4x17x17xf32>
    %4 = arith.mulf %1, %3 : vector<4x17x17xf32>
    %c0_6 = arith.constant 0 : index
    %c0_7 = arith.constant 0 : index
    %c0_8 = arith.constant 0 : index
    %5 = vector.load %arg3[%c0_6, %c0_7, %c0_8] : memref<4x1x1xf32, #tpu.memory_space<vmem>>, vector<4x1x1xf32>
    %6 = vector.broadcast %5 : vector<4x1x1xf32> to vector<4x17x17xf32>
    %7 = arith.addf %4, %6 : vector<4x17x17xf32>
    %cst = arith.constant 0.000000e+00 : f32
    %8 = vector.broadcast %cst : f32 to vector<4x17x17xf32>
    %9 = arith.maximumf %7, %8 : vector<4x17x17xf32>
    %10 = tpu.iota {dimensions = array<i32: 1>} : vector<4x17x17xi32>
    %11 = tpu.iota {dimensions = array<i32: 2>} : vector<4x17x17xi32>
    %c16_i32 = arith.constant 16 : i32
    %12 = vector.broadcast %c16_i32 : i32 to vector<4x17x17xi32>
    %13 = arith.cmpi slt, %10, %12 : vector<4x17x17xi32>
    %c16_i32_9 = arith.constant 16 : i32
    %14 = vector.broadcast %c16_i32_9 : i32 to vector<4x17x17xi32>
    %15 = arith.cmpi slt, %11, %14 : vector<4x17x17xi32>
    %16 = arith.andi %13, %15 : vector<4x17x17xi1>
    %cst_10 = arith.constant 0.000000e+00 : f32
    %17 = vector.broadcast %cst_10 : f32 to vector<4x17x17xf32>
    %18 = arith.select %16, %9, %17 : vector<4x17x17xi1>, vector<4x17x17xf32>
    %19 = vector.extract_strided_slice %18 {offsets = [0, 0, 0], sizes = [4, 16, 16], strides = [1, 1, 1]} : vector<4x17x17xf32> to vector<4x16x16xf32>
    %20 = vector.extract_strided_slice %18 {offsets = [0, 0, 1], sizes = [4, 16, 16], strides = [1, 1, 1]} : vector<4x17x17xf32> to vector<4x16x16xf32>
    %21 = vector.extract_strided_slice %18 {offsets = [0, 1, 0], sizes = [4, 16, 16], strides = [1, 1, 1]} : vector<4x17x17xf32> to vector<4x16x16xf32>
    %22 = vector.extract_strided_slice %18 {offsets = [0, 1, 1], sizes = [4, 16, 16], strides = [1, 1, 1]} : vector<4x17x17xf32> to vector<4x16x16xf32>
    %23 = vector.shape_cast %19 : vector<4x16x16xf32> to vector<4x256xf32>
    %24 = vector.shape_cast %20 : vector<4x16x16xf32> to vector<4x256xf32>
    %25 = vector.shape_cast %21 : vector<4x16x16xf32> to vector<4x256xf32>
    %26 = vector.shape_cast %22 : vector<4x16x16xf32> to vector<4x256xf32>
    %27 = tpu.concatenate %23, %24, %25, %26 in 0 : vector<4x256xf32>, vector<4x256xf32>, vector<4x256xf32>, vector<4x256xf32> -> vector<16x256xf32>
    %c0_11 = arith.constant 0 : index
    %c0_12 = arith.constant 0 : index
    %28 = vector.load %arg4[%c0_11, %c0_12] : memref<16x16xf32, #tpu.memory_space<vmem>>, vector<16x16xf32>
    %cst_13 = arith.constant dense<0.000000e+00> : vector<16x256xf32>
    %29 = tpu.matmul %28, %27, %cst_13 {dimension_numbers = #tpu.dot_dimension_numbers<[1], [0], [0], [1], [0, 0, 1, 1], [], []>} : vector<16x16xf32>, vector<16x256xf32>, vector<16x256xf32> -> vector<16x256xf32>
    %30 = vector.shape_cast %29 : vector<16x256xf32> to vector<1x16x256xf32>
    %c0_14 = arith.constant 0 : index
    %c0_15 = arith.constant 0 : index
    %c0_16 = arith.constant 0 : index
    %31 = vector.load %arg5[%c0_14, %c0_15, %c0_16] : memref<1x16x256xf32, #tpu.memory_space<vmem>>, vector<1x16x256xf32>
    tpu.vector_store %arg5[%c0_14, %c0_15, %c0_16], %30 {strides = array<i32>} : memref<1x16x256xf32, #tpu.memory_space<vmem>>, vector<1x16x256xf32>,
    %cst_17 = arith.constant dense<0.000000e+00> : vector<16xf32>
    %32 = vector.multi_reduction <add>, %29, %cst_17 [1] : vector<16x256xf32> to vector<16xf32>
    %33 = vector.shape_cast %32 : vector<16xf32> to vector<16x1xf32>
    %cst_18 = arith.constant 3.906250e-03 : f32
    %34 = vector.broadcast %cst_18 : f32 to vector<16x1xf32>
    %35 = arith.mulf %33, %34 : vector<16x1xf32>
    %36 = vector.broadcast %35 : vector<16x1xf32> to vector<16x256xf32>
    %37 = arith.subf %29, %36 : vector<16x256xf32>
    %38 = arith.mulf %37, %37 : vector<16x256xf32>
    %cst_19 = arith.constant dense<0.000000e+00> : vector<16xf32>
    %39 = vector.multi_reduction <add>, %38, %cst_19 [1] : vector<16x256xf32> to vector<16xf32>
    %40 = vector.shape_cast %39 : vector<16xf32> to vector<16x1xf32>
    %41 = vector.shape_cast %35 : vector<16x1xf32> to vector<1x1x16x1xf32>
    %c0_20 = arith.constant 0 : index
    %c0_21 = arith.constant 0 : index
    %c0_22 = arith.constant 0 : index
    %c0_23 = arith.constant 0 : index
    %42 = vector.load %arg6[%c0_20, %c0_21, %c0_22, %c0_23] : memref<1x1x16x1xf32, #tpu.memory_space<vmem>>, vector<1x1x16x1xf32>
    tpu.vector_store %arg6[%c0_20, %c0_21, %c0_22, %c0_23], %41 {strides = array<i32>} : memref<1x1x16x1xf32, #tpu.memory_space<vmem>>, vector<1x1x16x1xf32>,
    %43 = vector.shape_cast %40 : vector<16x1xf32> to vector<1x1x16x1xf32>
    %c0_24 = arith.constant 0 : index
    %c0_25 = arith.constant 0 : index
    %c0_26 = arith.constant 0 : index
    %c0_27 = arith.constant 0 : index
    %44 = vector.load %arg7[%c0_24, %c0_25, %c0_26, %c0_27] : memref<1x1x16x1xf32, #tpu.memory_space<vmem>>, vector<1x1x16x1xf32>
    tpu.vector_store %arg7[%c0_24, %c0_25, %c0_26, %c0_27], %43 {strides = array<i32>} : memref<1x1x16x1xf32, #tpu.memory_space<vmem>>, vector<1x1x16x1xf32>,
    return
  }
  func.func @transform_0(%arg0: i32) -> (i32, i32, i32, i32) {
    %c0_i32 = arith.constant 0 : i32
    %c0_i32_0 = arith.constant 0 : i32
    %c0_i32_1 = arith.constant 0 : i32
    %c0_i32_2 = arith.constant 0 : i32
    return %arg0, %c0_i32, %c0_i32_0, %c0_i32_1 : i32, i32, i32, i32
  }
  func.func @transform_1(%arg0: i32) -> (i32, i32, i32) {
    %c0_i32 = arith.constant 0 : i32
    %c0_i32_0 = arith.constant 0 : i32
    %c0_i32_1 = arith.constant 0 : i32
    %c0_i32_2 = arith.constant 0 : i32
    return %c0_i32, %c0_i32_0, %c0_i32_1 : i32, i32, i32
  }
  func.func @transform_2(%arg0: i32) -> (i32, i32, i32) {
    %c0_i32 = arith.constant 0 : i32
    %c0_i32_0 = arith.constant 0 : i32
    %c0_i32_1 = arith.constant 0 : i32
    %c0_i32_2 = arith.constant 0 : i32
    return %c0_i32, %c0_i32_0, %c0_i32_1 : i32, i32, i32
  }
  func.func @transform_3(%arg0: i32) -> (i32, i32) {
    %c0_i32 = arith.constant 0 : i32
    %c0_i32_0 = arith.constant 0 : i32
    %c0_i32_1 = arith.constant 0 : i32
    return %c0_i32, %c0_i32_0 : i32, i32
  }
  func.func @transform_4(%arg0: i32) -> (i32, i32, i32) {
    %c0_i32 = arith.constant 0 : i32
    %c0_i32_0 = arith.constant 0 : i32
    %c0_i32_1 = arith.constant 0 : i32
    return %arg0, %c0_i32, %c0_i32_0 : i32, i32, i32
  }
  func.func @transform_5(%arg0: i32) -> (i32, i32, i32, i32) {
    %c0_i32 = arith.constant 0 : i32
    %c0_i32_0 = arith.constant 0 : i32
    %c0_i32_1 = arith.constant 0 : i32
    %c0_i32_2 = arith.constant 0 : i32
    return %arg0, %c0_i32, %c0_i32_0, %c0_i32_1 : i32, i32, i32, i32
  }
  func.func @transform_6(%arg0: i32) -> (i32, i32, i32, i32) {
    %c0_i32 = arith.constant 0 : i32
    %c0_i32_0 = arith.constant 0 : i32
    %c0_i32_1 = arith.constant 0 : i32
    %c0_i32_2 = arith.constant 0 : i32
    return %arg0, %c0_i32, %c0_i32_0, %c0_i32_1 : i32, i32, i32, i32
  }
}

module attributes {stable_mosaic.version = 11 : i64} {
  func.func @_bn_relu_conv1x1_stats_kernel(%arg0: i32, %arg1: i32, %arg2: memref<1x4x256xf32, #tpu.memory_space<vmem>>, %arg3: memref<4x1xf32, #tpu.memory_space<vmem>>, %arg4: memref<4x1xf32, #tpu.memory_space<vmem>>, %arg5: memref<8x4xf32, #tpu.memory_space<vmem>>, %arg6: memref<1x8x256xf32, #tpu.memory_space<vmem>>, %arg7: memref<1x1x8x1xf32, #tpu.memory_space<vmem>>, %arg8: memref<1x1x8x1xf32, #tpu.memory_space<vmem>>) attributes {dimension_semantics = [#tpu.dimension_semantics<parallel>, #tpu.dimension_semantics<parallel>], iteration_bounds = array<i64: 2, 4>, scalar_prefetch = 0 : i64, scratch_operands = 0 : i64, tpu.core_type = #tpu.core_type<tc>, window_params = [{transform_indices = @transform_0, window_bounds = array<i64: 1, 4, 256>}, {pipeline_mode = #tpu.pipeline_mode<synchronous>, transform_indices = @transform_1, window_bounds = array<i64: 4, 1>}, {pipeline_mode = #tpu.pipeline_mode<synchronous>, transform_indices = @transform_2, window_bounds = array<i64: 4, 1>}, {pipeline_mode = #tpu.pipeline_mode<synchronous>, transform_indices = @transform_3, window_bounds = array<i64: 8, 4>}, {transform_indices = @transform_4, window_bounds = array<i64: 1, 8, 256>}, {transform_indices = @transform_5, window_bounds = array<i64: 1, 1, 8, 1>}, {transform_indices = @transform_6, window_bounds = array<i64: 1, 1, 8, 1>}]} {
    %c0 = arith.constant 0 : index
    %c0_0 = arith.constant 0 : index
    %c0_1 = arith.constant 0 : index
    %0 = vector.load %arg2[%c0, %c0_0, %c0_1] : memref<1x4x256xf32, #tpu.memory_space<vmem>>, vector<1x4x256xf32>
    %1 = vector.shape_cast %0 : vector<1x4x256xf32> to vector<4x256xf32>
    %c0_2 = arith.constant 0 : index
    %c0_3 = arith.constant 0 : index
    %2 = vector.load %arg3[%c0_2, %c0_3] : memref<4x1xf32, #tpu.memory_space<vmem>>, vector<4x1xf32>
    %3 = vector.broadcast %2 : vector<4x1xf32> to vector<4x256xf32>
    %4 = arith.mulf %1, %3 : vector<4x256xf32>
    %c0_4 = arith.constant 0 : index
    %c0_5 = arith.constant 0 : index
    %5 = vector.load %arg4[%c0_4, %c0_5] : memref<4x1xf32, #tpu.memory_space<vmem>>, vector<4x1xf32>
    %6 = vector.broadcast %5 : vector<4x1xf32> to vector<4x256xf32>
    %7 = arith.addf %4, %6 : vector<4x256xf32>
    %cst = arith.constant 0.000000e+00 : f32
    %8 = vector.broadcast %cst : f32 to vector<4x256xf32>
    %9 = arith.maximumf %7, %8 : vector<4x256xf32>
    %c0_6 = arith.constant 0 : index
    %c0_7 = arith.constant 0 : index
    %10 = vector.load %arg5[%c0_6, %c0_7] : memref<8x4xf32, #tpu.memory_space<vmem>>, vector<8x4xf32>
    %cst_8 = arith.constant dense<0.000000e+00> : vector<8x256xf32>
    %11 = tpu.matmul %10, %9, %cst_8 {dimension_numbers = #tpu.dot_dimension_numbers<[1], [0], [0], [1], [0, 0, 1, 1], [], []>} : vector<8x4xf32>, vector<4x256xf32>, vector<8x256xf32> -> vector<8x256xf32>
    %12 = vector.shape_cast %11 : vector<8x256xf32> to vector<1x8x256xf32>
    %c0_9 = arith.constant 0 : index
    %c0_10 = arith.constant 0 : index
    %c0_11 = arith.constant 0 : index
    %13 = vector.load %arg6[%c0_9, %c0_10, %c0_11] : memref<1x8x256xf32, #tpu.memory_space<vmem>>, vector<1x8x256xf32>
    tpu.vector_store %arg6[%c0_9, %c0_10, %c0_11], %12 {strides = array<i32>} : memref<1x8x256xf32, #tpu.memory_space<vmem>>, vector<1x8x256xf32>,
    %cst_12 = arith.constant dense<0.000000e+00> : vector<8xf32>
    %14 = vector.multi_reduction <add>, %11, %cst_12 [1] : vector<8x256xf32> to vector<8xf32>
    %15 = vector.shape_cast %14 : vector<8xf32> to vector<8x1xf32>
    %cst_13 = arith.constant 3.906250e-03 : f32
    %16 = vector.broadcast %cst_13 : f32 to vector<8x1xf32>
    %17 = arith.mulf %15, %16 : vector<8x1xf32>
    %18 = vector.broadcast %17 : vector<8x1xf32> to vector<8x256xf32>
    %19 = arith.subf %11, %18 : vector<8x256xf32>
    %20 = arith.mulf %19, %19 : vector<8x256xf32>
    %cst_14 = arith.constant dense<0.000000e+00> : vector<8xf32>
    %21 = vector.multi_reduction <add>, %20, %cst_14 [1] : vector<8x256xf32> to vector<8xf32>
    %22 = vector.shape_cast %21 : vector<8xf32> to vector<8x1xf32>
    %23 = vector.shape_cast %17 : vector<8x1xf32> to vector<1x1x8x1xf32>
    %c0_15 = arith.constant 0 : index
    %c0_16 = arith.constant 0 : index
    %c0_17 = arith.constant 0 : index
    %c0_18 = arith.constant 0 : index
    %24 = vector.load %arg7[%c0_15, %c0_16, %c0_17, %c0_18] : memref<1x1x8x1xf32, #tpu.memory_space<vmem>>, vector<1x1x8x1xf32>
    tpu.vector_store %arg7[%c0_15, %c0_16, %c0_17, %c0_18], %23 {strides = array<i32>} : memref<1x1x8x1xf32, #tpu.memory_space<vmem>>, vector<1x1x8x1xf32>,
    %25 = vector.shape_cast %22 : vector<8x1xf32> to vector<1x1x8x1xf32>
    %c0_19 = arith.constant 0 : index
    %c0_20 = arith.constant 0 : index
    %c0_21 = arith.constant 0 : index
    %c0_22 = arith.constant 0 : index
    %26 = vector.load %arg8[%c0_19, %c0_20, %c0_21, %c0_22] : memref<1x1x8x1xf32, #tpu.memory_space<vmem>>, vector<1x1x8x1xf32>
    tpu.vector_store %arg8[%c0_19, %c0_20, %c0_21, %c0_22], %25 {strides = array<i32>} : memref<1x1x8x1xf32, #tpu.memory_space<vmem>>, vector<1x1x8x1xf32>,
    return
  }
  func.func @transform_0(%arg0: i32, %arg1: i32) -> (i32, i32, i32) {
    %c0_i32 = arith.constant 0 : i32
    %c0_i32_0 = arith.constant 0 : i32
    return %arg0, %c0_i32, %arg1 : i32, i32, i32
  }
  func.func @transform_1(%arg0: i32, %arg1: i32) -> (i32, i32) {
    %c0_i32 = arith.constant 0 : i32
    %c0_i32_0 = arith.constant 0 : i32
    %c0_i32_1 = arith.constant 0 : i32
    return %c0_i32, %c0_i32_0 : i32, i32
  }
  func.func @transform_2(%arg0: i32, %arg1: i32) -> (i32, i32) {
    %c0_i32 = arith.constant 0 : i32
    %c0_i32_0 = arith.constant 0 : i32
    %c0_i32_1 = arith.constant 0 : i32
    return %c0_i32, %c0_i32_0 : i32, i32
  }
  func.func @transform_3(%arg0: i32, %arg1: i32) -> (i32, i32) {
    %c0_i32 = arith.constant 0 : i32
    %c0_i32_0 = arith.constant 0 : i32
    %c0_i32_1 = arith.constant 0 : i32
    return %c0_i32, %c0_i32_0 : i32, i32
  }
  func.func @transform_4(%arg0: i32, %arg1: i32) -> (i32, i32, i32) {
    %c0_i32 = arith.constant 0 : i32
    %c0_i32_0 = arith.constant 0 : i32
    return %arg0, %c0_i32, %arg1 : i32, i32, i32
  }
  func.func @transform_5(%arg0: i32, %arg1: i32) -> (i32, i32, i32, i32) {
    %c0_i32 = arith.constant 0 : i32
    %c0_i32_0 = arith.constant 0 : i32
    %c0_i32_1 = arith.constant 0 : i32
    return %arg0, %arg1, %c0_i32, %c0_i32_0 : i32, i32, i32, i32
  }
  func.func @transform_6(%arg0: i32, %arg1: i32) -> (i32, i32, i32, i32) {
    %c0_i32 = arith.constant 0 : i32
    %c0_i32_0 = arith.constant 0 : i32
    %c0_i32_1 = arith.constant 0 : i32
    return %arg0, %arg1, %c0_i32, %c0_i32_0 : i32, i32, i32, i32
  }
}

module attributes {stable_mosaic.version = 11 : i64} {
  func.func @_bn_relu_kernel(%arg0: i32, %arg1: i32, %arg2: memref<1x8x256xf32, #tpu.memory_space<vmem>>, %arg3: memref<8x1xf32, #tpu.memory_space<vmem>>, %arg4: memref<8x1xf32, #tpu.memory_space<vmem>>, %arg5: memref<1x8x256xf32, #tpu.memory_space<vmem>>) attributes {dimension_semantics = [#tpu.dimension_semantics<parallel>, #tpu.dimension_semantics<parallel>], iteration_bounds = array<i64: 2, 4>, scalar_prefetch = 0 : i64, scratch_operands = 0 : i64, tpu.core_type = #tpu.core_type<tc>, window_params = [{transform_indices = @transform_0, window_bounds = array<i64: 1, 8, 256>}, {pipeline_mode = #tpu.pipeline_mode<synchronous>, transform_indices = @transform_1, window_bounds = array<i64: 8, 1>}, {pipeline_mode = #tpu.pipeline_mode<synchronous>, transform_indices = @transform_2, window_bounds = array<i64: 8, 1>}, {transform_indices = @transform_3, window_bounds = array<i64: 1, 8, 256>}]} {
    %c0 = arith.constant 0 : index
    %c0_0 = arith.constant 0 : index
    %c0_1 = arith.constant 0 : index
    %0 = vector.load %arg2[%c0, %c0_0, %c0_1] : memref<1x8x256xf32, #tpu.memory_space<vmem>>, vector<1x8x256xf32>
    %1 = vector.shape_cast %0 : vector<1x8x256xf32> to vector<8x256xf32>
    %c0_2 = arith.constant 0 : index
    %c0_3 = arith.constant 0 : index
    %2 = vector.load %arg3[%c0_2, %c0_3] : memref<8x1xf32, #tpu.memory_space<vmem>>, vector<8x1xf32>
    %3 = vector.broadcast %2 : vector<8x1xf32> to vector<8x256xf32>
    %4 = arith.mulf %1, %3 : vector<8x256xf32>
    %c0_4 = arith.constant 0 : index
    %c0_5 = arith.constant 0 : index
    %5 = vector.load %arg4[%c0_4, %c0_5] : memref<8x1xf32, #tpu.memory_space<vmem>>, vector<8x1xf32>
    %6 = vector.broadcast %5 : vector<8x1xf32> to vector<8x256xf32>
    %7 = arith.addf %4, %6 : vector<8x256xf32>
    %cst = arith.constant 0.000000e+00 : f32
    %8 = vector.broadcast %cst : f32 to vector<8x256xf32>
    %9 = arith.maximumf %7, %8 : vector<8x256xf32>
    %10 = vector.shape_cast %9 : vector<8x256xf32> to vector<1x8x256xf32>
    %c0_6 = arith.constant 0 : index
    %c0_7 = arith.constant 0 : index
    %c0_8 = arith.constant 0 : index
    %11 = vector.load %arg5[%c0_6, %c0_7, %c0_8] : memref<1x8x256xf32, #tpu.memory_space<vmem>>, vector<1x8x256xf32>
    tpu.vector_store %arg5[%c0_6, %c0_7, %c0_8], %10 {strides = array<i32>} : memref<1x8x256xf32, #tpu.memory_space<vmem>>, vector<1x8x256xf32>,
    return
  }
  func.func @transform_0(%arg0: i32, %arg1: i32) -> (i32, i32, i32) {
    %c0_i32 = arith.constant 0 : i32
    %c0_i32_0 = arith.constant 0 : i32
    return %arg0, %c0_i32, %arg1 : i32, i32, i32
  }
  func.func @transform_1(%arg0: i32, %arg1: i32) -> (i32, i32) {
    %c0_i32 = arith.constant 0 : i32
    %c0_i32_0 = arith.constant 0 : i32
    %c0_i32_1 = arith.constant 0 : i32
    return %c0_i32, %c0_i32_0 : i32, i32
  }
  func.func @transform_2(%arg0: i32, %arg1: i32) -> (i32, i32) {
    %c0_i32 = arith.constant 0 : i32
    %c0_i32_0 = arith.constant 0 : i32
    %c0_i32_1 = arith.constant 0 : i32
    return %c0_i32, %c0_i32_0 : i32, i32
  }
  func.func @transform_3(%arg0: i32, %arg1: i32) -> (i32, i32, i32) {
    %c0_i32 = arith.constant 0 : i32
    %c0_i32_0 = arith.constant 0 : i32
    return %arg0, %c0_i32, %arg1 : i32, i32, i32
  }
}

</mosaic_0001>

<llo_original>
// kernel: decoder_block.4
$region0: #{decoder_block.4}
  #allocation0 [shape = 'u32[]', space=smem, size = 0x4, offset = 0x4, fixed_abs, tag = 'smem constant byte address 0x4 - core index']
  #allocation1 [shape = 'u32[144,128]{1,0:T(1,128)}', space=vmem, size = 0x12000, scoped, tag = 'internal scratch']
  %s0 = inlined_call_operand.vmem [shape: f32[2,16,256], index: 0, kind: input, shape index: {}]
  %s1 = inlined_call_operand.vmem [shape: f32[4,16], index: 1, kind: input, shape index: {}]
  %s2 = inlined_call_operand.vmem [shape: f32[2,4,256], index: 2, kind: output, shape index: {0}]
  %s3 = inlined_call_operand.vmem [shape: f32[2,2,4,1], index: 3, kind: output, shape index: {1}]
  %s4 = inlined_call_operand.vmem [shape: f32[2,2,4,1], index: 4, kind: output, shape index: {2}]
  %5 = xla_tuple %s2, %s3, %s4
  %s6 = sld [smem:[#allocation0]]
  $region95: #{decoder_block.4} parent=0
    _
  %s8 = ssub.s32 1, %s6
  %s9 = scalar_select 0, %s8, %s6
  $region1: #{decoder_block.4} parent=0
    #allocation2 [shape = 'u8[16384]{0}', space=vmem, size = 0x4000, scoped, tag = 'input window, operand 0']
    loop: start=0, step=1, limit=6
    $region2: #{decoder_block.4} parent=1 // loop_pre_header
      _
    $region3: #{decoder_block.4} parent=1 // loop_header
      %s11 = sphi 0, %s15
      %p12 = scmp.ge.s32.totalorder %s11, 6
      %s18 = sphi 0, %s30
      %s19 = sphi 0, %s26
      %s20 = sphi 0, %s18
      %s21 = sphi 0, %s19
      %s22 = sphi 0, %s20
      %s23 = sphi 0, %s21
      %s35 = sphi 0, %s37
      %s38 = sphi 0, %s35
      %s39 = sphi 0, %s38
      %s55 = sphi 0, %s39
      %s59 = sphi 0, %s59
      %s61 = sphi 0, %s59
      %s62 = sphi 0, %s61
      %s76 = sphi 0, %s62
      %s84 = sphi 0, %s86
      %s87 = sphi 0, %s84
      %s88 = sphi 0, %s87
      %s104 = sphi 0, %s88
      %s112 = sphi 0, %s114
      %s115 = sphi 0, %s112
      %s116 = sphi 0, %s115
      %s132 = sphi 0, %s116
      %s140 = sphi 0, %s142
      %s143 = sphi 0, %s140
      %s144 = sphi 0, %s143
      %s160 = sphi 0, %s144
    $region4: #{decoder_block.4} parent=1 // loop_header_branch
      %14 = sbr.rel (%p12) target = $region8
    $region5: #{decoder_block.4} parent=1 // loop_body
      %s16 = ssub.s32 %s11, 1
      %s17 = ssub.s32 %s11, 2
      %s24 = sadd.s32 1, %s19
      %p25 = scmp.ge.s32.totalorder %s24, 2
      %s26 = scalar_select %p25, 0, %s24
      %s27 = sadd.s32 1, %s18
      %s28 = scalar_select %p25, %s27, %s18
      %p29 = scmp.ge.s32.totalorder %s28, 2
      %s30 = scalar_select %p29, 0, %s28
      %s31 = ssub.s32 %s18, %s30
      %s32 = ssub.s32 %s19, %s26
      %s33 = sor.u32 %s31, %s32
      %p34 = scmp.eq.s32.totalorder %s33, 0
      %s36 = sadd.s32 %s35, 1
      %s37 = scalar_select %p34, %s35, %s36
      %p40 = pneg %p34
      %p41 = scmp.eq.s32.totalorder %s11, 3
      %p42 = por %p40, %p41
      %p43 = scmp.ne.s32.totalorder %s35, %s38
      %p44 = scmp.eq.s32.totalorder %s11, 0
      %p45 = por %p43, %p44
      %p46 = scmp.ne.s32.totalorder %s35, %s38
      %p47 = scmp.eq.s32.totalorder %s16, 3
      %p48 = por %p46, %p47
      %p49 = scmp.ne.s32.totalorder %s38, %s39
      %p50 = scmp.eq.s32.totalorder %s16, 0
      %p51 = por %p49, %p50
      %p52 = scmp.ne.s32.totalorder %s38, %s39
      %p53 = scmp.eq.s32.totalorder %s17, 3
      %p54 = por %p52, %p53
      %p56 = scmp.ne.s32.totalorder %s39, %s55
      %p57 = scmp.eq.s32.totalorder %s17, 0
      %p58 = por %p56, %p57
      %s60 = sadd.s32 %s59, 1
      %p63 = scmp.eq.s32.totalorder %s11, 3
      %p64 = scmp.ne.s32.totalorder %s59, %s61
      %p65 = scmp.eq.s32.totalorder %s11, 0
      %p66 = por %p64, %p65
      %p67 = scmp.ne.s32.totalorder %s59, %s61
      %p68 = scmp.eq.s32.totalorder %s16, 3
      %p69 = por %p67, %p68
      %p70 = scmp.ne.s32.totalorder %s61, %s62
      %p71 = scmp.eq.s32.totalorder %s16, 0
      %p72 = por %p70, %p71
      %p73 = scmp.ne.s32.totalorder %s61, %s62
      %p74 = scmp.eq.s32.totalorder %s17, 3
      %p75 = por %p73, %p74
      %p77 = scmp.ne.s32.totalorder %s62, %s76
      %p78 = scmp.eq.s32.totalorder %s17, 0
      %p79 = por %p77, %p78
      %s80 = ssub.s32 %s18, %s30
      %s81 = ssub.s32 %s19, %s26
      %s82 = sor.u32 %s80, %s81
      %p83 = scmp.eq.s32.totalorder %s82, 0
      %s85 = sadd.s32 %s84, 1
      %s86 = scalar_select %p83, %s84, %s85
      %p89 = pneg %p83
      %p90 = scmp.eq.s32.totalorder %s11, 3
      %p91 = por %p89, %p90
      %p92 = scmp.ne.s32.totalorder %s84, %s87
      %p93 = scmp.eq.s32.totalorder %s11, 0
      %p94 = por %p92, %p93
      %p95 = scmp.ne.s32.totalorder %s84, %s87
      %p96 = scmp.eq.s32.totalorder %s16, 3
      %p97 = por %p95, %p96
      %p98 = scmp.ne.s32.totalorder %s87, %s88
      %p99 = scmp.eq.s32.totalorder %s16, 0
      %p100 = por %p98, %p99
      %p101 = scmp.ne.s32.totalorder %s87, %s88
      %p102 = scmp.eq.s32.totalorder %s17, 3
      %p103 = por %p101, %p102
      %p105 = scmp.ne.s32.totalorder %s88, %s104
      %p106 = scmp.eq.s32.totalorder %s17, 0
      %p107 = por %p105, %p106
      %s108 = ssub.s32 %s18, %s30
      %s109 = ssub.s32 %s19, %s26
      %s110 = sor.u32 %s108, %s109
      %p111 = scmp.eq.s32.totalorder %s110, 0
      %s113 = sadd.s32 %s112, 1
      %s114 = scalar_select %p111, %s112, %s113
      %p117 = pneg %p111
      %p118 = scmp.eq.s32.totalorder %s11, 3
      %p119 = por %p117, %p118
      %p120 = scmp.ne.s32.totalorder %s112, %s115
      %p121 = scmp.eq.s32.totalorder %s11, 0
      %p122 = por %p120, %p121
      %p123 = scmp.ne.s32.totalorder %s112, %s115
      %p124 = scmp.eq.s32.totalorder %s16, 3
      %p125 = por %p123, %p124
      %p126 = scmp.ne.s32.totalorder %s115, %s116
      %p127 = scmp.eq.s32.totalorder %s16, 0
      %p128 = por %p126, %p127
      %p129 = scmp.ne.s32.totalorder %s115, %s116
      %p130 = scmp.eq.s32.totalorder %s17, 3
      %p131 = por %p129, %p130
      %p133 = scmp.ne.s32.totalorder %s116, %s132
      %p134 = scmp.eq.s32.totalorder %s17, 0
      %p135 = por %p133, %p134
      %s136 = ssub.s32 %s18, %s30
      %s137 = ssub.s32 %s19, %s26
      %s138 = sor.u32 %s136, %s137
      %p139 = scmp.eq.s32.totalorder %s138, 0
      %s141 = sadd.s32 %s140, 1
      %s142 = scalar_select %p139, %s140, %s141
      %p145 = pneg %p139
      %p146 = scmp.eq.s32.totalorder %s11, 3
      %p147 = por %p145, %p146
      %p148 = scmp.ne.s32.totalorder %s140, %s143
      %p149 = scmp.eq.s32.totalorder %s11, 0
      %p150 = por %p148, %p149
      %p151 = scmp.ne.s32.totalorder %s140, %s143
      %p152 = scmp.eq.s32.totalorder %s16, 3
      %p153 = por %p151, %p152
      %p154 = scmp.ne.s32.totalorder %s143, %s144
      %p155 = scmp.eq.s32.totalorder %s16, 0
      %p156 = por %p154, %p155
      %p157 = scmp.ne.s32.totalorder %s143, %s144
      %p158 = scmp.eq.s32.totalorder %s17, 3
      %p159 = por %p157, %p158
      %p161 = scmp.ne.s32.totalorder %s144, %s160
      %p162 = scmp.eq.s32.totalorder %s17, 0
      %p163 = por %p161, %p162
      %p164 = scmp.le.s32.totalorder 1, %s11
      %p165 = scmp.lt.s32.totalorder %s11, 5
      %p166 = pnand %p164, %p165
      %p167 = pneg %p166
      // Predicated region
      $region9: #{decoder_block.4} parent=5 // pred_check
        _
      $region10: #{decoder_block.4} parent=5 // pred_check_branch
        %169 = sbr.rel (%p166) target = $region12
      $region11: #{decoder_block.4} parent=5 // pred_region
        %s170 = ssub.s32 %s11, 1
        // Predicated region
        $region13: #{decoder_block.4} parent=11 // pred_check
          %p171 = pneg %p72
        $region14: #{decoder_block.4} parent=11 // pred_check_branch
          %173 = sbr.rel (%p171) target = $region16
        $region15: #{decoder_block.4} parent=11 // pred_region
          _
        $region16: #{decoder_block.4} parent=11 // pred_fallthru
          _
      $region12: #{decoder_block.4} parent=5 // pred_fallthru
        _
      %p174 = scmp.lt.s32.totalorder %s11, 4
      // Predicated region
      $region17: #{decoder_block.4} parent=5 // pred_check
        %p175 = pneg %p174
      $region18: #{decoder_block.4} parent=5 // pred_check_branch
        %177 = sbr.rel (%p175) target = $region20
      $region19: #{decoder_block.4} parent=5 // pred_region
        // Predicated region
        $region21: #{decoder_block.4} parent=19 // pred_check
          %p178 = pneg %p45
        $region22: #{decoder_block.4} parent=19 // pred_check_branch
          %180 = sbr.rel (%p178) target = $region24
        $region23: #{decoder_block.4} parent=19 // pred_region
          %s181 = sand.u32 %s35, 1
          %s182 = sand.u32 %s35, 1
          %s183 = smul.addr %s182, 16
          %s184 = scalar_lea.vmem [#allocation2], %s183
          %s185 = smul.addr %s18, 4
          %s186 = sadd.s32 %s19, %s185
          %s187 = smul.addr %s186, 8
          %s188 = scalar_lea.vmem %s0, %s187
          // Predicated region
          $region25: #{decoder_block.4} parent=23 // pred_check
            _
          $region26: #{decoder_block.4} parent=23 // pred_check_branch
            %190 = sbr.rel (0) target = $region28
          $region27: #{decoder_block.4} parent=23 // pred_region
            // Predicated region
            $region29: #{decoder_block.4} parent=27 // pred_check
              _
            $region30: #{decoder_block.4} parent=27 // pred_check_branch
              %192 = sbr.rel (0) target = $region32
            $region31: #{decoder_block.4} parent=27 // pred_region
              // Predicated region
              $region44: #{decoder_block.4} parent=31 // pred_check
                _
              $region45: #{decoder_block.4} parent=31 // pred_check_branch
                %209 = sbr.rel (0) target = $region47
              $region46: #{decoder_block.4} parent=31 // pred_region
                loop: start=0, step=1, limit=1
                $region48: #{decoder_block.4} parent=46 // loop_pre_header
                  _
                $region49: #{decoder_block.4} parent=46 // loop_header
                  %s211 = sphi 0, %s215
                  %p212 = scmp.ge.s32.totalorder %s211, 1
                  %s216 = sphi %s188, %s188
                  %s217 = sphi %s184, %s184
                $region50: #{decoder_block.4} parent=46 // loop_header_branch
                  %214 = sbr.rel (%p212) target = $region54
                $region51: #{decoder_block.4} parent=46 // loop_body
                  %v218 = vld [vmem:[%s216] sm:$0xff]
                  %219 = vst [vmem:[%s217] sm:$0xff] %v218
                  %v220 = vld [vmem:[%s216 + $0x10] sm:$0xff]
                  %221 = vst [vmem:[%s217 + $0x8] sm:$0xff] %v220
                $region52: #{decoder_block.4} parent=46 // loop_footer
                  %s215 = sadd.s32 1, %s211
                $region53: #{decoder_block.4} parent=46 // loop_footer_branch
                  %210 = sbr.rel target = $region49
                $region54: #{decoder_block.4} parent=46 // loop_exit
                  _
              $region47: #{decoder_block.4} parent=31 // pred_fallthru
                _
              // Predicated region
              $region55: #{decoder_block.4} parent=31 // pred_check
                _
              $region56: #{decoder_block.4} parent=31 // pred_check_branch
                %223 = sbr.rel target = $region58
              $region57: #{decoder_block.4} parent=31 // pred_region
                _
              $region58: #{decoder_block.4} parent=31 // pred_fallthru
                _
            $region32: #{decoder_block.4} parent=27 // pred_fallthru
              _
            // Predicated region
            $region33: #{decoder_block.4} parent=27 // pred_check
              _
            $region34: #{decoder_block.4} parent=27 // pred_check_branch
              %194 = sbr.rel target = $region36
            $region35: #{decoder_block.4} parent=27 // pred_region
              loop: start=0, step=1, limit=1
              $region37: #{decoder_block.4} parent=35 // loop_pre_header
                _
              $region38: #{decoder_block.4} parent=35 // loop_header
                %s197 = sphi 0, %s201
                %p198 = scmp.ge.s32.totalorder %s197, 1
                %s202 = sphi %s188, %s188
                %s203 = sphi %s184, %s184
              $region39: #{decoder_block.4} parent=35 // loop_header_branch
                %200 = sbr.rel (%p198) target = $region43
              $region40: #{decoder_block.4} parent=35 // loop_body
                %v204 = vld [vmem:[%s202] sm:$0xff]
                %205 = vst [vmem:[%s203] sm:$0xff] %v204
                %v206 = vld [vmem:[%s202 + $0x10] sm:$0xff]
                %207 = vst [vmem:[%s203 + $0x8] sm:$0xff] %v206
              $region41: #{decoder_block.4} parent=35 // loop_footer
                %s201 = sadd.s32 1, %s197
              $region42: #{decoder_block.4} parent=35 // loop_footer_branch
                %196 = sbr.rel target = $region38
              $region43: #{decoder_block.4} parent=35 // loop_exit
                _
            $region36: #{decoder_block.4} parent=27 // pred_fallthru
              _
          $region28: #{decoder_block.4} parent=23 // pred_fallthru
            _
          %224 = vnop
        $region24: #{decoder_block.4} parent=19 // pred_fallthru
          _
      $region20: #{decoder_block.4} parent=5 // pred_fallthru
        _
      %p225 = scmp.le.s32.totalorder 1, %s11
      %p226 = scmp.lt.s32.totalorder %s11, 5
      %p227 = pnand %p225, %p226
      %p228 = pneg %p227
      // Predicated region
      $region59: #{decoder_block.4} parent=5 // pred_check
        _
      $region60: #{decoder_block.4} parent=5 // pred_check_branch
        %230 = sbr.rel (%p227) target = $region62
      $region61: #{decoder_block.4} parent=5 // pred_region
        %s231 = ssub.s32 %s11, 1
        %s232 = sand.u32 %s38, 1
        %s233 = sand.u32 %s38, 1
        %s234 = smul.addr %s233, 16
        %s235 = scalar_lea.vmem [#allocation2], %s234
        // Predicated region
        $region63: #{decoder_block.4} parent=61 // pred_check
          %p236 = pneg %p51
        $region64: #{decoder_block.4} parent=61 // pred_check_branch
          %238 = sbr.rel (%p236) target = $region66
        $region65: #{decoder_block.4} parent=61 // pred_region
          _
        $region66: #{decoder_block.4} parent=61 // pred_fallthru
          _
        %s239 = sand.u32 %s38, 1
        %s240 = sand.u32 %s38, 1
        %s241 = smul.addr %s240, 16
        %s242 = scalar_lea.vmem [#allocation2], %s241
        %p243 = pneg %p51
        %p244 = pneg %p48
        %p245 = pneg %p72
        %p246 = pneg %p69
        %p247 = pneg %p100
        %p248 = pneg %p97
        %p249 = scmp.lt.s32.totalorder %s20, 1
        %s250 = scalar_select %p249, %s20, 1
        %p251 = scmp.lt.s32.totalorder %s21, 1
        %s252 = scalar_select %p251, %s21, 1
        %s253 = smul.addr %s250, 2
        %s254 = sadd.s32 %s252, %s253
        %s255 = smul.addr %s254, 4
        %s256 = scalar_lea.vmem %s2, %s255
        %p257 = pneg %p128
        %p258 = pneg %p125
        %p259 = scmp.lt.s32.totalorder %s20, 1
        %s260 = scalar_select %p259, %s20, 1
        %p261 = scmp.lt.s32.totalorder %s21, 1
        %s262 = scalar_select %p261, %s21, 1
        %s263 = smul.addr %s260, 2
        %s264 = sadd.s32 %s262, %s263
        %s265 = smul.addr %s264, 4
        %s266 = scalar_lea.vmem %s3, %s265
        %p267 = pneg %p156
        %p268 = pneg %p153
        %p269 = scmp.lt.s32.totalorder %s20, 1
        %s270 = scalar_select %p269, %s20, 1
        %p271 = scmp.lt.s32.totalorder %s21, 1
        %s272 = scalar_select %p271, %s21, 1
        %s273 = smul.addr %s270, 2
        %s274 = sadd.s32 %s272, %s273
        %s275 = smul.addr %s274, 4
        %s276 = scalar_lea.vmem %s4, %s275
        %p277 = scmp.lt.s32.totalorder %s20, 1
        %s278 = scalar_select %p277, %s20, 1
        %p279 = scmp.lt.s32.totalorder %s21, 1
        %s280 = scalar_select %p279, %s21, 1
        %s281 = smul.addr %s278, 2
        %s282 = sadd.s32 %s280, %s281
        %s283 = smul.addr %s282, 4
        %s284 = scalar_lea.vmem %s2, %s283
        %p285 = scmp.lt.s32.totalorder %s20, 1
        %s286 = scalar_select %p285, %s20, 1
        %p287 = scmp.lt.s32.totalorder %s21, 1
        %s288 = scalar_select %p287, %s21, 1
        %s289 = smul.addr %s286, 2
        %s290 = sadd.s32 %s288, %s289
        %s291 = smul.addr %s290, 4
        %s292 = scalar_lea.vmem %s3, %s291
        %p293 = scmp.lt.s32.totalorder %s20, 1
        %s294 = scalar_select %p293, %s20, 1
        %p295 = scmp.lt.s32.totalorder %s21, 1
        %s296 = scalar_select %p295, %s21, 1
        %s297 = smul.addr %s294, 2
        %s298 = sadd.s32 %s296, %s297
        %s299 = smul.addr %s298, 4
        %s300 = scalar_lea.vmem %s4, %s299
        %v301 = vld [vmem:[%s235] sm:$0xff]
        %v302 = vld [vmem:[%s235 + $0x8] sm:$0xff]
        %v303 = vld [vmem:[%s1] sm:$0xf]
        %vm304 = vcmask 130048
        %v306 = vsel %vm304, %v303, 0
        %308 = vmatprep.subr.mxu0 0.0
        %309 = vmatpush1.msra.mxu0 %v301
        %310 = vmatprep.subr.mxu0 0.0
        %311 = vmatpush1.msra.mxu0 %v302
        %312 = vmatprep.subr.mxu0 0.0
        %313 = vmatpush1.msra.mxu0 0.0
        %314 = vmatprep.subr.mxu0 0.0
        %315 = vmatpush1.msra.mxu0 0.0
        %316 = vmatprep.subr.mxu0 0.0
        %317 = vmatpush1.msra.mxu0 0.0
        %318 = vmatprep.subr.mxu0 0.0
        %319 = vmatpush1.msra.mxu0 0.0
        %320 = vmatprep.subr.mxu0 0.0
        %321 = vmatpush1.msra.mxu0 0.0
        %322 = vmatprep.subr.mxu0 0.0
        %323 = vmatpush1.msra.mxu0 0.0
        %324 = vmatprep.subr.mxu0 0.0
        %325 = vmatpush1.msra.mxu0 0.0
        %326 = vmatprep.subr.mxu0 0.0
        %327 = vmatpush1.msra.mxu0 0.0
        %328 = vmatprep.subr.mxu0 0.0
        %329 = vmatpush1.msra.mxu0 0.0
        %330 = vmatprep.subr.mxu0 0.0
        %331 = vmatpush1.msra.mxu0 0.0
        %332 = vmatprep.subr.mxu0 0.0
        %333 = vmatpush1.msra.mxu0 0.0
        %334 = vmatprep.subr.mxu0 0.0
        %335 = vmatpush1.msra.mxu0 0.0
        %336 = vmatprep.subr.mxu0 0.0
        %337 = vmatpush1.msra.mxu0 0.0
        %338 = vmatprep.subr.mxu0 0.0
        %339 = vmatpush1.msra.mxu0 0.0
        %340 = vmatprep.subr.mxu0 0.0
        %341 = vmatpush1.msra.mxu0 0.0
        %342 = vmatprep.subr.mxu0 0.0
        %343 = vmatpush1.msra.mxu0 0.0
        %344 = vmatprep.subr.mxu0 0.0
        %345 = vmatpush1.msra.mxu0 0.0
        %346 = vmatprep.subr.mxu0 0.0
        %347 = vmatpush1.msra.mxu0 0.0
        %348 = vmatprep.subr.mxu0 0.0
        %349 = vmatpush1.msra.mxu0 0.0
        %350 = vmatprep.subr.mxu0 0.0
        %351 = vmatpush1.msra.mxu0 0.0
        %352 = vmatprep.subr.mxu0 0.0
        %353 = vmatpush1.msra.mxu0 0.0
        %354 = vmatprep.subr.mxu0 0.0
        %355 = vmatpush1.msra.mxu0 0.0
        %356 = vmatprep.subr.mxu0 0.0
        %357 = vmatpush1.msra.mxu0 0.0
        %358 = vmatprep.subr.mxu0 0.0
        %359 = vmatpush1.msra.mxu0 0.0
        %360 = vmatprep.subr.mxu0 0.0
        %361 = vmatpush1.msra.mxu0 0.0
        %362 = vmatprep.subr.mxu0 0.0
        %363 = vmatpush1.msra.mxu0 0.0
        %364 = vmatprep.subr.mxu0 0.0
        %365 = vmatpush1.msra.mxu0 0.0
        %366 = vmatprep.subr.mxu0 0.0
        %367 = vmatpush1.msra.mxu0 0.0
        %368 = vmatprep.subr.mxu0 0.0
        %369 = vmatpush1.msra.mxu0 0.0
        %370 = vmatprep.subr.mxu0 0.0
        %371 = vmatpush1.msra.mxu0 0.0
        %372 = vmatprep.mubr.f32.mxu0 0.0
        %373 = vmatmul.mubr.f32.gmra.mrb[0].mxu0 %v306
        %v374 = vpop.f32.mrb[0].mxu0
        %v375 = vadd.f32 0.0, %v374
        %v376 = vpop.f32.mrb[0].mxu0
        %377 = vdwg.mxu0
        %378 = vst [vmem:[%s284] sm:$0xf] %v375
        %vm379 = vcmask 1043456
        %v380 = vsel %vm379, %v375, 0.0
        %381 = vadd.xlane.f32.xlu0 %v380
        %v382 = vpop.xlane.xlu0 %381
        %v383 = vmul.f32 %v382, 0.0078125
        %v384 = vsub.f32 %v375, %v383
        %v385 = vmul.f32 %v384, %v384
        %v386 = vsel %vm379, %v385, 0.0
        %387 = vadd.xlane.f32.xlu0 %v386
        %v388 = vpop.xlane.xlu0 %387
        %vm389 = vcmask 3072
        %390 = vst.msk [vmem:[%s292] sm:$0xf] %vm389, %v383
        %391 = vst.msk [vmem:[%s300] sm:$0xf] %vm389, %v388
        %p392 = scmp.lt.s32.totalorder %s20, 1
        %s393 = scalar_select %p392, %s20, 1
        %p394 = scmp.lt.s32.totalorder %s21, 1
        %s395 = scalar_select %p394, %s21, 1
        %s396 = smul.addr %s393, 2
        %s397 = sadd.s32 %s395, %s396
        %s398 = smul.addr %s397, 4
        %s399 = scalar_lea.vmem %s2, %s398
        %p400 = scmp.lt.s32.totalorder %s20, 1
        %s401 = scalar_select %p400, %s20, 1
        %p402 = scmp.lt.s32.totalorder %s21, 1
        %s403 = scalar_select %p402, %s21, 1
        %s404 = smul.addr %s401, 2
        %s405 = sadd.s32 %s403, %s404
        %s406 = smul.addr %s405, 4
        %s407 = scalar_lea.vmem %s3, %s406
        %p408 = scmp.lt.s32.totalorder %s20, 1
        %s409 = scalar_select %p408, %s20, 1
        %p410 = scmp.lt.s32.totalorder %s21, 1
        %s411 = scalar_select %p410, %s21, 1
        %s412 = smul.addr %s409, 2
        %s413 = sadd.s32 %s411, %s412
        %s414 = smul.addr %s413, 4
        %s415 = scalar_lea.vmem %s4, %s414
        // Predicated region
        $region67: #{decoder_block.4} parent=61 // pred_check
          %p416 = pneg %p97
        $region68: #{decoder_block.4} parent=61 // pred_check_branch
          %418 = sbr.rel (%p416) target = $region70
        $region69: #{decoder_block.4} parent=61 // pred_region
          _
        $region70: #{decoder_block.4} parent=61 // pred_fallthru
          _
        // Predicated region
        $region71: #{decoder_block.4} parent=61 // pred_check
          %p419 = pneg %p125
        $region72: #{decoder_block.4} parent=61 // pred_check_branch
          %421 = sbr.rel (%p419) target = $region74
        $region73: #{decoder_block.4} parent=61 // pred_region
          _
        $region74: #{decoder_block.4} parent=61 // pred_fallthru
          _
        // Predicated region
        $region75: #{decoder_block.4} parent=61 // pred_check
          %p422 = pneg %p153
        $region76: #{decoder_block.4} parent=61 // pred_check_branch
          %424 = sbr.rel (%p422) target = $region78
        $region77: #{decoder_block.4} parent=61 // pred_region
          _
        $region78: #{decoder_block.4} parent=61 // pred_fallthru
          _
      $region62: #{decoder_block.4} parent=5 // pred_fallthru
        _
      %p425 = scmp.le.s32.totalorder 2, %s11
      // Predicated region
      $region79: #{decoder_block.4} parent=5 // pred_check
        %p426 = pneg %p425
      $region80: #{decoder_block.4} parent=5 // pred_check_branch
        %428 = sbr.rel (%p426) target = $region82
      $region81: #{decoder_block.4} parent=5 // pred_region
        %s429 = ssub.s32 %s11, 2
        // Predicated region
        $region83: #{decoder_block.4} parent=81 // pred_check
          %p430 = pneg %p103
        $region84: #{decoder_block.4} parent=81 // pred_check_branch
          %432 = sbr.rel (%p430) target = $region86
        $region85: #{decoder_block.4} parent=81 // pred_region
          %p433 = scmp.lt.s32.totalorder %s22, 1
          %s434 = scalar_select %p433, %s22, 1
          %p435 = scmp.lt.s32.totalorder %s23, 1
          %s436 = scalar_select %p435, %s23, 1
          %s437 = smul.addr %s434, 2
          %s438 = sadd.s32 %s436, %s437
          %s439 = smul.addr %s438, 4
          %s440 = scalar_lea.vmem %s2, %s439
        $region86: #{decoder_block.4} parent=81 // pred_fallthru
          _
        // Predicated region
        $region87: #{decoder_block.4} parent=81 // pred_check
          %p441 = pneg %p131
        $region88: #{decoder_block.4} parent=81 // pred_check_branch
          %443 = sbr.rel (%p441) target = $region90
        $region89: #{decoder_block.4} parent=81 // pred_region
          %p444 = scmp.lt.s32.totalorder %s22, 1
          %s445 = scalar_select %p444, %s22, 1
          %p446 = scmp.lt.s32.totalorder %s23, 1
          %s447 = scalar_select %p446, %s23, 1
          %s448 = smul.addr %s445, 2
          %s449 = sadd.s32 %s447, %s448
          %s450 = smul.addr %s449, 4
          %s451 = scalar_lea.vmem %s3, %s450
        $region90: #{decoder_block.4} parent=81 // pred_fallthru
          _
        // Predicated region
        $region91: #{decoder_block.4} parent=81 // pred_check
          %p452 = pneg %p159
        $region92: #{decoder_block.4} parent=81 // pred_check_branch
          %454 = sbr.rel (%p452) target = $region94
        $region93: #{decoder_block.4} parent=81 // pred_region
          %p455 = scmp.lt.s32.totalorder %s22, 1
          %s456 = scalar_select %p455, %s22, 1
          %p457 = scmp.lt.s32.totalorder %s23, 1
          %s458 = scalar_select %p457, %s23, 1
          %s459 = smul.addr %s456, 2
          %s460 = sadd.s32 %s458, %s459
          %s461 = smul.addr %s460, 4
          %s462 = scalar_lea.vmem %s4, %s461
        $region94: #{decoder_block.4} parent=81 // pred_fallthru
          _
      $region82: #{decoder_block.4} parent=5 // pred_fallthru
        _
    $region6: #{decoder_block.4} parent=1 // loop_footer
      %s15 = sadd.s32 1, %s11
    $region7: #{decoder_block.4} parent=1 // loop_footer_branch
      %10 = sbr.rel target = $region3
    $region8: #{decoder_block.4} parent=1 // loop_exit
      _

// kernel: decoder_block.7
$region0: #{decoder_block.7}
  #allocation0 [shape = 'u32[]', space=smem, size = 0x4, offset = 0x4, fixed_abs, tag = 'smem constant byte address 0x4 - core index']
  #allocation1 [shape = 'u32[144,128]{1,0:T(1,128)}', space=vmem, size = 0x12000, scoped, tag = 'internal scratch']
  %s0 = inlined_call_operand.vmem [shape: f32[2,8,1024], index: 0, kind: input, shape index: {}]
  %s1 = inlined_call_operand.vmem [shape: f32[8,1], index: 1, kind: input, shape index: {}]
  %s2 = inlined_call_operand.vmem [shape: f32[8,1], index: 2, kind: input, shape index: {}]
  %s3 = inlined_call_operand.vmem [shape: f32[2,8,1024], index: 3, kind: output, shape index: {}]
  %s4 = sld [smem:[#allocation0]]
  $region45: #{decoder_block.7} parent=0
    _
  %s6 = ssub.s32 1, %s4
  %s7 = scalar_select 0, %s6, %s4
  loop: start=0, step=1, limit=10
  $region2: #{decoder_block.7} parent=0 // loop_pre_header
    _
  $region3: #{decoder_block.7} parent=0 // loop_header
    %s9 = sphi 0, %s13
    %p10 = scmp.ge.s32.totalorder %s9, 10
    %s16 = sphi 0, %s28
    %s17 = sphi 0, %s24
    %s18 = sphi 0, %s16
    %s19 = sphi 0, %s17
    %s20 = sphi 0, %s18
    %s21 = sphi 0, %s19
    %s33 = sphi 0, %s35
    %s36 = sphi 0, %s33
    %s37 = sphi 0, %s36
    %s53 = sphi 0, %s37
    %s57 = sphi 0, %s57
    %s59 = sphi 0, %s57
    %s60 = sphi 0, %s59
    %s74 = sphi 0, %s60
    %s78 = sphi 0, %s78
    %s80 = sphi 0, %s78
    %s81 = sphi 0, %s80
    %s95 = sphi 0, %s81
    %s103 = sphi 0, %s105
    %s106 = sphi 0, %s103
    %s107 = sphi 0, %s106
    %s123 = sphi 0, %s107
  $region4: #{decoder_block.7} parent=0 // loop_header_branch
    %12 = sbr.rel (%p10) target = $region8
  $region5: #{decoder_block.7} parent=0 // loop_body
    %s14 = ssub.s32 %s9, 1
    %s15 = ssub.s32 %s9, 2
    %s22 = sadd.s32 1, %s17
    %p23 = scmp.ge.s32.totalorder %s22, 4
    %s24 = scalar_select %p23, 0, %s22
    %s25 = sadd.s32 1, %s16
    %s26 = scalar_select %p23, %s25, %s16
    %p27 = scmp.ge.s32.totalorder %s26, 2
    %s28 = scalar_select %p27, 0, %s26
    %s29 = ssub.s32 %s16, %s28
    %s30 = ssub.s32 %s17, %s24
    %s31 = sor.u32 %s29, %s30
    %p32 = scmp.eq.s32.totalorder %s31, 0
    %s34 = sadd.s32 %s33, 1
    %s35 = scalar_select %p32, %s33, %s34
    %p38 = pneg %p32
    %p39 = scmp.eq.s32.totalorder %s9, 7
    %p40 = por %p38, %p39
    %p41 = scmp.ne.s32.totalorder %s33, %s36
    %p42 = scmp.eq.s32.totalorder %s9, 0
    %p43 = por %p41, %p42
    %p44 = scmp.ne.s32.totalorder %s33, %s36
    %p45 = scmp.eq.s32.totalorder %s14, 7
    %p46 = por %p44, %p45
    %p47 = scmp.ne.s32.totalorder %s36, %s37
    %p48 = scmp.eq.s32.totalorder %s14, 0
    %p49 = por %p47, %p48
    %p50 = scmp.ne.s32.totalorder %s36, %s37
    %p51 = scmp.eq.s32.totalorder %s15, 7
    %p52 = por %p50, %p51
    %p54 = scmp.ne.s32.totalorder %s37, %s53
    %p55 = scmp.eq.s32.totalorder %s15, 0
    %p56 = por %p54, %p55
    %s58 = sadd.s32 %s57, 1
    %p61 = scmp.eq.s32.totalorder %s9, 7
    %p62 = scmp.ne.s32.totalorder %s57, %s59
    %p63 = scmp.eq.s32.totalorder %s9, 0
    %p64 = por %p62, %p63
    %p65 = scmp.ne.s32.totalorder %s57, %s59
    %p66 = scmp.eq.s32.totalorder %s14, 7
    %p67 = por %p65, %p66
    %p68 = scmp.ne.s32.totalorder %s59, %s60
    %p69 = scmp.eq.s32.totalorder %s14, 0
    %p70 = por %p68, %p69
    %p71 = scmp.ne.s32.totalorder %s59, %s60
    %p72 = scmp.eq.s32.totalorder %s15, 7
    %p73 = por %p71, %p72
    %p75 = scmp.ne.s32.totalorder %s60, %s74
    %p76 = scmp.eq.s32.totalorder %s15, 0
    %p77 = por %p75, %p76
    %s79 = sadd.s32 %s78, 1
    %p82 = scmp.eq.s32.totalorder %s9, 7
    %p83 = scmp.ne.s32.totalorder %s78, %s80
    %p84 = scmp.eq.s32.totalorder %s9, 0
    %p85 = por %p83, %p84
    %p86 = scmp.ne.s32.totalorder %s78, %s80
    %p87 = scmp.eq.s32.totalorder %s14, 7
    %p88 = por %p86, %p87
    %p89 = scmp.ne.s32.totalorder %s80, %s81
    %p90 = scmp.eq.s32.totalorder %s14, 0
    %p91 = por %p89, %p90
    %p92 = scmp.ne.s32.totalorder %s80, %s81
    %p93 = scmp.eq.s32.totalorder %s15, 7
    %p94 = por %p92, %p93
    %p96 = scmp.ne.s32.totalorder %s81, %s95
    %p97 = scmp.eq.s32.totalorder %s15, 0
    %p98 = por %p96, %p97
    %s99 = ssub.s32 %s16, %s28
    %s100 = ssub.s32 %s17, %s24
    %s101 = sor.u32 %s99, %s100
    %p102 = scmp.eq.s32.totalorder %s101, 0
    %s104 = sadd.s32 %s103, 1
    %s105 = scalar_select %p102, %s103, %s104
    %p108 = pneg %p102
    %p109 = scmp.eq.s32.totalorder %s9, 7
    %p110 = por %p108, %p109
    %p111 = scmp.ne.s32.totalorder %s103, %s106
    %p112 = scmp.eq.s32.totalorder %s9, 0
    %p113 = por %p111, %p112
    %p114 = scmp.ne.s32.totalorder %s103, %s106
    %p115 = scmp.eq.s32.totalorder %s14, 7
    %p116 = por %p114, %p115
    %p117 = scmp.ne.s32.totalorder %s106, %s107
    %p118 = scmp.eq.s32.totalorder %s14, 0
    %p119 = por %p117, %p118
    %p120 = scmp.ne.s32.totalorder %s106, %s107
    %p121 = scmp.eq.s32.totalorder %s15, 7
    %p122 = por %p120, %p121
    %p124 = scmp.ne.s32.totalorder %s107, %s123
    %p125 = scmp.eq.s32.totalorder %s15, 0
    %p126 = por %p124, %p125
    %p127 = scmp.le.s32.totalorder 1, %s9
    %p128 = scmp.lt.s32.totalorder %s9, 9
    %p129 = pnand %p127, %p128
    %p130 = pneg %p129
    // Predicated region
    $region9: #{decoder_block.7} parent=5 // pred_check
      _
    $region10: #{decoder_block.7} parent=5 // pred_check_branch
      %132 = sbr.rel (%p129) target = $region12
    $region11: #{decoder_block.7} parent=5 // pred_region
      %s133 = ssub.s32 %s9, 1
      // Predicated region
      $region13: #{decoder_block.7} parent=11 // pred_check
        %p134 = pneg %p70
      $region14: #{decoder_block.7} parent=11 // pred_check_branch
        %136 = sbr.rel (%p134) target = $region16
      $region15: #{decoder_block.7} parent=11 // pred_region
        _
      $region16: #{decoder_block.7} parent=11 // pred_fallthru
        _
      // Predicated region
      $region17: #{decoder_block.7} parent=11 // pred_check
        %p137 = pneg %p91
      $region18: #{decoder_block.7} parent=11 // pred_check_branch
        %139 = sbr.rel (%p137) target = $region20
      $region19: #{decoder_block.7} parent=11 // pred_region
        _
      $region20: #{decoder_block.7} parent=11 // pred_fallthru
        _
    $region12: #{decoder_block.7} parent=5 // pred_fallthru
      _
    %p140 = scmp.lt.s32.totalorder %s9, 8
    // Predicated region
    $region21: #{decoder_block.7} parent=5 // pred_check
      %p141 = pneg %p140
    $region22: #{decoder_block.7} parent=5 // pred_check_branch
      %143 = sbr.rel (%p141) target = $region24
    $region23: #{decoder_block.7} parent=5 // pred_region
      // Predicated region
      $region25: #{decoder_block.7} parent=23 // pred_check
        %p144 = pneg %p43
      $region26: #{decoder_block.7} parent=23 // pred_check_branch
        %146 = sbr.rel (%p144) target = $region28
      $region27: #{decoder_block.7} parent=23 // pred_region
        %s147 = smul.u32 2, %s17
        %p148 = scmp.lt.s32.totalorder %s16, 1
        %s149 = scalar_select %p148, %s16, 1
        %p150 = scmp.lt.s32.totalorder %s147, 7
        %s151 = scalar_select %p150, %s147, 7
        %s152 = smul.addr %s149, 8
        %s153 = sadd.s32 %s151, %s152
        %s154 = smul.addr %s153, 8
        %s155 = scalar_lea.vmem %s0, %s154
        %s156 = smul.u32 2, %s17
      $region28: #{decoder_block.7} parent=23 // pred_fallthru
        _
    $region24: #{decoder_block.7} parent=5 // pred_fallthru
      _
    %p157 = scmp.le.s32.totalorder 1, %s9
    %p158 = scmp.lt.s32.totalorder %s9, 9
    %p159 = pnand %p157, %p158
    %p160 = pneg %p159
    // Predicated region
    $region29: #{decoder_block.7} parent=5 // pred_check
      _
    $region30: #{decoder_block.7} parent=5 // pred_check_branch
      %162 = sbr.rel (%p159) target = $region32
    $region31: #{decoder_block.7} parent=5 // pred_region
      %s163 = ssub.s32 %s9, 1
      %s164 = smul.u32 2, %s19
      %p165 = scmp.lt.s32.totalorder %s18, 1
      %s166 = scalar_select %p165, %s18, 1
      %p167 = scmp.lt.s32.totalorder %s164, 7
      %s168 = scalar_select %p167, %s164, 7
      %s169 = smul.addr %s166, 8
      %s170 = sadd.s32 %s168, %s169
      %s171 = smul.addr %s170, 8
      %s172 = scalar_lea.vmem %s0, %s171
      %p173 = pneg %p49
      %p174 = pneg %p46
      %p175 = pneg %p70
      %p176 = pneg %p67
      %p177 = pneg %p91
      %p178 = pneg %p88
      %p179 = pneg %p119
      %p180 = pneg %p116
      %s181 = smul.u32 2, %s19
      %p182 = scmp.lt.s32.totalorder %s18, 1
      %s183 = scalar_select %p182, %s18, 1
      %p184 = scmp.lt.s32.totalorder %s181, 7
      %s185 = scalar_select %p184, %s181, 7
      %s186 = smul.addr %s183, 8
      %s187 = sadd.s32 %s185, %s186
      %s188 = smul.addr %s187, 8
      %s189 = scalar_lea.vmem %s3, %s188
      %s190 = smul.u32 2, %s19
      %p191 = scmp.lt.s32.totalorder %s18, 1
      %s192 = scalar_select %p191, %s18, 1
      %p193 = scmp.lt.s32.totalorder %s190, 7
      %s194 = scalar_select %p193, %s190, 7
      %s195 = smul.addr %s192, 8
      %s196 = sadd.s32 %s194, %s195
      %s197 = smul.addr %s196, 8
      %s198 = scalar_lea.vmem %s0, %s197
      %s199 = smul.u32 2, %s19
      %s200 = smul.u32 2, %s19
      %p201 = scmp.lt.s32.totalorder %s18, 1
      %s202 = scalar_select %p201, %s18, 1
      %p203 = scmp.lt.s32.totalorder %s200, 7
      %s204 = scalar_select %p203, %s200, 7
      %s205 = smul.addr %s202, 8
      %s206 = sadd.s32 %s204, %s205
      %s207 = smul.addr %s206, 8
      %s208 = scalar_lea.vmem %s3, %s207
      %s209 = smul.u32 2, %s19
      %v210 = vld [vmem:[%s198] sm:$0xff]
      %v211 = vld [vmem:[%s198 + $0x8] sm:$0xff]
      %v212 = vld [vmem:[%s1] sm:$0xff]
      %214 = vset.pattern.permute.xlu0 0
      %215 = vperm.xlu0 %214, %v212
      %v216 = vpop.permute.xlu0 %215
      %v218 = vmul.f32 %v210, %v216
      %v219 = vmul.f32 %v211, %v216
      %v220 = vld [vmem:[%s2] sm:$0xff]
      %222 = vset.pattern.permute.xlu0 0
      %223 = vperm.xlu0 %222, %v220
      %v224 = vpop.permute.xlu0 %223
      %v226 = vadd.f32 %v218, %v224
      %v227 = vadd.f32 %v219, %v224
      %v228 = vmax.f32 %v226, 0.0
      %v229 = vmax.f32 %v227, 0.0
      %230 = vst [vmem:[%s208] sm:$0xff] %v228
      %231 = vst [vmem:[%s208 + $0x8] sm:$0xff] %v229
      %s232 = smul.u32 2, %s19
      %p233 = scmp.lt.s32.totalorder %s18, 1
      %s234 = scalar_select %p233, %s18, 1
      %p235 = scmp.lt.s32.totalorder %s232, 7
      %s236 = scalar_select %p235, %s232, 7
      %s237 = smul.addr %s234, 8
      %s238 = sadd.s32 %s236, %s237
      %s239 = smul.addr %s238, 8
      %s240 = scalar_lea.vmem %s3, %s239
      // Predicated region
      $region33: #{decoder_block.7} parent=31 // pred_check
        %p241 = pneg %p116
      $region34: #{decoder_block.7} parent=31 // pred_check_branch
        %243 = sbr.rel (%p241) target = $region36
      $region35: #{decoder_block.7} parent=31 // pred_region
        %s244 = smul.u32 2, %s19
      $region36: #{decoder_block.7} parent=31 // pred_fallthru
        _
    $region32: #{decoder_block.7} parent=5 // pred_fallthru
      _
    %p245 = scmp.le.s32.totalorder 2, %s9
    // Predicated region
    $region37: #{decoder_block.7} parent=5 // pred_check
      %p246 = pneg %p245
    $region38: #{decoder_block.7} parent=5 // pred_check_branch
      %248 = sbr.rel (%p246) target = $region40
    $region39: #{decoder_block.7} parent=5 // pred_region
      %s249 = ssub.s32 %s9, 2
      // Predicated region
      $region41: #{decoder_block.7} parent=39 // pred_check
        %p250 = pneg %p122
      $region42: #{decoder_block.7} parent=39 // pred_check_branch
        %252 = sbr.rel (%p250) target = $region44
      $region43: #{decoder_block.7} parent=39 // pred_region
        %s253 = smul.u32 2, %s21
        %p254 = scmp.lt.s32.totalorder %s20, 1
        %s255 = scalar_select %p254, %s20, 1
        %p256 = scmp.lt.s32.totalorder %s253, 7
        %s257 = scalar_select %p256, %s253, 7
        %s258 = smul.addr %s255, 8
        %s259 = sadd.s32 %s257, %s258
        %s260 = smul.addr %s259, 8
        %s261 = scalar_lea.vmem %s3, %s260
      $region44: #{decoder_block.7} parent=39 // pred_fallthru
        _
    $region40: #{decoder_block.7} parent=5 // pred_fallthru
      _
  $region6: #{decoder_block.7} parent=0 // loop_footer
    %s13 = sadd.s32 1, %s9
  $region7: #{decoder_block.7} parent=0 // loop_footer_branch
    %8 = sbr.rel target = $region3
  $region8: #{decoder_block.7} parent=0 // loop_exit
    _

// kernel: decoder_block.6
$region0: #{decoder_block.6}
  #allocation0 [shape = 'u32[]', space=smem, size = 0x4, offset = 0x4, fixed_abs, tag = 'smem constant byte address 0x4 - core index']
  #allocation1 [shape = 'u32[144,128]{1,0:T(1,128)}', space=vmem, size = 0x12000, scoped, tag = 'internal scratch']
  %s0 = inlined_call_operand.vmem [shape: f32[2,4,1024], index: 0, kind: input, shape index: {}]
  %s1 = inlined_call_operand.vmem [shape: f32[4,1], index: 1, kind: input, shape index: {}]
  %s2 = inlined_call_operand.vmem [shape: f32[4,1], index: 2, kind: input, shape index: {}]
  %s3 = inlined_call_operand.vmem [shape: f32[8,4], index: 3, kind: input, shape index: {}]
  %s4 = inlined_call_operand.vmem [shape: f32[2,8,1024], index: 4, kind: output, shape index: {0}]
  %s5 = inlined_call_operand.vmem [shape: f32[2,4,8,1], index: 5, kind: output, shape index: {1}]
  %s6 = inlined_call_operand.vmem [shape: f32[2,4,8,1], index: 6, kind: output, shape index: {2}]
  %7 = xla_tuple %s4, %s5, %s6
  %s8 = sld [smem:[#allocation0]]
  $region65: #{decoder_block.6} parent=0
    _
  %s10 = ssub.s32 1, %s8
  %s11 = scalar_select 0, %s10, %s8
  loop: start=0, step=1, limit=10
  $region2: #{decoder_block.6} parent=0 // loop_pre_header
    _
  $region3: #{decoder_block.6} parent=0 // loop_header
    %s13 = sphi 0, %s17
    %p14 = scmp.ge.s32.totalorder %s13, 10
    %s20 = sphi 0, %s32
    %s21 = sphi 0, %s28
    %s22 = sphi 0, %s20
    %s23 = sphi 0, %s21
    %s24 = sphi 0, %s22
    %s25 = sphi 0, %s23
    %s37 = sphi 0, %s39
    %s40 = sphi 0, %s37
    %s41 = sphi 0, %s40
    %s57 = sphi 0, %s41
    %s61 = sphi 0, %s61
    %s63 = sphi 0, %s61
    %s64 = sphi 0, %s63
    %s78 = sphi 0, %s64
    %s82 = sphi 0, %s82
    %s84 = sphi 0, %s82
    %s85 = sphi 0, %s84
    %s99 = sphi 0, %s85
    %s103 = sphi 0, %s103
    %s105 = sphi 0, %s103
    %s106 = sphi 0, %s105
    %s120 = sphi 0, %s106
    %s128 = sphi 0, %s130
    %s131 = sphi 0, %s128
    %s132 = sphi 0, %s131
    %s148 = sphi 0, %s132
    %s156 = sphi 0, %s158
    %s159 = sphi 0, %s156
    %s160 = sphi 0, %s159
    %s176 = sphi 0, %s160
    %s184 = sphi 0, %s186
    %s187 = sphi 0, %s184
    %s188 = sphi 0, %s187
    %s204 = sphi 0, %s188
  $region4: #{decoder_block.6} parent=0 // loop_header_branch
    %16 = sbr.rel (%p14) target = $region8
  $region5: #{decoder_block.6} parent=0 // loop_body
    %s18 = ssub.s32 %s13, 1
    %s19 = ssub.s32 %s13, 2
    %s26 = sadd.s32 1, %s21
    %p27 = scmp.ge.s32.totalorder %s26, 4
    %s28 = scalar_select %p27, 0, %s26
    %s29 = sadd.s32 1, %s20
    %s30 = scalar_select %p27, %s29, %s20
    %p31 = scmp.ge.s32.totalorder %s30, 2
    %s32 = scalar_select %p31, 0, %s30
    %s33 = ssub.s32 %s20, %s32
    %s34 = ssub.s32 %s21, %s28
    %s35 = sor.u32 %s33, %s34
    %p36 = scmp.eq.s32.totalorder %s35, 0
    %s38 = sadd.s32 %s37, 1
    %s39 = scalar_select %p36, %s37, %s38
    %p42 = pneg %p36
    %p43 = scmp.eq.s32.totalorder %s13, 7
    %p44 = por %p42, %p43
    %p45 = scmp.ne.s32.totalorder %s37, %s40
    %p46 = scmp.eq.s32.totalorder %s13, 0
    %p47 = por %p45, %p46
    %p48 = scmp.ne.s32.totalorder %s37, %s40
    %p49 = scmp.eq.s32.totalorder %s18, 7
    %p50 = por %p48, %p49
    %p51 = scmp.ne.s32.totalorder %s40, %s41
    %p52 = scmp.eq.s32.totalorder %s18, 0
    %p53 = por %p51, %p52
    %p54 = scmp.ne.s32.totalorder %s40, %s41
    %p55 = scmp.eq.s32.totalorder %s19, 7
    %p56 = por %p54, %p55
    %p58 = scmp.ne.s32.totalorder %s41, %s57
    %p59 = scmp.eq.s32.totalorder %s19, 0
    %p60 = por %p58, %p59
    %s62 = sadd.s32 %s61, 1
    %p65 = scmp.eq.s32.totalorder %s13, 7
    %p66 = scmp.ne.s32.totalorder %s61, %s63
    %p67 = scmp.eq.s32.totalorder %s13, 0
    %p68 = por %p66, %p67
    %p69 = scmp.ne.s32.totalorder %s61, %s63
    %p70 = scmp.eq.s32.totalorder %s18, 7
    %p71 = por %p69, %p70
    %p72 = scmp.ne.s32.totalorder %s63, %s64
    %p73 = scmp.eq.s32.totalorder %s18, 0
    %p74 = por %p72, %p73
    %p75 = scmp.ne.s32.totalorder %s63, %s64
    %p76 = scmp.eq.s32.totalorder %s19, 7
    %p77 = por %p75, %p76
    %p79 = scmp.ne.s32.totalorder %s64, %s78
    %p80 = scmp.eq.s32.totalorder %s19, 0
    %p81 = por %p79, %p80
    %s83 = sadd.s32 %s82, 1
    %p86 = scmp.eq.s32.totalorder %s13, 7
    %p87 = scmp.ne.s32.totalorder %s82, %s84
    %p88 = scmp.eq.s32.totalorder %s13, 0
    %p89 = por %p87, %p88
    %p90 = scmp.ne.s32.totalorder %s82, %s84
    %p91 = scmp.eq.s32.totalorder %s18, 7
    %p92 = por %p90, %p91
    %p93 = scmp.ne.s32.totalorder %s84, %s85
    %p94 = scmp.eq.s32.totalorder %s18, 0
    %p95 = por %p93, %p94
    %p96 = scmp.ne.s32.totalorder %s84, %s85
    %p97 = scmp.eq.s32.totalorder %s19, 7
    %p98 = por %p96, %p97
    %p100 = scmp.ne.s32.totalorder %s85, %s99
    %p101 = scmp.eq.s32.totalorder %s19, 0
    %p102 = por %p100, %p101
    %s104 = sadd.s32 %s103, 1
    %p107 = scmp.eq.s32.totalorder %s13, 7
    %p108 = scmp.ne.s32.totalorder %s103, %s105
    %p109 = scmp.eq.s32.totalorder %s13, 0
    %p110 = por %p108, %p109
    %p111 = scmp.ne.s32.totalorder %s103, %s105
    %p112 = scmp.eq.s32.totalorder %s18, 7
    %p113 = por %p111, %p112
    %p114 = scmp.ne.s32.totalorder %s105, %s106
    %p115 = scmp.eq.s32.totalorder %s18, 0
    %p116 = por %p114, %p115
    %p117 = scmp.ne.s32.totalorder %s105, %s106
    %p118 = scmp.eq.s32.totalorder %s19, 7
    %p119 = por %p117, %p118
    %p121 = scmp.ne.s32.totalorder %s106, %s120
    %p122 = scmp.eq.s32.totalorder %s19, 0
    %p123 = por %p121, %p122
    %s124 = ssub.s32 %s20, %s32
    %s125 = ssub.s32 %s21, %s28
    %s126 = sor.u32 %s124, %s125
    %p127 = scmp.eq.s32.totalorder %s126, 0
    %s129 = sadd.s32 %s128, 1
    %s130 = scalar_select %p127, %s128, %s129
    %p133 = pneg %p127
    %p134 = scmp.eq.s32.totalorder %s13, 7
    %p135 = por %p133, %p134
    %p136 = scmp.ne.s32.totalorder %s128, %s131
    %p137 = scmp.eq.s32.totalorder %s13, 0
    %p138 = por %p136, %p137
    %p139 = scmp.ne.s32.totalorder %s128, %s131
    %p140 = scmp.eq.s32.totalorder %s18, 7
    %p141 = por %p139, %p140
    %p142 = scmp.ne.s32.totalorder %s131, %s132
    %p143 = scmp.eq.s32.totalorder %s18, 0
    %p144 = por %p142, %p143
    %p145 = scmp.ne.s32.totalorder %s131, %s132
    %p146 = scmp.eq.s32.totalorder %s19, 7
    %p147 = por %p145, %p146
    %p149 = scmp.ne.s32.totalorder %s132, %s148
    %p150 = scmp.eq.s32.totalorder %s19, 0
    %p151 = por %p149, %p150
    %s152 = ssub.s32 %s20, %s32
    %s153 = ssub.s32 %s21, %s28
    %s154 = sor.u32 %s152, %s153
    %p155 = scmp.eq.s32.totalorder %s154, 0
    %s157 = sadd.s32 %s156, 1
    %s158 = scalar_select %p155, %s156, %s157
    %p161 = pneg %p155
    %p162 = scmp.eq.s32.totalorder %s13, 7
    %p163 = por %p161, %p162
    %p164 = scmp.ne.s32.totalorder %s156, %s159
    %p165 = scmp.eq.s32.totalorder %s13, 0
    %p166 = por %p164, %p165
    %p167 = scmp.ne.s32.totalorder %s156, %s159
    %p168 = scmp.eq.s32.totalorder %s18, 7
    %p169 = por %p167, %p168
    %p170 = scmp.ne.s32.totalorder %s159, %s160
    %p171 = scmp.eq.s32.totalorder %s18, 0
    %p172 = por %p170, %p171
    %p173 = scmp.ne.s32.totalorder %s159, %s160
    %p174 = scmp.eq.s32.totalorder %s19, 7
    %p175 = por %p173, %p174
    %p177 = scmp.ne.s32.totalorder %s160, %s176
    %p178 = scmp.eq.s32.totalorder %s19, 0
    %p179 = por %p177, %p178
    %s180 = ssub.s32 %s20, %s32
    %s181 = ssub.s32 %s21, %s28
    %s182 = sor.u32 %s180, %s181
    %p183 = scmp.eq.s32.totalorder %s182, 0
    %s185 = sadd.s32 %s184, 1
    %s186 = scalar_select %p183, %s184, %s185
    %p189 = pneg %p183
    %p190 = scmp.eq.s32.totalorder %s13, 7
    %p191 = por %p189, %p190
    %p192 = scmp.ne.s32.totalorder %s184, %s187
    %p193 = scmp.eq.s32.totalorder %s13, 0
    %p194 = por %p192, %p193
    %p195 = scmp.ne.s32.totalorder %s184, %s187
    %p196 = scmp.eq.s32.totalorder %s18, 7
    %p197 = por %p195, %p196
    %p198 = scmp.ne.s32.totalorder %s187, %s188
    %p199 = scmp.eq.s32.totalorder %s18, 0
    %p200 = por %p198, %p199
    %p201 = scmp.ne.s32.totalorder %s187, %s188
    %p202 = scmp.eq.s32.totalorder %s19, 7
    %p203 = por %p201, %p202
    %p205 = scmp.ne.s32.totalorder %s188, %s204
    %p206 = scmp.eq.s32.totalorder %s19, 0
    %p207 = por %p205, %p206
    %p208 = scmp.le.s32.totalorder 1, %s13
    %p209 = scmp.lt.s32.totalorder %s13, 9
    %p210 = pnand %p208, %p209
    %p211 = pneg %p210
    // Predicated region
    $region9: #{decoder_block.6} parent=5 // pred_check
      _
    $region10: #{decoder_block.6} parent=5 // pred_check_branch
      %213 = sbr.rel (%p210) target = $region12
    $region11: #{decoder_block.6} parent=5 // pred_region
      %s214 = ssub.s32 %s13, 1
      // Predicated region
      $region13: #{decoder_block.6} parent=11 // pred_check
        %p215 = pneg %p74
      $region14: #{decoder_block.6} parent=11 // pred_check_branch
        %217 = sbr.rel (%p215) target = $region16
      $region15: #{decoder_block.6} parent=11 // pred_region
        _
      $region16: #{decoder_block.6} parent=11 // pred_fallthru
        _
      // Predicated region
      $region17: #{decoder_block.6} parent=11 // pred_check
        %p218 = pneg %p95
      $region18: #{decoder_block.6} parent=11 // pred_check_branch
        %220 = sbr.rel (%p218) target = $region20
      $region19: #{decoder_block.6} parent=11 // pred_region
        _
      $region20: #{decoder_block.6} parent=11 // pred_fallthru
        _
      // Predicated region
      $region21: #{decoder_block.6} parent=11 // pred_check
        %p221 = pneg %p116
      $region22: #{decoder_block.6} parent=11 // pred_check_branch
        %223 = sbr.rel (%p221) target = $region24
      $region23: #{decoder_block.6} parent=11 // pred_region
        _
      $region24: #{decoder_block.6} parent=11 // pred_fallthru
        _
    $region12: #{decoder_block.6} parent=5 // pred_fallthru
      _
    %p224 = scmp.lt.s32.totalorder %s13, 8
    // Predicated region
    $region25: #{decoder_block.6} parent=5 // pred_check
      %p225 = pneg %p224
    $region26: #{decoder_block.6} parent=5 // pred_check_branch
      %227 = sbr.rel (%p225) target = $region28
    $region27: #{decoder_block.6} parent=5 // pred_region
      // Predicated region
      $region29: #{decoder_block.6} parent=27 // pred_check
        %p228 = pneg %p47
      $region30: #{decoder_block.6} parent=27 // pred_check_branch
        %230 = sbr.rel (%p228) target = $region32
      $region31: #{decoder_block.6} parent=27 // pred_region
        %s231 = smul.u32 2, %s21
        %p232 = scmp.lt.s32.totalorder %s20, 1
        %s233 = scalar_select %p232, %s20, 1
        %p234 = scmp.lt.s32.totalorder %s231, 7
        %s235 = scalar_select %p234, %s231, 7
        %s236 = smul.addr %s233, 8
        %s237 = sadd.s32 %s235, %s236
        %s238 = smul.addr %s237, 4
        %s239 = scalar_lea.vmem %s0, %s238
        %s240 = smul.u32 2, %s21
      $region32: #{decoder_block.6} parent=27 // pred_fallthru
        _
    $region28: #{decoder_block.6} parent=5 // pred_fallthru
      _
    %p241 = scmp.le.s32.totalorder 1, %s13
    %p242 = scmp.lt.s32.totalorder %s13, 9
    %p243 = pnand %p241, %p242
    %p244 = pneg %p243
    // Predicated region
    $region33: #{decoder_block.6} parent=5 // pred_check
      _
    $region34: #{decoder_block.6} parent=5 // pred_check_branch
      %246 = sbr.rel (%p243) target = $region36
    $region35: #{decoder_block.6} parent=5 // pred_region
      %s247 = ssub.s32 %s13, 1
      %s248 = smul.u32 2, %s23
      %p249 = scmp.lt.s32.totalorder %s22, 1
      %s250 = scalar_select %p249, %s22, 1
      %p251 = scmp.lt.s32.totalorder %s248, 7
      %s252 = scalar_select %p251, %s248, 7
      %s253 = smul.addr %s250, 8
      %s254 = sadd.s32 %s252, %s253
      %s255 = smul.addr %s254, 4
      %s256 = scalar_lea.vmem %s0, %s255
      %p257 = pneg %p53
      %p258 = pneg %p50
      %p259 = pneg %p74
      %p260 = pneg %p71
      %p261 = pneg %p95
      %p262 = pneg %p92
      %p263 = pneg %p116
      %p264 = pneg %p113
      %p265 = pneg %p144
      %p266 = pneg %p141
      %s267 = smul.u32 2, %s23
      %p268 = scmp.lt.s32.totalorder %s22, 1
      %s269 = scalar_select %p268, %s22, 1
      %p270 = scmp.lt.s32.totalorder %s267, 7
      %s271 = scalar_select %p270, %s267, 7
      %s272 = smul.addr %s269, 8
      %s273 = sadd.s32 %s271, %s272
      %s274 = smul.addr %s273, 8
      %s275 = scalar_lea.vmem %s4, %s274
      %p276 = pneg %p172
      %p277 = pneg %p169
      %p278 = scmp.lt.s32.totalorder %s22, 1
      %s279 = scalar_select %p278, %s22, 1
      %p280 = scmp.lt.s32.totalorder %s23, 3
      %s281 = scalar_select %p280, %s23, 3
      %s282 = smul.addr %s279, 4
      %s283 = sadd.s32 %s281, %s282
      %s284 = smul.addr %s283, 8
      %s285 = scalar_lea.vmem %s5, %s284
      %p286 = pneg %p200
      %p287 = pneg %p197
      %p288 = scmp.lt.s32.totalorder %s22, 1
      %s289 = scalar_select %p288, %s22, 1
      %p290 = scmp.lt.s32.totalorder %s23, 3
      %s291 = scalar_select %p290, %s23, 3
      %s292 = smul.addr %s289, 4
      %s293 = sadd.s32 %s291, %s292
      %s294 = smul.addr %s293, 8
      %s295 = scalar_lea.vmem %s6, %s294
      %s296 = smul.u32 2, %s23
      %p297 = scmp.lt.s32.totalorder %s22, 1
      %s298 = scalar_select %p297, %s22, 1
      %p299 = scmp.lt.s32.totalorder %s296, 7
      %s300 = scalar_select %p299, %s296, 7
      %s301 = smul.addr %s298, 8
      %s302 = sadd.s32 %s300, %s301
      %s303 = smul.addr %s302, 4
      %s304 = scalar_lea.vmem %s0, %s303
      %s305 = smul.u32 2, %s23
      %s306 = smul.u32 2, %s23
      %p307 = scmp.lt.s32.totalorder %s22, 1
      %s308 = scalar_select %p307, %s22, 1
      %p309 = scmp.lt.s32.totalorder %s306, 7
      %s310 = scalar_select %p309, %s306, 7
      %s311 = smul.addr %s308, 8
      %s312 = sadd.s32 %s310, %s311
      %s313 = smul.addr %s312, 8
      %s314 = scalar_lea.vmem %s4, %s313
      %s315 = smul.u32 2, %s23
      %p316 = scmp.lt.s32.totalorder %s22, 1
      %s317 = scalar_select %p316, %s22, 1
      %p318 = scmp.lt.s32.totalorder %s23, 3
      %s319 = scalar_select %p318, %s23, 3
      %s320 = smul.addr %s317, 4
      %s321 = sadd.s32 %s319, %s320
      %s322 = smul.addr %s321, 8
      %s323 = scalar_lea.vmem %s5, %s322
      %p324 = scmp.lt.s32.totalorder %s22, 1
      %s325 = scalar_select %p324, %s22, 1
      %p326 = scmp.lt.s32.totalorder %s23, 3
      %s327 = scalar_select %p326, %s23, 3
      %s328 = smul.addr %s325, 4
      %s329 = sadd.s32 %s327, %s328
      %s330 = smul.addr %s329, 8
      %s331 = scalar_lea.vmem %s6, %s330
      %v332 = vld [vmem:[%s304] sm:$0xff]
      %v333 = vld [vmem:[%s1] sm:$0xf]
      %335 = vset.pattern.permute.xlu0 0
      %336 = vperm.xlu0 %335, %v333
      %v337 = vpop.permute.xlu0 %336
      %v339 = vunpack.c.l.s4 839922192
      %v340 = vunpack.c.0.s8 %v339
      %v341 = vlaneseq
      %v342 = vshrl.u32 %v341, 7
      %v343 = vsub.s32 %v340, %v342
      %v344 = vrot.slane %v337, %v343
      %v346 = vmul.f32 %v332, %v344
      %v347 = vld [vmem:[%s2] sm:$0xf]
      %349 = vset.pattern.permute.xlu0 0
      %350 = vperm.xlu0 %349, %v347
      %v351 = vpop.permute.xlu0 %350
      %v353 = vunpack.c.l.s4 839922192
      %v354 = vunpack.c.0.s8 %v353
      %v355 = vlaneseq
      %v356 = vshrl.u32 %v355, 7
      %v357 = vsub.s32 %v354, %v356
      %v358 = vrot.slane %v351, %v357
      %v360 = vadd.f32 %v346, %v358
      %v361 = vmax.f32 %v360, 0.0
      %v362 = vld [vmem:[%s3] sm:$0xff]
      %v364 = vcombine.high %v361, %v361
      %vm365 = vcmask 31744
      %v367 = vsel %vm365, %v362, 0
      %vm369 = vcmask 1043456
      %v370 = vsel %vm369, %v361, 0
      %v372 = vsel %vm369, %v364, 0
      %374 = vmatprep.subr.mxu0 %v372
      %375 = vmatpush1.msra.mxu0 %v370
      %376 = vmatprep.subr.mxu0 0.0
      %377 = vmatpush1.msra.mxu0 0.0
      %378 = vmatprep.subr.mxu0 0.0
      %379 = vmatpush1.msra.mxu0 0.0
      %380 = vmatprep.subr.mxu0 0.0
      %381 = vmatpush1.msra.mxu0 0.0
      %382 = vmatprep.subr.mxu0 0.0
      %383 = vmatpush1.msra.mxu0 0.0
      %384 = vmatprep.subr.mxu0 0.0
      %385 = vmatpush1.msra.mxu0 0.0
      %386 = vmatprep.subr.mxu0 0.0
      %387 = vmatpush1.msra.mxu0 0.0
      %388 = vmatprep.subr.mxu0 0.0
      %389 = vmatpush1.msra.mxu0 0.0
      %390 = vmatprep.subr.mxu0 0.0
      %391 = vmatpush1.msra.mxu0 0.0
      %392 = vmatprep.subr.mxu0 0.0
      %393 = vmatpush1.msra.mxu0 0.0
      %394 = vmatprep.subr.mxu0 0.0
      %395 = vmatpush1.msra.mxu0 0.0
      %396 = vmatprep.subr.mxu0 0.0
      %397 = vmatpush1.msra.mxu0 0.0
      %398 = vmatprep.subr.mxu0 0.0
      %399 = vmatpush1.msra.mxu0 0.0
      %400 = vmatprep.subr.mxu0 0.0
      %401 = vmatpush1.msra.mxu0 0.0
      %402 = vmatprep.subr.mxu0 0.0
      %403 = vmatpush1.msra.mxu0 0.0
      %404 = vmatprep.subr.mxu0 0.0
      %405 = vmatpush1.msra.mxu0 0.0
      %406 = vmatprep.subr.mxu0 0.0
      %407 = vmatpush1.msra.mxu0 0.0
      %408 = vmatprep.subr.mxu0 0.0
      %409 = vmatpush1.msra.mxu0 0.0
      %410 = vmatprep.subr.mxu0 0.0
      %411 = vmatpush1.msra.mxu0 0.0
      %412 = vmatprep.subr.mxu0 0.0
      %413 = vmatpush1.msra.mxu0 0.0
      %414 = vmatprep.subr.mxu0 0.0
      %415 = vmatpush1.msra.mxu0 0.0
      %416 = vmatprep.subr.mxu0 0.0
      %417 = vmatpush1.msra.mxu0 0.0
      %418 = vmatprep.subr.mxu0 0.0
      %419 = vmatpush1.msra.mxu0 0.0
      %420 = vmatprep.subr.mxu0 0.0
      %421 = vmatpush1.msra.mxu0 0.0
      %422 = vmatprep.subr.mxu0 0.0
      %423 = vmatpush1.msra.mxu0 0.0
      %424 = vmatprep.subr.mxu0 0.0
      %425 = vmatpush1.msra.mxu0 0.0
      %426 = vmatprep.subr.mxu0 0.0
      %427 = vmatpush1.msra.mxu0 0.0
      %428 = vmatprep.subr.mxu0 0.0
      %429 = vmatpush1.msra.mxu0 0.0
      %430 = vmatprep.subr.mxu0 0.0
      %431 = vmatpush1.msra.mxu0 0.0
      %432 = vmatprep.subr.mxu0 0.0
      %433 = vmatpush1.msra.mxu0 0.0
      %434 = vmatprep.subr.mxu0 0.0
      %435 = vmatpush1.msra.mxu0 0.0
      %436 = vmatprep.subr.mxu0 0.0
      %437 = vmatpush1.msra.mxu0 0.0
      %438 = vmatprep.mubr.f32.mxu0 0.0
      %439 = vmatmul.mubr.f32.gmra.mrb[0].mxu0 %v367
      %v440 = vpop.f32.mrb[0].mxu0
      %v441 = vadd.f32 0.0, %v440
      %v442 = vpop.f32.mrb[0].mxu0
      %v443 = vadd.f32 0.0, %v442
      %444 = vdwg.mxu0
      %445 = vst [vmem:[%s314] sm:$0xff] %v441
      %446 = vst [vmem:[%s314 + $0x8] sm:$0xff] %v443
      %v447 = vadd.f32 %v441, %v443
      %448 = vadd.xlane.f32.xlu0 %v447
      %v449 = vpop.xlane.xlu0 %448
      %v450 = vmul.f32 %v449, 0.00390625
      %v451 = vsub.f32 %v441, %v450
      %v452 = vsub.f32 %v443, %v450
      %v453 = vmul.f32 %v451, %v451
      %v454 = vmul.f32 %v452, %v452
      %v455 = vadd.f32 %v453, %v454
      %456 = vadd.xlane.f32.xlu0 %v455
      %v457 = vpop.xlane.xlu0 %456
      %vm458 = vcmask 7168
      %459 = vst.msk [vmem:[%s323] sm:$0xff] %vm458, %v450
      %460 = vst.msk [vmem:[%s331] sm:$0xff] %vm458, %v457
      %s461 = smul.u32 2, %s23
      %p462 = scmp.lt.s32.totalorder %s22, 1
      %s463 = scalar_select %p462, %s22, 1
      %p464 = scmp.lt.s32.totalorder %s461, 7
      %s465 = scalar_select %p464, %s461, 7
      %s466 = smul.addr %s463, 8
      %s467 = sadd.s32 %s465, %s466
      %s468 = smul.addr %s467, 8
      %s469 = scalar_lea.vmem %s4, %s468
      %p470 = scmp.lt.s32.totalorder %s22, 1
      %s471 = scalar_select %p470, %s22, 1
      %p472 = scmp.lt.s32.totalorder %s23, 3
      %s473 = scalar_select %p472, %s23, 3
      %s474 = smul.addr %s471, 4
      %s475 = sadd.s32 %s473, %s474
      %s476 = smul.addr %s475, 8
      %s477 = scalar_lea.vmem %s5, %s476
      %p478 = scmp.lt.s32.totalorder %s22, 1
      %s479 = scalar_select %p478, %s22, 1
      %p480 = scmp.lt.s32.totalorder %s23, 3
      %s481 = scalar_select %p480, %s23, 3
      %s482 = smul.addr %s479, 4
      %s483 = sadd.s32 %s481, %s482
      %s484 = smul.addr %s483, 8
      %s485 = scalar_lea.vmem %s6, %s484
      // Predicated region
      $region37: #{decoder_block.6} parent=35 // pred_check
        %p486 = pneg %p141
      $region38: #{decoder_block.6} parent=35 // pred_check_branch
        %488 = sbr.rel (%p486) target = $region40
      $region39: #{decoder_block.6} parent=35 // pred_region
        %s489 = smul.u32 2, %s23
      $region40: #{decoder_block.6} parent=35 // pred_fallthru
        _
      // Predicated region
      $region41: #{decoder_block.6} parent=35 // pred_check
        %p490 = pneg %p169
      $region42: #{decoder_block.6} parent=35 // pred_check_branch
        %492 = sbr.rel (%p490) target = $region44
      $region43: #{decoder_block.6} parent=35 // pred_region
        _
      $region44: #{decoder_block.6} parent=35 // pred_fallthru
        _
      // Predicated region
      $region45: #{decoder_block.6} parent=35 // pred_check
        %p493 = pneg %p197
      $region46: #{decoder_block.6} parent=35 // pred_check_branch
        %495 = sbr.rel (%p493) target = $region48
      $region47: #{decoder_block.6} parent=35 // pred_region
        _
      $region48: #{decoder_block.6} parent=35 // pred_fallthru
        _
    $region36: #{decoder_block.6} parent=5 // pred_fallthru
      _
    %p496 = scmp.le.s32.totalorder 2, %s13
    // Predicated region
    $region49: #{decoder_block.6} parent=5 // pred_check
      %p497 = pneg %p496
    $region50: #{decoder_block.6} parent=5 // pred_check_branch
      %499 = sbr.rel (%p497) target = $region52
    $region51: #{decoder_block.6} parent=5 // pred_region
      %s500 = ssub.s32 %s13, 2
      // Predicated region
      $region53: #{decoder_block.6} parent=51 // pred_check
        %p501 = pneg %p147
      $region54: #{decoder_block.6} parent=51 // pred_check_branch
        %503 = sbr.rel (%p501) target = $region56
      $region55: #{decoder_block.6} parent=51 // pred_region
        %s504 = smul.u32 2, %s25
        %p505 = scmp.lt.s32.totalorder %s24, 1
        %s506 = scalar_select %p505, %s24, 1
        %p507 = scmp.lt.s32.totalorder %s504, 7
        %s508 = scalar_select %p507, %s504, 7
        %s509 = smul.addr %s506, 8
        %s510 = sadd.s32 %s508, %s509
        %s511 = smul.addr %s510, 8
        %s512 = scalar_lea.vmem %s4, %s511
      $region56: #{decoder_block.6} parent=51 // pred_fallthru
        _
      // Predicated region
      $region57: #{decoder_block.6} parent=51 // pred_check
        %p513 = pneg %p175
      $region58: #{decoder_block.6} parent=51 // pred_check_branch
        %515 = sbr.rel (%p513) target = $region60
      $region59: #{decoder_block.6} parent=51 // pred_region
        %p516 = scmp.lt.s32.totalorder %s24, 1
        %s517 = scalar_select %p516, %s24, 1
        %p518 = scmp.lt.s32.totalorder %s25, 3
        %s519 = scalar_select %p518, %s25, 3
        %s520 = smul.addr %s517, 4
        %s521 = sadd.s32 %s519, %s520
        %s522 = smul.addr %s521, 8
        %s523 = scalar_lea.vmem %s5, %s522
      $region60: #{decoder_block.6} parent=51 // pred_fallthru
        _
      // Predicated region
      $region61: #{decoder_block.6} parent=51 // pred_check
        %p524 = pneg %p203
      $region62: #{decoder_block.6} parent=51 // pred_check_branch
        %526 = sbr.rel (%p524) target = $region64
      $region63: #{decoder_block.6} parent=51 // pred_region
        %p527 = scmp.lt.s32.totalorder %s24, 1
        %s528 = scalar_select %p527, %s24, 1
        %p529 = scmp.lt.s32.totalorder %s25, 3
        %s530 = scalar_select %p529, %s25, 3
        %s531 = smul.addr %s528, 4
        %s532 = sadd.s32 %s530, %s531
        %s533 = smul.addr %s532, 8
        %s534 = scalar_lea.vmem %s6, %s533
      $region64: #{decoder_block.6} parent=51 // pred_fallthru
        _
    $region52: #{decoder_block.6} parent=5 // pred_fallthru
      _
  $region6: #{decoder_block.6} parent=0 // loop_footer
    %s17 = sadd.s32 1, %s13
  $region7: #{decoder_block.6} parent=0 // loop_footer_branch
    %12 = sbr.rel target = $region3
  $region8: #{decoder_block.6} parent=0 // loop_exit
    _

// kernel: decoder_block.5
$region0: #{decoder_block.5}
  #allocation0 [shape = 'u32[]', space=smem, size = 0x4, offset = 0x4, fixed_abs, tag = 'smem constant byte address 0x4 - core index']
  #allocation1 [shape = 'u32[144,128]{1,0:T(1,128)}', space=vmem, size = 0x12000, scoped, tag = 'internal scratch']
  %s0 = inlined_call_operand.vmem [shape: f32[2,4,17,17], index: 0, kind: input, shape index: {}]
  %s1 = inlined_call_operand.vmem [shape: f32[4,1,1], index: 1, kind: input, shape index: {}]
  %s2 = inlined_call_operand.vmem [shape: f32[4,1,1], index: 2, kind: input, shape index: {}]
  %s3 = inlined_call_operand.vmem [shape: f32[16,16], index: 3, kind: input, shape index: {}]
  %s4 = inlined_call_operand.vmem [shape: f32[2,16,256], index: 4, kind: output, shape index: {0}]
  %s5 = inlined_call_operand.vmem [shape: f32[2,1,16,1], index: 5, kind: output, shape index: {1}]
  %s6 = inlined_call_operand.vmem [shape: f32[2,1,16,1], index: 6, kind: output, shape index: {2}]
  %7 = xla_tuple %s4, %s5, %s6
  %s8 = sld [smem:[#allocation0]]
  $region65: #{decoder_block.5} parent=0
    _
  %s10 = ssub.s32 1, %s8
  %s11 = scalar_select 0, %s10, %s8
  loop: start=0, step=1, limit=4
  $region2: #{decoder_block.5} parent=0 // loop_pre_header
    _
  $region3: #{decoder_block.5} parent=0 // loop_header
    %s13 = sphi 0, %s17
    %p14 = scmp.ge.s32.totalorder %s13, 4
    %s23 = sphi 0, %s25
    %s26 = sphi 0, %s23
    %s27 = sphi 0, %s26
    %s43 = sphi 0, %s27
    %s47 = sphi 0, %s47
    %s49 = sphi 0, %s47
    %s50 = sphi 0, %s49
    %s64 = sphi 0, %s50
    %s68 = sphi 0, %s68
    %s70 = sphi 0, %s68
    %s71 = sphi 0, %s70
    %s85 = sphi 0, %s71
    %s89 = sphi 0, %s89
    %s91 = sphi 0, %s89
    %s92 = sphi 0, %s91
    %s106 = sphi 0, %s92
    %s112 = sphi 0, %s114
    %s115 = sphi 0, %s112
    %s116 = sphi 0, %s115
    %s132 = sphi 0, %s116
    %s138 = sphi 0, %s140
    %s141 = sphi 0, %s138
    %s142 = sphi 0, %s141
    %s158 = sphi 0, %s142
    %s164 = sphi 0, %s166
    %s167 = sphi 0, %s164
    %s168 = sphi 0, %s167
    %s184 = sphi 0, %s168
  $region4: #{decoder_block.5} parent=0 // loop_header_branch
    %16 = sbr.rel (%p14) target = $region8
  $region5: #{decoder_block.5} parent=0 // loop_body
    %s18 = ssub.s32 %s13, 1
    %s19 = ssub.s32 %s13, 2
    %s20 = sadd.s32 %s13, 1
    %s21 = ssub.s32 %s13, %s20
    %p22 = scmp.eq.s32.totalorder %s21, 0
    %s24 = sadd.s32 %s23, 1
    %s25 = scalar_select %p22, %s23, %s24
    %p28 = pneg %p22
    %p29 = scmp.eq.s32.totalorder %s13, 1
    %p30 = por %p28, %p29
    %p31 = scmp.ne.s32.totalorder %s23, %s26
    %p32 = scmp.eq.s32.totalorder %s13, 0
    %p33 = por %p31, %p32
    %p34 = scmp.ne.s32.totalorder %s23, %s26
    %p35 = scmp.eq.s32.totalorder %s18, 1
    %p36 = por %p34, %p35
    %p37 = scmp.ne.s32.totalorder %s26, %s27
    %p38 = scmp.eq.s32.totalorder %s18, 0
    %p39 = por %p37, %p38
    %p40 = scmp.ne.s32.totalorder %s26, %s27
    %p41 = scmp.eq.s32.totalorder %s19, 1
    %p42 = por %p40, %p41
    %p44 = scmp.ne.s32.totalorder %s27, %s43
    %p45 = scmp.eq.s32.totalorder %s19, 0
    %p46 = por %p44, %p45
    %s48 = sadd.s32 %s47, 1
    %p51 = scmp.eq.s32.totalorder %s13, 1
    %p52 = scmp.ne.s32.totalorder %s47, %s49
    %p53 = scmp.eq.s32.totalorder %s13, 0
    %p54 = por %p52, %p53
    %p55 = scmp.ne.s32.totalorder %s47, %s49
    %p56 = scmp.eq.s32.totalorder %s18, 1
    %p57 = por %p55, %p56
    %p58 = scmp.ne.s32.totalorder %s49, %s50
    %p59 = scmp.eq.s32.totalorder %s18, 0
    %p60 = por %p58, %p59
    %p61 = scmp.ne.s32.totalorder %s49, %s50
    %p62 = scmp.eq.s32.totalorder %s19, 1
    %p63 = por %p61, %p62
    %p65 = scmp.ne.s32.totalorder %s50, %s64
    %p66 = scmp.eq.s32.totalorder %s19, 0
    %p67 = por %p65, %p66
    %s69 = sadd.s32 %s68, 1
    %p72 = scmp.eq.s32.totalorder %s13, 1
    %p73 = scmp.ne.s32.totalorder %s68, %s70
    %p74 = scmp.eq.s32.totalorder %s13, 0
    %p75 = por %p73, %p74
    %p76 = scmp.ne.s32.totalorder %s68, %s70
    %p77 = scmp.eq.s32.totalorder %s18, 1
    %p78 = por %p76, %p77
    %p79 = scmp.ne.s32.totalorder %s70, %s71
    %p80 = scmp.eq.s32.totalorder %s18, 0
    %p81 = por %p79, %p80
    %p82 = scmp.ne.s32.totalorder %s70, %s71
    %p83 = scmp.eq.s32.totalorder %s19, 1
    %p84 = por %p82, %p83
    %p86 = scmp.ne.s32.totalorder %s71, %s85
    %p87 = scmp.eq.s32.totalorder %s19, 0
    %p88 = por %p86, %p87
    %s90 = sadd.s32 %s89, 1
    %p93 = scmp.eq.s32.totalorder %s13, 1
    %p94 = scmp.ne.s32.totalorder %s89, %s91
    %p95 = scmp.eq.s32.totalorder %s13, 0
    %p96 = por %p94, %p95
    %p97 = scmp.ne.s32.totalorder %s89, %s91
    %p98 = scmp.eq.s32.totalorder %s18, 1
    %p99 = por %p97, %p98
    %p100 = scmp.ne.s32.totalorder %s91, %s92
    %p101 = scmp.eq.s32.totalorder %s18, 0
    %p102 = por %p100, %p101
    %p103 = scmp.ne.s32.totalorder %s91, %s92
    %p104 = scmp.eq.s32.totalorder %s19, 1
    %p105 = por %p103, %p104
    %p107 = scmp.ne.s32.totalorder %s92, %s106
    %p108 = scmp.eq.s32.totalorder %s19, 0
    %p109 = por %p107, %p108
    %s110 = ssub.s32 %s13, %s20
    %p111 = scmp.eq.s32.totalorder %s110, 0
    %s113 = sadd.s32 %s112, 1
    %s114 = scalar_select %p111, %s112, %s113
    %p117 = pneg %p111
    %p118 = scmp.eq.s32.totalorder %s13, 1
    %p119 = por %p117, %p118
    %p120 = scmp.ne.s32.totalorder %s112, %s115
    %p121 = scmp.eq.s32.totalorder %s13, 0
    %p122 = por %p120, %p121
    %p123 = scmp.ne.s32.totalorder %s112, %s115
    %p124 = scmp.eq.s32.totalorder %s18, 1
    %p125 = por %p123, %p124
    %p126 = scmp.ne.s32.totalorder %s115, %s116
    %p127 = scmp.eq.s32.totalorder %s18, 0
    %p128 = por %p126, %p127
    %p129 = scmp.ne.s32.totalorder %s115, %s116
    %p130 = scmp.eq.s32.totalorder %s19, 1
    %p131 = por %p129, %p130
    %p133 = scmp.ne.s32.totalorder %s116, %s132
    %p134 = scmp.eq.s32.totalorder %s19, 0
    %p135 = por %p133, %p134
    %s136 = ssub.s32 %s13, %s20
    %p137 = scmp.eq.s32.totalorder %s136, 0
    %s139 = sadd.s32 %s138, 1
    %s140 = scalar_select %p137, %s138, %s139
    %p143 = pneg %p137
    %p144 = scmp.eq.s32.totalorder %s13, 1
    %p145 = por %p143, %p144
    %p146 = scmp.ne.s32.totalorder %s138, %s141
    %p147 = scmp.eq.s32.totalorder %s13, 0
    %p148 = por %p146, %p147
    %p149 = scmp.ne.s32.totalorder %s138, %s141
    %p150 = scmp.eq.s32.totalorder %s18, 1
    %p151 = por %p149, %p150
    %p152 = scmp.ne.s32.totalorder %s141, %s142
    %p153 = scmp.eq.s32.totalorder %s18, 0
    %p154 = por %p152, %p153
    %p155 = scmp.ne.s32.totalorder %s141, %s142
    %p156 = scmp.eq.s32.totalorder %s19, 1
    %p157 = por %p155, %p156
    %p159 = scmp.ne.s32.totalorder %s142, %s158
    %p160 = scmp.eq.s32.totalorder %s19, 0
    %p161 = por %p159, %p160
    %s162 = ssub.s32 %s13, %s20
    %p163 = scmp.eq.s32.totalorder %s162, 0
    %s165 = sadd.s32 %s164, 1
    %s166 = scalar_select %p163, %s164, %s165
    %p169 = pneg %p163
    %p170 = scmp.eq.s32.totalorder %s13, 1
    %p171 = por %p169, %p170
    %p172 = scmp.ne.s32.totalorder %s164, %s167
    %p173 = scmp.eq.s32.totalorder %s13, 0
    %p174 = por %p172, %p173
    %p175 = scmp.ne.s32.totalorder %s164, %s167
    %p176 = scmp.eq.s32.totalorder %s18, 1
    %p177 = por %p175, %p176
    %p178 = scmp.ne.s32.totalorder %s167, %s168
    %p179 = scmp.eq.s32.totalorder %s18, 0
    %p180 = por %p178, %p179
    %p181 = scmp.ne.s32.totalorder %s167, %s168
    %p182 = scmp.eq.s32.totalorder %s19, 1
    %p183 = por %p181, %p182
    %p185 = scmp.ne.s32.totalorder %s168, %s184
    %p186 = scmp.eq.s32.totalorder %s19, 0
    %p187 = por %p185, %p186
    %p188 = scmp.le.s32.totalorder 1, %s13
    %p189 = scmp.lt.s32.totalorder %s13, 3
    %p190 = pnand %p188, %p189
    %p191 = pneg %p190
    // Predicated region
    $region9: #{decoder_block.5} parent=5 // pred_check
      _
    $region10: #{decoder_block.5} parent=5 // pred_check_branch
      %193 = sbr.rel (%p190) target = $region12
    $region11: #{decoder_block.5} parent=5 // pred_region
      %s194 = ssub.s32 %s13, 1
      // Predicated region
      $region13: #{decoder_block.5} parent=11 // pred_check
        %p195 = pneg %p60
      $region14: #{decoder_block.5} parent=11 // pred_check_branch
        %197 = sbr.rel (%p195) target = $region16
      $region15: #{decoder_block.5} parent=11 // pred_region
        _
      $region16: #{decoder_block.5} parent=11 // pred_fallthru
        _
      // Predicated region
      $region17: #{decoder_block.5} parent=11 // pred_check
        %p198 = pneg %p81
      $region18: #{decoder_block.5} parent=11 // pred_check_branch
        %200 = sbr.rel (%p198) target = $region20
      $region19: #{decoder_block.5} parent=11 // pred_region
        _
      $region20: #{decoder_block.5} parent=11 // pred_fallthru
        _
      // Predicated region
      $region21: #{decoder_block.5} parent=11 // pred_check
        %p201 = pneg %p102
      $region22: #{decoder_block.5} parent=11 // pred_check_branch
        %203 = sbr.rel (%p201) target = $region24
      $region23: #{decoder_block.5} parent=11 // pred_region
        _
      $region24: #{decoder_block.5} parent=11 // pred_fallthru
        _
    $region12: #{decoder_block.5} parent=5 // pred_fallthru
      _
    %p204 = scmp.lt.s32.totalorder %s13, 2
    // Predicated region
    $region25: #{decoder_block.5} parent=5 // pred_check
      %p205 = pneg %p204
    $region26: #{decoder_block.5} parent=5 // pred_check_branch
      %207 = sbr.rel (%p205) target = $region28
    $region27: #{decoder_block.5} parent=5 // pred_region
      // Predicated region
      $region29: #{decoder_block.5} parent=27 // pred_check
        %p208 = pneg %p33
      $region30: #{decoder_block.5} parent=27 // pred_check_branch
        %210 = sbr.rel (%p208) target = $region32
      $region31: #{decoder_block.5} parent=27 // pred_region
        %p211 = scmp.lt.s32.totalorder %s13, 1
        %s212 = scalar_select %p211, %s13, 1
        %s213 = smul.addr %s212, 12
        %s214 = smul.addr %s213, 8
        %s215 = scalar_lea.vmem %s0, %s214
      $region32: #{decoder_block.5} parent=27 // pred_fallthru
        _
    $region28: #{decoder_block.5} parent=5 // pred_fallthru
      _
    %p216 = scmp.le.s32.totalorder 1, %s13
    %p217 = scmp.lt.s32.totalorder %s13, 3
    %p218 = pnand %p216, %p217
    %p219 = pneg %p218
    // Predicated region
    $region33: #{decoder_block.5} parent=5 // pred_check
      _
    $region34: #{decoder_block.5} parent=5 // pred_check_branch
      %221 = sbr.rel (%p218) target = $region36
    $region35: #{decoder_block.5} parent=5 // pred_region
      %s222 = ssub.s32 %s13, 1
      %p223 = scmp.lt.s32.totalorder %s18, 1
      %s224 = scalar_select %p223, %s18, 1
      %s225 = smul.addr %s224, 12
      %s226 = smul.addr %s225, 8
      %s227 = scalar_lea.vmem %s0, %s226
      %p228 = pneg %p39
      %p229 = pneg %p36
      %p230 = pneg %p60
      %p231 = pneg %p57
      %p232 = pneg %p81
      %p233 = pneg %p78
      %p234 = pneg %p102
      %p235 = pneg %p99
      %p236 = pneg %p128
      %p237 = pneg %p125
      %p238 = scmp.lt.s32.totalorder %s18, 1
      %s239 = scalar_select %p238, %s18, 1
      %s240 = smul.addr %s239, 4
      %s241 = smul.addr %s240, 8
      %s242 = scalar_lea.vmem %s4, %s241
      %p243 = pneg %p154
      %p244 = pneg %p151
      %p245 = scmp.lt.s32.totalorder %s18, 1
      %s246 = scalar_select %p245, %s18, 1
      %s247 = smul.addr %s246, 2
      %s248 = smul.addr %s247, 8
      %s249 = scalar_lea.vmem %s5, %s248
      %p250 = pneg %p180
      %p251 = pneg %p177
      %p252 = scmp.lt.s32.totalorder %s18, 1
      %s253 = scalar_select %p252, %s18, 1
      %s254 = smul.addr %s253, 2
      %s255 = smul.addr %s254, 8
      %s256 = scalar_lea.vmem %s6, %s255
      %p257 = scmp.lt.s32.totalorder %s18, 1
      %s258 = scalar_select %p257, %s18, 1
      %s259 = smul.addr %s258, 12
      %s260 = smul.addr %s259, 8
      %s261 = scalar_lea.vmem %s0, %s260
      %p262 = scmp.lt.s32.totalorder %s18, 1
      %s263 = scalar_select %p262, %s18, 1
      %s264 = smul.addr %s263, 4
      %s265 = smul.addr %s264, 8
      %s266 = scalar_lea.vmem %s4, %s265
      %p267 = scmp.lt.s32.totalorder %s18, 1
      %s268 = scalar_select %p267, %s18, 1
      %s269 = smul.addr %s268, 2
      %s270 = smul.addr %s269, 8
      %s271 = scalar_lea.vmem %s5, %s270
      %p272 = scmp.lt.s32.totalorder %s18, 1
      %s273 = scalar_select %p272, %s18, 1
      %s274 = smul.addr %s273, 2
      %s275 = smul.addr %s274, 8
      %s276 = scalar_lea.vmem %s6, %s275
      %v277 = vld [vmem:[%s261] sm:$0xff]
      %v278 = vld [vmem:[%s261 + $0x8] sm:$0xff]
      %v279 = vld [vmem:[%s261 + $0x10] sm:$0x1]
      %v280 = vld [vmem:[%s261 + $0x18] sm:$0xff]
      %v281 = vld [vmem:[%s261 + $0x20] sm:$0xff]
      %v282 = vld [vmem:[%s261 + $0x28] sm:$0x1]
      %v283 = vld [vmem:[%s261 + $0x30] sm:$0xff]
      %v284 = vld [vmem:[%s261 + $0x38] sm:$0xff]
      %v285 = vld [vmem:[%s261 + $0x40] sm:$0x1]
      %v286 = vld [vmem:[%s261 + $0x48] sm:$0xff]
      %v287 = vld [vmem:[%s261 + $0x50] sm:$0xff]
      %v288 = vld [vmem:[%s261 + $0x58] sm:$0x1]
      %v289 = vld [vmem:[%s1] sm:$0x1]
      %v290 = vld [vmem:[%s1 + $0x1] sm:$0x1]
      %v291 = vld [vmem:[%s1 + $0x2] sm:$0x1]
      %v292 = vld [vmem:[%s1 + $0x3] sm:$0x1]
      %v297 = vlaneseq
      %v298 = vshrl.u32 %v297, 7
      %v299 = vsub.s32 0, %v298
      %v300 = vrot.slane %v289, %v299
      %v301 = vlaneseq
      %v302 = vshrl.u32 %v301, 7
      %v303 = vsub.s32 0, %v302
      %v304 = vrot.slane %v290, %v303
      %v305 = vlaneseq
      %v306 = vshrl.u32 %v305, 7
      %v307 = vsub.s32 0, %v306
      %v308 = vrot.slane %v291, %v307
      %v309 = vlaneseq
      %v310 = vshrl.u32 %v309, 7
      %v311 = vsub.s32 0, %v310
      %v312 = vrot.slane %v292, %v311
      %313 = vset.pattern.permute.xlu0 0
      %314 = vperm.xlu0 %313, %v300
      %v315 = vpop.permute.xlu0 %314
      %317 = vset.pattern.permute.xlu0 0
      %318 = vperm.xlu0 %317, %v304
      %v319 = vpop.permute.xlu0 %318
      %321 = vset.pattern.permute.xlu0 0
      %322 = vperm.xlu0 %321, %v308
      %v323 = vpop.permute.xlu0 %322
      %325 = vset.pattern.permute.xlu0 0
      %326 = vperm.xlu0 %325, %v312
      %v327 = vpop.permute.xlu0 %326
      %v329 = vmul.f32 %v277, %v315
      %v330 = vmul.f32 %v278, %v315
      %v331 = vmul.f32 %v279, %v315
      %v332 = vmul.f32 %v280, %v319
      %v333 = vmul.f32 %v281, %v319
      %v334 = vmul.f32 %v282, %v319
      %v335 = vmul.f32 %v283, %v323
      %v336 = vmul.f32 %v284, %v323
      %v337 = vmul.f32 %v285, %v323
      %v338 = vmul.f32 %v286, %v327
      %v339 = vmul.f32 %v287, %v327
      %v340 = vmul.f32 %v288, %v327
      %v341 = vld [vmem:[%s2] sm:$0x1]
      %v342 = vld [vmem:[%s2 + $0x1] sm:$0x1]
      %v343 = vld [vmem:[%s2 + $0x2] sm:$0x1]
      %v344 = vld [vmem:[%s2 + $0x3] sm:$0x1]
      %v349 = vlaneseq
      %v350 = vshrl.u32 %v349, 7
      %v351 = vsub.s32 0, %v350
      %v352 = vrot.slane %v341, %v351
      %v353 = vlaneseq
      %v354 = vshrl.u32 %v353, 7
      %v355 = vsub.s32 0, %v354
      %v356 = vrot.slane %v342, %v355
      %v357 = vlaneseq
      %v358 = vshrl.u32 %v357, 7
      %v359 = vsub.s32 0, %v358
      %v360 = vrot.slane %v343, %v359
      %v361 = vlaneseq
      %v362 = vshrl.u32 %v361, 7
      %v363 = vsub.s32 0, %v362
      %v364 = vrot.slane %v344, %v363
      %365 = vset.pattern.permute.xlu0 0
      %366 = vperm.xlu0 %365, %v352
      %v367 = vpop.permute.xlu0 %366
      %369 = vset.pattern.permute.xlu0 0
      %370 = vperm.xlu0 %369, %v356
      %v371 = vpop.permute.xlu0 %370
      %373 = vset.pattern.permute.xlu0 0
      %374 = vperm.xlu0 %373, %v360
      %v375 = vpop.permute.xlu0 %374
      %377 = vset.pattern.permute.xlu0 0
      %378 = vperm.xlu0 %377, %v364
      %v379 = vpop.permute.xlu0 %378
      %v381 = vadd.f32 %v329, %v367
      %v382 = vadd.f32 %v330, %v367
      %v383 = vadd.f32 %v331, %v367
      %v384 = vadd.f32 %v332, %v371
      %v385 = vadd.f32 %v333, %v371
      %v386 = vadd.f32 %v334, %v371
      %v387 = vadd.f32 %v335, %v375
      %v388 = vadd.f32 %v336, %v375
      %v389 = vadd.f32 %v337, %v375
      %v390 = vadd.f32 %v338, %v379
      %v391 = vadd.f32 %v339, %v379
      %v392 = vadd.f32 %v340, %v379
      %v393 = vmax.f32 %v381, 0.0
      %v394 = vmax.f32 %v382, 0.0
      %v395 = vmax.f32 %v383, 0.0
      %v396 = vmax.f32 %v384, 0.0
      %v397 = vmax.f32 %v385, 0.0
      %v398 = vmax.f32 %v386, 0.0
      %v399 = vmax.f32 %v387, 0.0
      %v400 = vmax.f32 %v388, 0.0
      %v401 = vmax.f32 %v389, 0.0
      %v402 = vmax.f32 %v390, 0.0
      %v403 = vmax.f32 %v391, 0.0
      %v404 = vmax.f32 %v392, 0.0
      %v405 = vlaneseq
      %v406 = vshrl.u32 %v405, 7
      %v407 = vadd.s32 %v406, 8
      %v408 = vadd.s32 %v406, 16
      %v409 = vlaneseq
      %v410 = vand.u32 %v409, 127
      %vm411 = vcmp.lt.s32.totalorder %v406, 16
      %vm412 = vcmp.lt.s32.totalorder %v407, 16
      %vm413 = vcmp.lt.s32.totalorder %v408, 16
      %vm414 = vcmp.lt.s32.totalorder %v410, 16
      %vm415 = vmand %vm411, %vm414
      %vm416 = vmand %vm412, %vm414
      %vm417 = vmand %vm413, %vm414
      %v418 = vsel %vm415, %v393, 0.0
      %v419 = vsel %vm416, %v394, 0.0
      %v420 = vsel %vm417, %v395, 0.0
      %v421 = vsel %vm415, %v396, 0.0
      %v422 = vsel %vm416, %v397, 0.0
      %v423 = vsel %vm417, %v398, 0.0
      %v424 = vsel %vm415, %v399, 0.0
      %v425 = vsel %vm416, %v400, 0.0
      %v426 = vsel %vm417, %v401, 0.0
      %v427 = vsel %vm415, %v402, 0.0
      %v428 = vsel %vm416, %v403, 0.0
      %v429 = vsel %vm417, %v404, 0.0
      %v430 = vcombine.low %v418, %v424
      %v431 = vcombine.high %v418, %v424
      %v433 = vunpack.c.l.s4 1983009808
      %v434 = vunpack.c.0.s8 %v433
      %v435 = vlaneseq
      %v436 = vshrl.u32 %v435, 7
      %v437 = vsub.s32 %v434, %v436
      %v438 = vrot.slane %v430, %v437
      %v440 = vunpack.c.l.s4 1983009808
      %v441 = vunpack.c.0.s8 %v440
      %v442 = vlaneseq
      %v443 = vshrl.u32 %v442, 7
      %v444 = vsub.s32 %v441, %v443
      %v445 = vrot.slane %v431, %v444
      %v446 = vcombine.low %v421, %v427
      %v447 = vcombine.high %v421, %v427
      %v449 = vunpack.c.l.s4 1983009808
      %v450 = vunpack.c.0.s8 %v449
      %v451 = vlaneseq
      %v452 = vshrl.u32 %v451, 7
      %v453 = vsub.s32 %v450, %v452
      %v454 = vrot.slane %v446, %v453
      %v456 = vunpack.c.l.s4 1983009808
      %v457 = vunpack.c.0.s8 %v456
      %v458 = vlaneseq
      %v459 = vshrl.u32 %v458, 7
      %v460 = vsub.s32 %v457, %v459
      %v461 = vrot.slane %v447, %v460
      %v462 = vcombine.low %v438, %v454
      %v463 = vcombine.high %v438, %v454
      %v465 = vunpack.c.l.s4 1934713408
      %v466 = vunpack.c.0.s8 %v465
      %v467 = vlaneseq
      %v468 = vshrl.u32 %v467, 7
      %v469 = vsub.s32 %v466, %v468
      %v470 = vrot.slane %v462, %v469
      %v472 = vunpack.c.l.s4 1934713408
      %v473 = vunpack.c.0.s8 %v472
      %v474 = vlaneseq
      %v475 = vshrl.u32 %v474, 7
      %v476 = vsub.s32 %v473, %v475
      %v477 = vrot.slane %v463, %v476
      %v478 = vcombine.low %v445, %v461
      %v479 = vcombine.high %v445, %v461
      %v481 = vunpack.c.l.s4 1934713408
      %v482 = vunpack.c.0.s8 %v481
      %v483 = vlaneseq
      %v484 = vshrl.u32 %v483, 7
      %v485 = vsub.s32 %v482, %v484
      %v486 = vrot.slane %v478, %v485
      %v488 = vunpack.c.l.s4 1934713408
      %v489 = vunpack.c.0.s8 %v488
      %v490 = vlaneseq
      %v491 = vshrl.u32 %v490, 7
      %v492 = vsub.s32 %v489, %v491
      %v493 = vrot.slane %v479, %v492
      %v494 = vcombine.high %v470, 0.0
      %v495 = vcombine.high %v477, 0.0
      %v496 = vcombine.high %v486, 0.0
      %v497 = vcombine.high %v493, 0.0
      %v498 = vcombine.low %v419, %v425
      %v499 = vcombine.high %v419, %v425
      %v501 = vunpack.c.l.s4 1983009808
      %v502 = vunpack.c.0.s8 %v501
      %v503 = vlaneseq
      %v504 = vshrl.u32 %v503, 7
      %v505 = vsub.s32 %v502, %v504
      %v506 = vrot.slane %v498, %v505
      %v508 = vunpack.c.l.s4 1983009808
      %v509 = vunpack.c.0.s8 %v508
      %v510 = vlaneseq
      %v511 = vshrl.u32 %v510, 7
      %v512 = vsub.s32 %v509, %v511
      %v513 = vrot.slane %v499, %v512
      %v514 = vcombine.low %v422, %v428
      %v515 = vcombine.high %v422, %v428
      %v517 = vunpack.c.l.s4 1983009808
      %v518 = vunpack.c.0.s8 %v517
      %v519 = vlaneseq
      %v520 = vshrl.u32 %v519, 7
      %v521 = vsub.s32 %v518, %v520
      %v522 = vrot.slane %v514, %v521
      %v524 = vunpack.c.l.s4 1983009808
      %v525 = vunpack.c.0.s8 %v524
      %v526 = vlaneseq
      %v527 = vshrl.u32 %v526, 7
      %v528 = vsub.s32 %v525, %v527
      %v529 = vrot.slane %v515, %v528
      %v530 = vcombine.low %v506, %v522
      %v531 = vcombine.high %v506, %v522
      %v533 = vunpack.c.l.s4 1934713408
      %v534 = vunpack.c.0.s8 %v533
      %v535 = vlaneseq
      %v536 = vshrl.u32 %v535, 7
      %v537 = vsub.s32 %v534, %v536
      %v538 = vrot.slane %v530, %v537
      %v540 = vunpack.c.l.s4 1934713408
      %v541 = vunpack.c.0.s8 %v540
      %v542 = vlaneseq
      %v543 = vshrl.u32 %v542, 7
      %v544 = vsub.s32 %v541, %v543
      %v545 = vrot.slane %v531, %v544
      %v546 = vcombine.low %v513, %v529
      %v547 = vcombine.high %v513, %v529
      %v549 = vunpack.c.l.s4 1934713408
      %v550 = vunpack.c.0.s8 %v549
      %v551 = vlaneseq
      %v552 = vshrl.u32 %v551, 7
      %v553 = vsub.s32 %v550, %v552
      %v554 = vrot.slane %v546, %v553
      %v556 = vunpack.c.l.s4 1934713408
      %v557 = vunpack.c.0.s8 %v556
      %v558 = vlaneseq
      %v559 = vshrl.u32 %v558, 7
      %v560 = vsub.s32 %v557, %v559
      %v561 = vrot.slane %v547, %v560
      %v562 = vcombine.high %v538, 0.0
      %v563 = vcombine.high %v545, 0.0
      %v564 = vcombine.high %v554, 0.0
      %v565 = vcombine.high %v561, 0.0
      %567 = vrot.lane.b32.xlu0 %v494, 16
      %v568 = vpop.permute.xlu0 %567
      %571 = vrot.lane.b32.xlu0 %v477, 32
      %v572 = vpop.permute.xlu0 %571
      %575 = vrot.lane.b32.xlu0 %v495, 48
      %v576 = vpop.permute.xlu0 %575
      %579 = vrot.lane.b32.xlu0 %v486, 64
      %v580 = vpop.permute.xlu0 %579
      %583 = vrot.lane.b32.xlu0 %v496, 80
      %v584 = vpop.permute.xlu0 %583
      %587 = vrot.lane.b32.xlu0 %v493, 96
      %v588 = vpop.permute.xlu0 %587
      %591 = vrot.lane.b32.xlu0 %v497, 112
      %v592 = vpop.permute.xlu0 %591
      %595 = vrot.lane.b32.xlu0 %v562, 16
      %v596 = vpop.permute.xlu0 %595
      %599 = vrot.lane.b32.xlu0 %v545, 32
      %v600 = vpop.permute.xlu0 %599
      %603 = vrot.lane.b32.xlu0 %v563, 48
      %v604 = vpop.permute.xlu0 %603
      %607 = vrot.lane.b32.xlu0 %v554, 64
      %v608 = vpop.permute.xlu0 %607
      %611 = vrot.lane.b32.xlu0 %v564, 80
      %v612 = vpop.permute.xlu0 %611
      %615 = vrot.lane.b32.xlu0 %v561, 96
      %v616 = vpop.permute.xlu0 %615
      %619 = vrot.lane.b32.xlu0 %v565, 112
      %v620 = vpop.permute.xlu0 %619
      %vm622 = vcmask 130048
      %v623 = vsel %vm622, %v470, %v568
      %vm624 = vcmask 261120
      %v625 = vsel %vm624, %v623, %v572
      %vm626 = vcmask 392192
      %v627 = vsel %vm626, %v625, %v576
      %vm628 = vcmask 523264
      %v629 = vsel %vm628, %v627, %v580
      %vm630 = vcmask 654336
      %v631 = vsel %vm630, %v629, %v584
      %vm632 = vcmask 785408
      %v633 = vsel %vm632, %v631, %v588
      %vm634 = vcmask 916480
      %v635 = vsel %vm634, %v633, %v592
      %v636 = vsel %vm622, %v538, %v596
      %v637 = vsel %vm624, %v636, %v600
      %v638 = vsel %vm626, %v637, %v604
      %v639 = vsel %vm628, %v638, %v608
      %v640 = vsel %vm630, %v639, %v612
      %v641 = vsel %vm632, %v640, %v616
      %v642 = vsel %vm634, %v641, %v620
      %651 = vrot.lane.b32.xlu0 %v418, 127
      %v652 = vpop.permute.xlu0 %651
      %653 = vrot.lane.b32.xlu0 %v419, 127
      %v654 = vpop.permute.xlu0 %653
      %655 = vrot.lane.b32.xlu0 %v421, 127
      %v656 = vpop.permute.xlu0 %655
      %657 = vrot.lane.b32.xlu0 %v422, 127
      %v658 = vpop.permute.xlu0 %657
      %659 = vrot.lane.b32.xlu0 %v424, 127
      %v660 = vpop.permute.xlu0 %659
      %661 = vrot.lane.b32.xlu0 %v425, 127
      %v662 = vpop.permute.xlu0 %661
      %663 = vrot.lane.b32.xlu0 %v427, 127
      %v664 = vpop.permute.xlu0 %663
      %665 = vrot.lane.b32.xlu0 %v428, 127
      %v666 = vpop.permute.xlu0 %665
      %v675 = vcombine.low %v652, %v660
      %v676 = vcombine.high %v652, %v660
      %v678 = vunpack.c.l.s4 1983009808
      %v679 = vunpack.c.0.s8 %v678
      %v680 = vlaneseq
      %v681 = vshrl.u32 %v680, 7
      %v682 = vsub.s32 %v679, %v681
      %v683 = vrot.slane %v675, %v682
      %v685 = vunpack.c.l.s4 1983009808
      %v686 = vunpack.c.0.s8 %v685
      %v687 = vlaneseq
      %v688 = vshrl.u32 %v687, 7
      %v689 = vsub.s32 %v686, %v688
      %v690 = vrot.slane %v676, %v689
      %v691 = vcombine.low %v656, %v664
      %v692 = vcombine.high %v656, %v664
      %v694 = vunpack.c.l.s4 1983009808
      %v695 = vunpack.c.0.s8 %v694
      %v696 = vlaneseq
      %v697 = vshrl.u32 %v696, 7
      %v698 = vsub.s32 %v695, %v697
      %v699 = vrot.slane %v691, %v698
      %v701 = vunpack.c.l.s4 1983009808
      %v702 = vunpack.c.0.s8 %v701
      %v703 = vlaneseq
      %v704 = vshrl.u32 %v703, 7
      %v705 = vsub.s32 %v702, %v704
      %v706 = vrot.slane %v692, %v705
      %v707 = vcombine.low %v683, %v699
      %v708 = vcombine.high %v683, %v699
      %v710 = vunpack.c.l.s4 1934713408
      %v711 = vunpack.c.0.s8 %v710
      %v712 = vlaneseq
      %v713 = vshrl.u32 %v712, 7
      %v714 = vsub.s32 %v711, %v713
      %v715 = vrot.slane %v707, %v714
      %v717 = vunpack.c.l.s4 1934713408
      %v718 = vunpack.c.0.s8 %v717
      %v719 = vlaneseq
      %v720 = vshrl.u32 %v719, 7
      %v721 = vsub.s32 %v718, %v720
      %v722 = vrot.slane %v708, %v721
      %v723 = vcombine.low %v690, %v706
      %v724 = vcombine.high %v690, %v706
      %v726 = vunpack.c.l.s4 1934713408
      %v727 = vunpack.c.0.s8 %v726
      %v728 = vlaneseq
      %v729 = vshrl.u32 %v728, 7
      %v730 = vsub.s32 %v727, %v729
      %v731 = vrot.slane %v723, %v730
      %v733 = vunpack.c.l.s4 1934713408
      %v734 = vunpack.c.0.s8 %v733
      %v735 = vlaneseq
      %v736 = vshrl.u32 %v735, 7
      %v737 = vsub.s32 %v734, %v736
      %v738 = vrot.slane %v724, %v737
      %v739 = vcombine.high %v715, 0.0
      %v740 = vcombine.high %v722, 0.0
      %v741 = vcombine.high %v731, 0.0
      %v742 = vcombine.high %v738, 0.0
      %v743 = vcombine.low %v654, %v662
      %v744 = vcombine.high %v654, %v662
      %v746 = vunpack.c.l.s4 1983009808
      %v747 = vunpack.c.0.s8 %v746
      %v748 = vlaneseq
      %v749 = vshrl.u32 %v748, 7
      %v750 = vsub.s32 %v747, %v749
      %v751 = vrot.slane %v743, %v750
      %v753 = vunpack.c.l.s4 1983009808
      %v754 = vunpack.c.0.s8 %v753
      %v755 = vlaneseq
      %v756 = vshrl.u32 %v755, 7
      %v757 = vsub.s32 %v754, %v756
      %v758 = vrot.slane %v744, %v757
      %v759 = vcombine.low %v658, %v666
      %v760 = vcombine.high %v658, %v666
      %v762 = vunpack.c.l.s4 1983009808
      %v763 = vunpack.c.0.s8 %v762
      %v764 = vlaneseq
      %v765 = vshrl.u32 %v764, 7
      %v766 = vsub.s32 %v763, %v765
      %v767 = vrot.slane %v759, %v766
      %v769 = vunpack.c.l.s4 1983009808
      %v770 = vunpack.c.0.s8 %v769
      %v771 = vlaneseq
      %v772 = vshrl.u32 %v771, 7
      %v773 = vsub.s32 %v770, %v772
      %v774 = vrot.slane %v760, %v773
      %v775 = vcombine.low %v751, %v767
      %v776 = vcombine.high %v751, %v767
      %v778 = vunpack.c.l.s4 1934713408
      %v779 = vunpack.c.0.s8 %v778
      %v780 = vlaneseq
      %v781 = vshrl.u32 %v780, 7
      %v782 = vsub.s32 %v779, %v781
      %v783 = vrot.slane %v775, %v782
      %v785 = vunpack.c.l.s4 1934713408
      %v786 = vunpack.c.0.s8 %v785
      %v787 = vlaneseq
      %v788 = vshrl.u32 %v787, 7
      %v789 = vsub.s32 %v786, %v788
      %v790 = vrot.slane %v776, %v789
      %v791 = vcombine.low %v758, %v774
      %v792 = vcombine.high %v758, %v774
      %v794 = vunpack.c.l.s4 1934713408
      %v795 = vunpack.c.0.s8 %v794
      %v796 = vlaneseq
      %v797 = vshrl.u32 %v796, 7
      %v798 = vsub.s32 %v795, %v797
      %v799 = vrot.slane %v791, %v798
      %v801 = vunpack.c.l.s4 1934713408
      %v802 = vunpack.c.0.s8 %v801
      %v803 = vlaneseq
      %v804 = vshrl.u32 %v803, 7
      %v805 = vsub.s32 %v802, %v804
      %v806 = vrot.slane %v792, %v805
      %v807 = vcombine.high %v783, 0.0
      %v808 = vcombine.high %v790, 0.0
      %v809 = vcombine.high %v799, 0.0
      %v810 = vcombine.high %v806, 0.0
      %812 = vrot.lane.b32.xlu0 %v739, 16
      %v813 = vpop.permute.xlu0 %812
      %816 = vrot.lane.b32.xlu0 %v722, 32
      %v817 = vpop.permute.xlu0 %816
      %820 = vrot.lane.b32.xlu0 %v740, 48
      %v821 = vpop.permute.xlu0 %820
      %824 = vrot.lane.b32.xlu0 %v731, 64
      %v825 = vpop.permute.xlu0 %824
      %828 = vrot.lane.b32.xlu0 %v741, 80
      %v829 = vpop.permute.xlu0 %828
      %832 = vrot.lane.b32.xlu0 %v738, 96
      %v833 = vpop.permute.xlu0 %832
      %836 = vrot.lane.b32.xlu0 %v742, 112
      %v837 = vpop.permute.xlu0 %836
      %840 = vrot.lane.b32.xlu0 %v807, 16
      %v841 = vpop.permute.xlu0 %840
      %844 = vrot.lane.b32.xlu0 %v790, 32
      %v845 = vpop.permute.xlu0 %844
      %848 = vrot.lane.b32.xlu0 %v808, 48
      %v849 = vpop.permute.xlu0 %848
      %852 = vrot.lane.b32.xlu0 %v799, 64
      %v853 = vpop.permute.xlu0 %852
      %856 = vrot.lane.b32.xlu0 %v809, 80
      %v857 = vpop.permute.xlu0 %856
      %860 = vrot.lane.b32.xlu0 %v806, 96
      %v861 = vpop.permute.xlu0 %860
      %864 = vrot.lane.b32.xlu0 %v810, 112
      %v865 = vpop.permute.xlu0 %864
      %v867 = vsel %vm622, %v715, %v813
      %v868 = vsel %vm624, %v867, %v817
      %v869 = vsel %vm626, %v868, %v821
      %v870 = vsel %vm628, %v869, %v825
      %v871 = vsel %vm630, %v870, %v829
      %v872 = vsel %vm632, %v871, %v833
      %v873 = vsel %vm634, %v872, %v837
      %v874 = vsel %vm622, %v783, %v841
      %v875 = vsel %vm624, %v874, %v845
      %v876 = vsel %vm626, %v875, %v849
      %v877 = vsel %vm628, %v876, %v853
      %v878 = vsel %vm630, %v877, %v857
      %v879 = vsel %vm632, %v878, %v861
      %v880 = vsel %vm634, %v879, %v865
      %vm885 = vcmask 1046528
      %v886 = vrot.slane %v418, 1
      %v887 = vrot.slane %v419, 1
      %v888 = vsel %vm885, %v886, %v887
      %v889 = vrot.slane %v420, 1
      %v890 = vsel %vm885, %v887, %v889
      %v891 = vrot.slane %v421, 1
      %v892 = vrot.slane %v422, 1
      %v893 = vsel %vm885, %v891, %v892
      %v894 = vrot.slane %v423, 1
      %v895 = vsel %vm885, %v892, %v894
      %v896 = vrot.slane %v424, 1
      %v897 = vrot.slane %v425, 1
      %v898 = vsel %vm885, %v896, %v897
      %v899 = vrot.slane %v426, 1
      %v900 = vsel %vm885, %v897, %v899
      %v901 = vrot.slane %v427, 1
      %v902 = vrot.slane %v428, 1
      %v903 = vsel %vm885, %v901, %v902
      %v904 = vrot.slane %v429, 1
      %v905 = vsel %vm885, %v902, %v904
      %v914 = vcombine.low %v888, %v898
      %v915 = vcombine.high %v888, %v898
      %v917 = vunpack.c.l.s4 1983009808
      %v918 = vunpack.c.0.s8 %v917
      %v919 = vlaneseq
      %v920 = vshrl.u32 %v919, 7
      %v921 = vsub.s32 %v918, %v920
      %v922 = vrot.slane %v914, %v921
      %v924 = vunpack.c.l.s4 1983009808
      %v925 = vunpack.c.0.s8 %v924
      %v926 = vlaneseq
      %v927 = vshrl.u32 %v926, 7
      %v928 = vsub.s32 %v925, %v927
      %v929 = vrot.slane %v915, %v928
      %v930 = vcombine.low %v893, %v903
      %v931 = vcombine.high %v893, %v903
      %v933 = vunpack.c.l.s4 1983009808
      %v934 = vunpack.c.0.s8 %v933
      %v935 = vlaneseq
      %v936 = vshrl.u32 %v935, 7
      %v937 = vsub.s32 %v934, %v936
      %v938 = vrot.slane %v930, %v937
      %v940 = vunpack.c.l.s4 1983009808
      %v941 = vunpack.c.0.s8 %v940
      %v942 = vlaneseq
      %v943 = vshrl.u32 %v942, 7
      %v944 = vsub.s32 %v941, %v943
      %v945 = vrot.slane %v931, %v944
      %v946 = vcombine.low %v922, %v938
      %v947 = vcombine.high %v922, %v938
      %v949 = vunpack.c.l.s4 1934713408
      %v950 = vunpack.c.0.s8 %v949
      %v951 = vlaneseq
      %v952 = vshrl.u32 %v951, 7
      %v953 = vsub.s32 %v950, %v952
      %v954 = vrot.slane %v946, %v953
      %v956 = vunpack.c.l.s4 1934713408
      %v957 = vunpack.c.0.s8 %v956
      %v958 = vlaneseq
      %v959 = vshrl.u32 %v958, 7
      %v960 = vsub.s32 %v957, %v959
      %v961 = vrot.slane %v947, %v960
      %v962 = vcombine.low %v929, %v945
      %v963 = vcombine.high %v929, %v945
      %v965 = vunpack.c.l.s4 1934713408
      %v966 = vunpack.c.0.s8 %v965
      %v967 = vlaneseq
      %v968 = vshrl.u32 %v967, 7
      %v969 = vsub.s32 %v966, %v968
      %v970 = vrot.slane %v962, %v969
      %v972 = vunpack.c.l.s4 1934713408
      %v973 = vunpack.c.0.s8 %v972
      %v974 = vlaneseq
      %v975 = vshrl.u32 %v974, 7
      %v976 = vsub.s32 %v973, %v975
      %v977 = vrot.slane %v963, %v976
      %v978 = vcombine.high %v954, 0.0
      %v979 = vcombine.high %v961, 0.0
      %v980 = vcombine.high %v970, 0.0
      %v981 = vcombine.high %v977, 0.0
      %v982 = vcombine.low %v890, %v900
      %v983 = vcombine.high %v890, %v900
      %v985 = vunpack.c.l.s4 1983009808
      %v986 = vunpack.c.0.s8 %v985
      %v987 = vlaneseq
      %v988 = vshrl.u32 %v987, 7
      %v989 = vsub.s32 %v986, %v988
      %v990 = vrot.slane %v982, %v989
      %v992 = vunpack.c.l.s4 1983009808
      %v993 = vunpack.c.0.s8 %v992
      %v994 = vlaneseq
      %v995 = vshrl.u32 %v994, 7
      %v996 = vsub.s32 %v993, %v995
      %v997 = vrot.slane %v983, %v996
      %v998 = vcombine.low %v895, %v905
      %v999 = vcombine.high %v895, %v905
      %v1001 = vunpack.c.l.s4 1983009808
      %v1002 = vunpack.c.0.s8 %v1001
      %v1003 = vlaneseq
      %v1004 = vshrl.u32 %v1003, 7
      %v1005 = vsub.s32 %v1002, %v1004
      %v1006 = vrot.slane %v998, %v1005
      %v1008 = vunpack.c.l.s4 1983009808
      %v1009 = vunpack.c.0.s8 %v1008
      %v1010 = vlaneseq
      %v1011 = vshrl.u32 %v1010, 7
      %v1012 = vsub.s32 %v1009, %v1011
      %v1013 = vrot.slane %v999, %v1012
      %v1014 = vcombine.low %v990, %v1006
      %v1015 = vcombine.high %v990, %v1006
      %v1017 = vunpack.c.l.s4 1934713408
      %v1018 = vunpack.c.0.s8 %v1017
      %v1019 = vlaneseq
      %v1020 = vshrl.u32 %v1019, 7
      %v1021 = vsub.s32 %v1018, %v1020
      %v1022 = vrot.slane %v1014, %v1021
      %v1024 = vunpack.c.l.s4 1934713408
      %v1025 = vunpack.c.0.s8 %v1024
      %v1026 = vlaneseq
      %v1027 = vshrl.u32 %v1026, 7
      %v1028 = vsub.s32 %v1025, %v1027
      %v1029 = vrot.slane %v1015, %v1028
      %v1030 = vcombine.low %v997, %v1013
      %v1031 = vcombine.high %v997, %v1013
      %v1033 = vunpack.c.l.s4 1934713408
      %v1034 = vunpack.c.0.s8 %v1033
      %v1035 = vlaneseq
      %v1036 = vshrl.u32 %v1035, 7
      %v1037 = vsub.s32 %v1034, %v1036
      %v1038 = vrot.slane %v1030, %v1037
      %v1040 = vunpack.c.l.s4 1934713408
      %v1041 = vunpack.c.0.s8 %v1040
      %v1042 = vlaneseq
      %v1043 = vshrl.u32 %v1042, 7
      %v1044 = vsub.s32 %v1041, %v1043
      %v1045 = vrot.slane %v1031, %v1044
      %v1046 = vcombine.high %v1022, 0.0
      %v1047 = vcombine.high %v1029, 0.0
      %v1048 = vcombine.high %v1038, 0.0
      %v1049 = vcombine.high %v1045, 0.0
      %1051 = vrot.lane.b32.xlu0 %v978, 16
      %v1052 = vpop.permute.xlu0 %1051
      %1055 = vrot.lane.b32.xlu0 %v961, 32
      %v1056 = vpop.permute.xlu0 %1055
      %1059 = vrot.lane.b32.xlu0 %v979, 48
      %v1060 = vpop.permute.xlu0 %1059
      %1063 = vrot.lane.b32.xlu0 %v970, 64
      %v1064 = vpop.permute.xlu0 %1063
      %1067 = vrot.lane.b32.xlu0 %v980, 80
      %v1068 = vpop.permute.xlu0 %1067
      %1071 = vrot.lane.b32.xlu0 %v977, 96
      %v1072 = vpop.permute.xlu0 %1071
      %1075 = vrot.lane.b32.xlu0 %v981, 112
      %v1076 = vpop.permute.xlu0 %1075
      %1079 = vrot.lane.b32.xlu0 %v1046, 16
      %v1080 = vpop.permute.xlu0 %1079
      %1083 = vrot.lane.b32.xlu0 %v1029, 32
      %v1084 = vpop.permute.xlu0 %1083
      %1087 = vrot.lane.b32.xlu0 %v1047, 48
      %v1088 = vpop.permute.xlu0 %1087
      %1091 = vrot.lane.b32.xlu0 %v1038, 64
      %v1092 = vpop.permute.xlu0 %1091
      %1095 = vrot.lane.b32.xlu0 %v1048, 80
      %v1096 = vpop.permute.xlu0 %1095
      %1099 = vrot.lane.b32.xlu0 %v1045, 96
      %v1100 = vpop.permute.xlu0 %1099
      %1103 = vrot.lane.b32.xlu0 %v1049, 112
      %v1104 = vpop.permute.xlu0 %1103
      %v1106 = vsel %vm622, %v954, %v1052
      %v1107 = vsel %vm624, %v1106, %v1056
      %v1108 = vsel %vm626, %v1107, %v1060
      %v1109 = vsel %vm628, %v1108, %v1064
      %v1110 = vsel %vm630, %v1109, %v1068
      %v1111 = vsel %vm632, %v1110, %v1072
      %v1112 = vsel %vm634, %v1111, %v1076
      %v1113 = vsel %vm622, %v1022, %v1080
      %v1114 = vsel %vm624, %v1113, %v1084
      %v1115 = vsel %vm626, %v1114, %v1088
      %v1116 = vsel %vm628, %v1115, %v1092
      %v1117 = vsel %vm630, %v1116, %v1096
      %v1118 = vsel %vm632, %v1117, %v1100
      %v1119 = vsel %vm634, %v1118, %v1104
      %1120 = vrot.lane.b32.xlu0 %v888, 127
      %v1121 = vpop.permute.xlu0 %1120
      %1122 = vrot.lane.b32.xlu0 %v890, 127
      %v1123 = vpop.permute.xlu0 %1122
      %1124 = vrot.lane.b32.xlu0 %v893, 127
      %v1125 = vpop.permute.xlu0 %1124
      %1126 = vrot.lane.b32.xlu0 %v895, 127
      %v1127 = vpop.permute.xlu0 %1126
      %1128 = vrot.lane.b32.xlu0 %v898, 127
      %v1129 = vpop.permute.xlu0 %1128
      %1130 = vrot.lane.b32.xlu0 %v900, 127
      %v1131 = vpop.permute.xlu0 %1130
      %1132 = vrot.lane.b32.xlu0 %v903, 127
      %v1133 = vpop.permute.xlu0 %1132
      %1134 = vrot.lane.b32.xlu0 %v905, 127
      %v1135 = vpop.permute.xlu0 %1134
      %v1144 = vcombine.low %v1121, %v1129
      %v1145 = vcombine.high %v1121, %v1129
      %v1147 = vunpack.c.l.s4 1983009808
      %v1148 = vunpack.c.0.s8 %v1147
      %v1149 = vlaneseq
      %v1150 = vshrl.u32 %v1149, 7
      %v1151 = vsub.s32 %v1148, %v1150
      %v1152 = vrot.slane %v1144, %v1151
      %v1154 = vunpack.c.l.s4 1983009808
      %v1155 = vunpack.c.0.s8 %v1154
      %v1156 = vlaneseq
      %v1157 = vshrl.u32 %v1156, 7
      %v1158 = vsub.s32 %v1155, %v1157
      %v1159 = vrot.slane %v1145, %v1158
      %v1160 = vcombine.low %v1125, %v1133
      %v1161 = vcombine.high %v1125, %v1133
      %v1163 = vunpack.c.l.s4 1983009808
      %v1164 = vunpack.c.0.s8 %v1163
      %v1165 = vlaneseq
      %v1166 = vshrl.u32 %v1165, 7
      %v1167 = vsub.s32 %v1164, %v1166
      %v1168 = vrot.slane %v1160, %v1167
      %v1170 = vunpack.c.l.s4 1983009808
      %v1171 = vunpack.c.0.s8 %v1170
      %v1172 = vlaneseq
      %v1173 = vshrl.u32 %v1172, 7
      %v1174 = vsub.s32 %v1171, %v1173
      %v1175 = vrot.slane %v1161, %v1174
      %v1176 = vcombine.low %v1152, %v1168
      %v1177 = vcombine.high %v1152, %v1168
      %v1179 = vunpack.c.l.s4 1934713408
      %v1180 = vunpack.c.0.s8 %v1179
      %v1181 = vlaneseq
      %v1182 = vshrl.u32 %v1181, 7
      %v1183 = vsub.s32 %v1180, %v1182
      %v1184 = vrot.slane %v1176, %v1183
      %v1186 = vunpack.c.l.s4 1934713408
      %v1187 = vunpack.c.0.s8 %v1186
      %v1188 = vlaneseq
      %v1189 = vshrl.u32 %v1188, 7
      %v1190 = vsub.s32 %v1187, %v1189
      %v1191 = vrot.slane %v1177, %v1190
      %v1192 = vcombine.low %v1159, %v1175
      %v1193 = vcombine.high %v1159, %v1175
      %v1195 = vunpack.c.l.s4 1934713408
      %v1196 = vunpack.c.0.s8 %v1195
      %v1197 = vlaneseq
      %v1198 = vshrl.u32 %v1197, 7
      %v1199 = vsub.s32 %v1196, %v1198
      %v1200 = vrot.slane %v1192, %v1199
      %v1202 = vunpack.c.l.s4 1934713408
      %v1203 = vunpack.c.0.s8 %v1202
      %v1204 = vlaneseq
      %v1205 = vshrl.u32 %v1204, 7
      %v1206 = vsub.s32 %v1203, %v1205
      %v1207 = vrot.slane %v1193, %v1206
      %v1208 = vcombine.high %v1184, 0.0
      %v1209 = vcombine.high %v1191, 0.0
      %v1210 = vcombine.high %v1200, 0.0
      %v1211 = vcombine.high %v1207, 0.0
      %v1212 = vcombine.low %v1123, %v1131
      %v1213 = vcombine.high %v1123, %v1131
      %v1215 = vunpack.c.l.s4 1983009808
      %v1216 = vunpack.c.0.s8 %v1215
      %v1217 = vlaneseq
      %v1218 = vshrl.u32 %v1217, 7
      %v1219 = vsub.s32 %v1216, %v1218
      %v1220 = vrot.slane %v1212, %v1219
      %v1222 = vunpack.c.l.s4 1983009808
      %v1223 = vunpack.c.0.s8 %v1222
      %v1224 = vlaneseq
      %v1225 = vshrl.u32 %v1224, 7
      %v1226 = vsub.s32 %v1223, %v1225
      %v1227 = vrot.slane %v1213, %v1226
      %v1228 = vcombine.low %v1127, %v1135
      %v1229 = vcombine.high %v1127, %v1135
      %v1231 = vunpack.c.l.s4 1983009808
      %v1232 = vunpack.c.0.s8 %v1231
      %v1233 = vlaneseq
      %v1234 = vshrl.u32 %v1233, 7
      %v1235 = vsub.s32 %v1232, %v1234
      %v1236 = vrot.slane %v1228, %v1235
      %v1238 = vunpack.c.l.s4 1983009808
      %v1239 = vunpack.c.0.s8 %v1238
      %v1240 = vlaneseq
      %v1241 = vshrl.u32 %v1240, 7
      %v1242 = vsub.s32 %v1239, %v1241
      %v1243 = vrot.slane %v1229, %v1242
      %v1244 = vcombine.low %v1220, %v1236
      %v1245 = vcombine.high %v1220, %v1236
      %v1247 = vunpack.c.l.s4 1934713408
      %v1248 = vunpack.c.0.s8 %v1247
      %v1249 = vlaneseq
      %v1250 = vshrl.u32 %v1249, 7
      %v1251 = vsub.s32 %v1248, %v1250
      %v1252 = vrot.slane %v1244, %v1251
      %v1254 = vunpack.c.l.s4 1934713408
      %v1255 = vunpack.c.0.s8 %v1254
      %v1256 = vlaneseq
      %v1257 = vshrl.u32 %v1256, 7
      %v1258 = vsub.s32 %v1255, %v1257
      %v1259 = vrot.slane %v1245, %v1258
      %v1260 = vcombine.low %v1227, %v1243
      %v1261 = vcombine.high %v1227, %v1243
      %v1263 = vunpack.c.l.s4 1934713408
      %v1264 = vunpack.c.0.s8 %v1263
      %v1265 = vlaneseq
      %v1266 = vshrl.u32 %v1265, 7
      %v1267 = vsub.s32 %v1264, %v1266
      %v1268 = vrot.slane %v1260, %v1267
      %v1270 = vunpack.c.l.s4 1934713408
      %v1271 = vunpack.c.0.s8 %v1270
      %v1272 = vlaneseq
      %v1273 = vshrl.u32 %v1272, 7
      %v1274 = vsub.s32 %v1271, %v1273
      %v1275 = vrot.slane %v1261, %v1274
      %v1276 = vcombine.high %v1252, 0.0
      %v1277 = vcombine.high %v1259, 0.0
      %v1278 = vcombine.high %v1268, 0.0
      %v1279 = vcombine.high %v1275, 0.0
      %1281 = vrot.lane.b32.xlu0 %v1208, 16
      %v1282 = vpop.permute.xlu0 %1281
      %1285 = vrot.lane.b32.xlu0 %v1191, 32
      %v1286 = vpop.permute.xlu0 %1285
      %1289 = vrot.lane.b32.xlu0 %v1209, 48
      %v1290 = vpop.permute.xlu0 %1289
      %1293 = vrot.lane.b32.xlu0 %v1200, 64
      %v1294 = vpop.permute.xlu0 %1293
      %1297 = vrot.lane.b32.xlu0 %v1210, 80
      %v1298 = vpop.permute.xlu0 %1297
      %1301 = vrot.lane.b32.xlu0 %v1207, 96
      %v1302 = vpop.permute.xlu0 %1301
      %1305 = vrot.lane.b32.xlu0 %v1211, 112
      %v1306 = vpop.permute.xlu0 %1305
      %1309 = vrot.lane.b32.xlu0 %v1276, 16
      %v1310 = vpop.permute.xlu0 %1309
      %1313 = vrot.lane.b32.xlu0 %v1259, 32
      %v1314 = vpop.permute.xlu0 %1313
      %1317 = vrot.lane.b32.xlu0 %v1277, 48
      %v1318 = vpop.permute.xlu0 %1317
      %1321 = vrot.lane.b32.xlu0 %v1268, 64
      %v1322 = vpop.permute.xlu0 %1321
      %1325 = vrot.lane.b32.xlu0 %v1278, 80
      %v1326 = vpop.permute.xlu0 %1325
      %1329 = vrot.lane.b32.xlu0 %v1275, 96
      %v1330 = vpop.permute.xlu0 %1329
      %1333 = vrot.lane.b32.xlu0 %v1279, 112
      %v1334 = vpop.permute.xlu0 %1333
      %v1336 = vsel %vm622, %v1184, %v1282
      %v1337 = vsel %vm624, %v1336, %v1286
      %v1338 = vsel %vm626, %v1337, %v1290
      %v1339 = vsel %vm628, %v1338, %v1294
      %v1340 = vsel %vm630, %v1339, %v1298
      %v1341 = vsel %vm632, %v1340, %v1302
      %v1342 = vsel %vm634, %v1341, %v1306
      %v1343 = vsel %vm622, %v1252, %v1310
      %v1344 = vsel %vm624, %v1343, %v1314
      %v1345 = vsel %vm626, %v1344, %v1318
      %v1346 = vsel %vm628, %v1345, %v1322
      %v1347 = vsel %vm630, %v1346, %v1326
      %v1348 = vsel %vm632, %v1347, %v1330
      %v1349 = vsel %vm634, %v1348, %v1334
      %v1352 = vrot.slane %v873, 4
      %v1353 = vrot.slane %v880, 4
      %v1358 = vrot.slane %v1342, 4
      %v1359 = vrot.slane %v1349, 4
      %vm1362 = vcmask 1043456
      %v1363 = vsel %vm1362, %v635, %v1352
      %v1364 = vsel %vm1362, %v642, %v1353
      %v1365 = vsel %vm1362, %v1112, %v1358
      %v1366 = vsel %vm1362, %v1119, %v1359
      %v1367 = vld [vmem:[%s3] sm:$0xff]
      %v1368 = vld [vmem:[%s3 + $0x8] sm:$0xff]
      %v1370 = vsel %vm622, %v1367, 0
      %v1373 = vsel %vm622, %v1368, 0
      %1375 = vmatprep.subr.mxu0 %v1364
      %1376 = vmatpush1.msra.mxu0 %v1363
      %1377 = vmatprep.subr.mxu0 %v1366
      %1378 = vmatpush1.msra.mxu0 %v1365
      %1379 = vmatprep.subr.mxu0 0.0
      %1380 = vmatpush1.msra.mxu0 0.0
      %1381 = vmatprep.subr.mxu0 0.0
      %1382 = vmatpush1.msra.mxu0 0.0
      %1383 = vmatprep.subr.mxu0 0.0
      %1384 = vmatpush1.msra.mxu0 0.0
      %1385 = vmatprep.subr.mxu0 0.0
      %1386 = vmatpush1.msra.mxu0 0.0
      %1387 = vmatprep.subr.mxu0 0.0
      %1388 = vmatpush1.msra.mxu0 0.0
      %1389 = vmatprep.subr.mxu0 0.0
      %1390 = vmatpush1.msra.mxu0 0.0
      %1391 = vmatprep.subr.mxu0 0.0
      %1392 = vmatpush1.msra.mxu0 0.0
      %1393 = vmatprep.subr.mxu0 0.0
      %1394 = vmatpush1.msra.mxu0 0.0
      %1395 = vmatprep.subr.mxu0 0.0
      %1396 = vmatpush1.msra.mxu0 0.0
      %1397 = vmatprep.subr.mxu0 0.0
      %1398 = vmatpush1.msra.mxu0 0.0
      %1399 = vmatprep.subr.mxu0 0.0
      %1400 = vmatpush1.msra.mxu0 0.0
      %1401 = vmatprep.subr.mxu0 0.0
      %1402 = vmatpush1.msra.mxu0 0.0
      %1403 = vmatprep.subr.mxu0 0.0
      %1404 = vmatpush1.msra.mxu0 0.0
      %1405 = vmatprep.subr.mxu0 0.0
      %1406 = vmatpush1.msra.mxu0 0.0
      %1407 = vmatprep.subr.mxu0 0.0
      %1408 = vmatpush1.msra.mxu0 0.0
      %1409 = vmatprep.subr.mxu0 0.0
      %1410 = vmatpush1.msra.mxu0 0.0
      %1411 = vmatprep.subr.mxu0 0.0
      %1412 = vmatpush1.msra.mxu0 0.0
      %1413 = vmatprep.subr.mxu0 0.0
      %1414 = vmatpush1.msra.mxu0 0.0
      %1415 = vmatprep.subr.mxu0 0.0
      %1416 = vmatpush1.msra.mxu0 0.0
      %1417 = vmatprep.subr.mxu0 0.0
      %1418 = vmatpush1.msra.mxu0 0.0
      %1419 = vmatprep.subr.mxu0 0.0
      %1420 = vmatpush1.msra.mxu0 0.0
      %1421 = vmatprep.subr.mxu0 0.0
      %1422 = vmatpush1.msra.mxu0 0.0
      %1423 = vmatprep.subr.mxu0 0.0
      %1424 = vmatpush1.msra.mxu0 0.0
      %1425 = vmatprep.subr.mxu0 0.0
      %1426 = vmatpush1.msra.mxu0 0.0
      %1427 = vmatprep.subr.mxu0 0.0
      %1428 = vmatpush1.msra.mxu0 0.0
      %1429 = vmatprep.subr.mxu0 0.0
      %1430 = vmatpush1.msra.mxu0 0.0
      %1431 = vmatprep.subr.mxu0 0.0
      %1432 = vmatpush1.msra.mxu0 0.0
      %1433 = vmatprep.subr.mxu0 0.0
      %1434 = vmatpush1.msra.mxu0 0.0
      %1435 = vmatprep.subr.mxu0 0.0
      %1436 = vmatpush1.msra.mxu0 0.0
      %1437 = vmatprep.subr.mxu0 0.0
      %1438 = vmatpush1.msra.mxu0 0.0
      %1439 = vmatprep.mubr.f32.mxu0 0.0
      %1440 = vmatmul.mubr.f32.gmra.mrb[0].mxu0 %v1370
      %v1441 = vpop.f32.mrb[0].mxu0
      %v1442 = vadd.f32 0.0, %v1441
      %v1443 = vpop.f32.mrb[0].mxu0
      %v1444 = vadd.f32 0.0, %v1443
      %1445 = vmatprep.mubr.f32.mxu0 0.0
      %1446 = vmatmul.mubr.f32.gmra.mrb[0].mxu0 %v1373
      %v1447 = vpop.f32.mrb[0].mxu0
      %v1448 = vadd.f32 0.0, %v1447
      %v1449 = vpop.f32.mrb[0].mxu0
      %v1450 = vadd.f32 0.0, %v1449
      %1451 = vdwg.mxu0
      %1452 = vst [vmem:[%s266] sm:$0xff] %v1442
      %1453 = vst [vmem:[%s266 + $0x8] sm:$0xff] %v1444
      %1454 = vst [vmem:[%s266 + $0x10] sm:$0xff] %v1448
      %1455 = vst [vmem:[%s266 + $0x18] sm:$0xff] %v1450
      %v1456 = vadd.f32 %v1442, %v1444
      %1457 = vadd.xlane.f32.xlu0 %v1456
      %v1458 = vpop.xlane.xlu0 %1457
      %v1459 = vadd.f32 %v1448, %v1450
      %1460 = vadd.xlane.f32.xlu0 %v1459
      %v1461 = vpop.xlane.xlu0 %1460
      %v1462 = vmul.f32 %v1458, 0.00390625
      %v1463 = vmul.f32 %v1461, 0.00390625
      %v1464 = vsub.f32 %v1442, %v1462
      %v1465 = vsub.f32 %v1444, %v1462
      %v1466 = vsub.f32 %v1448, %v1463
      %v1467 = vsub.f32 %v1450, %v1463
      %v1468 = vmul.f32 %v1464, %v1464
      %v1469 = vmul.f32 %v1465, %v1465
      %v1470 = vmul.f32 %v1466, %v1466
      %v1471 = vmul.f32 %v1467, %v1467
      %v1472 = vadd.f32 %v1468, %v1469
      %1473 = vadd.xlane.f32.xlu0 %v1472
      %v1474 = vpop.xlane.xlu0 %1473
      %v1475 = vadd.f32 %v1470, %v1471
      %1476 = vadd.xlane.f32.xlu0 %v1475
      %v1477 = vpop.xlane.xlu0 %1476
      %vm1478 = vcmask 7168
      %1479 = vst.msk [vmem:[%s271] sm:$0xff] %vm1478, %v1462
      %1480 = vst.msk [vmem:[%s271 + $0x8] sm:$0xff] %vm1478, %v1463
      %1481 = vst.msk [vmem:[%s276] sm:$0xff] %vm1478, %v1474
      %1482 = vst.msk [vmem:[%s276 + $0x8] sm:$0xff] %vm1478, %v1477
      %p1483 = scmp.lt.s32.totalorder %s18, 1
      %s1484 = scalar_select %p1483, %s18, 1
      %s1485 = smul.addr %s1484, 4
      %s1486 = smul.addr %s1485, 8
      %s1487 = scalar_lea.vmem %s4, %s1486
      %p1488 = scmp.lt.s32.totalorder %s18, 1
      %s1489 = scalar_select %p1488, %s18, 1
      %s1490 = smul.addr %s1489, 2
      %s1491 = smul.addr %s1490, 8
      %s1492 = scalar_lea.vmem %s5, %s1491
      %p1493 = scmp.lt.s32.totalorder %s18, 1
      %s1494 = scalar_select %p1493, %s18, 1
      %s1495 = smul.addr %s1494, 2
      %s1496 = smul.addr %s1495, 8
      %s1497 = scalar_lea.vmem %s6, %s1496
      // Predicated region
      $region37: #{decoder_block.5} parent=35 // pred_check
        %p1498 = pneg %p125
      $region38: #{decoder_block.5} parent=35 // pred_check_branch
        %1500 = sbr.rel (%p1498) target = $region40
      $region39: #{decoder_block.5} parent=35 // pred_region
        _
      $region40: #{decoder_block.5} parent=35 // pred_fallthru
        _
      // Predicated region
      $region41: #{decoder_block.5} parent=35 // pred_check
        %p1501 = pneg %p151
      $region42: #{decoder_block.5} parent=35 // pred_check_branch
        %1503 = sbr.rel (%p1501) target = $region44
      $region43: #{decoder_block.5} parent=35 // pred_region
        _
      $region44: #{decoder_block.5} parent=35 // pred_fallthru
        _
      // Predicated region
      $region45: #{decoder_block.5} parent=35 // pred_check
        %p1504 = pneg %p177
      $region46: #{decoder_block.5} parent=35 // pred_check_branch
        %1506 = sbr.rel (%p1504) target = $region48
      $region47: #{decoder_block.5} parent=35 // pred_region
        _
      $region48: #{decoder_block.5} parent=35 // pred_fallthru
        _
    $region36: #{decoder_block.5} parent=5 // pred_fallthru
      _
    %p1507 = scmp.le.s32.totalorder 2, %s13
    // Predicated region
    $region49: #{decoder_block.5} parent=5 // pred_check
      %p1508 = pneg %p1507
    $region50: #{decoder_block.5} parent=5 // pred_check_branch
      %1510 = sbr.rel (%p1508) target = $region52
    $region51: #{decoder_block.5} parent=5 // pred_region
      %s1511 = ssub.s32 %s13, 2
      // Predicated region
      $region53: #{decoder_block.5} parent=51 // pred_check
        %p1512 = pneg %p131
      $region54: #{decoder_block.5} parent=51 // pred_check_branch
        %1514 = sbr.rel (%p1512) target = $region56
      $region55: #{decoder_block.5} parent=51 // pred_region
        %p1515 = scmp.lt.s32.totalorder %s19, 1
        %s1516 = scalar_select %p1515, %s19, 1
        %s1517 = smul.addr %s1516, 4
        %s1518 = smul.addr %s1517, 8
        %s1519 = scalar_lea.vmem %s4, %s1518
      $region56: #{decoder_block.5} parent=51 // pred_fallthru
        _
      // Predicated region
      $region57: #{decoder_block.5} parent=51 // pred_check
        %p1520 = pneg %p157
      $region58: #{decoder_block.5} parent=51 // pred_check_branch
        %1522 = sbr.rel (%p1520) target = $region60
      $region59: #{decoder_block.5} parent=51 // pred_region
        %p1523 = scmp.lt.s32.totalorder %s19, 1
        %s1524 = scalar_select %p1523, %s19, 1
        %s1525 = smul.addr %s1524, 2
        %s1526 = smul.addr %s1525, 8
        %s1527 = scalar_lea.vmem %s5, %s1526
      $region60: #{decoder_block.5} parent=51 // pred_fallthru
        _
      // Predicated region
      $region61: #{decoder_block.5} parent=51 // pred_check
        %p1528 = pneg %p183
      $region62: #{decoder_block.5} parent=51 // pred_check_branch
        %1530 = sbr.rel (%p1528) target = $region64
      $region63: #{decoder_block.5} parent=51 // pred_region
        %p1531 = scmp.lt.s32.totalorder %s19, 1
        %s1532 = scalar_select %p1531, %s19, 1
        %s1533 = smul.addr %s1532, 2
        %s1534 = smul.addr %s1533, 8
        %s1535 = scalar_lea.vmem %s6, %s1534
      $region64: #{decoder_block.5} parent=51 // pred_fallthru
        _
    $region52: #{decoder_block.5} parent=5 // pred_fallthru
      _
  $region6: #{decoder_block.5} parent=0 // loop_footer
    %s17 = sadd.s32 1, %s13
  $region7: #{decoder_block.5} parent=0 // loop_footer_branch
    %12 = sbr.rel target = $region3
  $region8: #{decoder_block.5} parent=0 // loop_exit
    _

</llo_original>
